<compile_context>
chip_gen: v7x
topology: tpu7x:2x2x1
jax: 0.10.0
libtpu: 0.0.40
codegen_flags: <defaults>
</compile_context>

<pallas_src>
import math
import functools

import numpy as np
import jax
import jax.numpy as jnp
from jax.experimental import pallas as pl
from jax.experimental.pallas import tpu as pltpu


KERNEL_WEIGHT_NAMES = ("wq2H", "wo1T", "bo1", "gn", "bn",
                       "wo2T", "bo2", "g1", "b1",
                       "wf1T", "bf1", "wf2T", "bf2", "g2", "b2")


# ----------------------------- small helpers --------------------------------

def _round_up(x, m):
    return ((x + m - 1) // m) * m


def _layernorm_f32(x, gamma, beta, eps=1e-5):
    x = x.astype(jnp.float32)
    mean = jnp.mean(x, axis=-1, keepdims=True)
    var = jnp.mean(jnp.square(x - mean), axis=-1, keepdims=True)
    return (x - mean) * jax.lax.rsqrt(var + eps) * gamma + beta


def _softmax_last(s, use_approx_recip):
    m = jnp.max(s, axis=-1, keepdims=True)
    e = jnp.exp(s - m)
    den = jnp.sum(e, axis=-1, keepdims=True)
    if use_approx_recip:
        return e * pl.reciprocal(den, approx=True)
    return e / den


@functools.lru_cache(maxsize=1)
def _buffered_supported():
    """One-time capability check for single-buffered weights (pl.Buffered(1))."""
    if not hasattr(pl, "Buffered"):
        return False
    try:
        spec = pl.BlockSpec((8, 128), lambda i: (0, 0), pipeline_mode=pl.Buffered(1))

        def _k(x_ref, o_ref):
            o_ref[...] = x_ref[...] + 1.0

        probe = pl.pallas_call(
            _k,
            out_shape=jax.ShapeDtypeStruct((8, 128), jnp.float32),
            grid=(1,),
            in_specs=[spec],
            out_specs=pl.BlockSpec((8, 128), lambda i: (0, 0)),
        )
        jax.jit(probe).lower(jax.ShapeDtypeStruct((8, 128), jnp.float32))
        return True
    except Exception:  # capability probe only; real-kernel errors still surface normally
        return False


def _vmem_config():
    """Generation-aware (vmem_limit_bytes, q_tile cap)."""
    cap = 0
    try:
        info = pltpu.get_tpu_info()
        cap = int(getattr(info, "vmem_capacity_bytes", 0) or 0)
    except Exception:
        cap = 0
    mib = 1024 * 1024
    if cap and cap <= 80 * mib:            # v7x-class: 64 MiB physical, leave headroom
        return 52 * mib, 256
    if cap:                                # v5e / v6e: 128 MiB physical
        return min(100 * mib, int(cap * 0.8)), 512
    return 48 * mib, 256                   # unknown chip: conservative


def _pick_q_tile(s_dec, s_enc, n_heads, embed_dim, tile_cap, vmem_limit):
    s_pad8 = _round_up(max(int(s_dec), 1), 8)
    t = int(tile_cap)

    def transient_bytes(tq):
        s_kv = _round_up(s_dec, tq)
        return 4 * (2 * n_heads * tq * s_kv        # self-attn scores + probs (f32)
                    + 2 * n_heads * tq * s_enc     # cross-attn scores + probs (f32)
                    + 6 * tq * embed_dim)          # FFN hidden + residual/LN temporaries

    while t > 64 and transient_bytes(t) > vmem_limit // 3:
        t //= 2
    return max(8, min(t, s_pad8))


# --------------------------------- kernel -----------------------------------

def decoder_block_kernel(*refs, mask_mode, s_valid, compute_dtype):
    if mask_mode == "explicit":
        x_ref, mask_ref = refs[0], refs[1]
        rest = refs[2:]
    else:
        x_ref, mask_ref = refs[0], None
        rest = refs[1:]
    (q1_ref, k1_ref, v1_ref, k2_ref, v2_ref,
     wq2_ref, wo1_ref, bo1_ref, gn_ref, bn_ref,
     wo2_ref, bo2_ref, g1_ref, b1_ref,
     wf1_ref, bf1_ref, wf2_ref, bf2_ref, g2_ref, b2_ref,
     out_ref) = rest

    f32 = jnp.float32
    cdt = compute_dtype
    approx = np.dtype(cdt) == np.dtype(jnp.bfloat16)
    H, q_tile, hd = q1_ref.shape
    S_kv = k1_ref.shape[1]
    q_idx = pl.program_id(1)

    def concat_heads(ctx):                           # (H,Tq,hd) -> lane-dense (Tq, E)
        return jnp.concatenate([ctx[h] for h in range(H)], axis=-1)

    def split_heads(q2d):                            # (Tq, E) -> (H, Tq, hd)
        return jnp.stack([q2d[:, h * hd:(h + 1) * hd] for h in range(H)], axis=0)

    # ------------- masked self-attention (1/sqrt(E) pre-folded into q1) -------------
    s = jnp.einsum('hqd,hkd->hqk', q1_ref[...], k1_ref[...],
                   preferred_element_type=f32)                        # (H,Tq,S_kv) f32
    if mask_mode == "explicit":
        s = jnp.where(mask_ref[...][None, :, :] == 0.0, f32(-1e20), s)
    elif mask_mode == "causal" or s_valid < S_kv:
        col = jax.lax.broadcasted_iota(jnp.int32, (q_tile, S_kv), 1)
        if mask_mode == "causal":
            row = (jax.lax.broadcasted_iota(jnp.int32, (q_tile, S_kv), 0)
                   + q_idx * q_tile)
            keep = col <= row
            if s_valid < S_kv:
                keep = jnp.logical_and(keep, col < s_valid)
        else:                                        # no tgt mask: only hide padded keys
            keep = col < s_valid
        s = jnp.where(keep[None, :, :], s, f32(-1e20))
    p = _softmax_last(s, approx)
    ctx = jnp.einsum('hqk,hkd->hqd', p.astype(cdt), v1_ref[...],
                     preferred_element_type=f32).astype(cdt)          # (H,Tq,hd)
    # concat heads once -> single (Tq,E)@(E,E) output projection (full MXU K dim)
    attn = jnp.dot(concat_heads(ctx), wo1_ref[...],
                   preferred_element_type=f32) + bo1_ref[...]
    query = _layernorm_f32(attn + x_ref[...].astype(f32), gn_ref[...], bn_ref[...])

    # ----------------------- cross-attention (src_mask = None) ----------------------
    qh = split_heads(query.astype(cdt))                               # (H,Tq,hd)
    q2 = jnp.einsum('hqd,hdo->hqo', qh, wq2_ref[...],
                    preferred_element_type=f32).astype(cdt)
    s2 = jnp.einsum('hqd,hkd->hqk', q2, k2_ref[...], preferred_element_type=f32)
    p2 = _softmax_last(s2, approx)
    ctx2 = jnp.einsum('hqk,hkd->hqd', p2.astype(cdt), v2_ref[...],
                      preferred_element_type=f32).astype(cdt)
    attn2 = jnp.dot(concat_heads(ctx2), wo2_ref[...],
                    preferred_element_type=f32) + bo2_ref[...]
    norm1 = _layernorm_f32(attn2 + query, g1_ref[...], b1_ref[...])

    # --------------------------- feed-forward + add&norm ----------------------------
    h = jnp.dot(norm1.astype(cdt), wf1_ref[...],
                preferred_element_type=f32) + bf1_ref[...]
    h = jnp.maximum(h, 0.0)
    ff = jnp.dot(h.astype(cdt), wf2_ref[...],
                 preferred_element_type=f32) + bf2_ref[...]
    out = _layernorm_f32(ff + norm1, g2_ref[...], b2_ref[...])
    out_ref[...] = out.astype(out_ref.dtype)


# ------------------------------ host wrapper ---------------------------------

def _project_per_head(t, w, n_heads, out_dtype, scale=None):
    """Shared per-head (hd,hd) Linear (bias=False) applied by XLA: (B,S,E)->(B,H,S,hd)."""
    B, S, E = t.shape
    hd = E // n_heads
    th = t.reshape(B, S, n_heads, hd)
    p = jnp.einsum('bshd,od->bsho', th, w, preferred_element_type=jnp.float32)
    if scale is not None:
        p = p * scale
    return p.transpose(0, 2, 1, 3).astype(out_dtype)


def prepare_params(raw, n_heads, embed_dim, compute_dtype):
    """Repack PyTorch-layout weights into kernel-friendly form (call once per model)."""
    H = n_heads
    hd = embed_dim // H
    cdt = np.dtype(compute_dtype)
    scale = 1.0 / math.sqrt(embed_dim)        # module scales scores by 1/sqrt(embed_dim)
    f32 = jnp.float32
    row = lambda v: jnp.asarray(v).reshape(1, -1).astype(f32)
    return dict(
        # per-head projection weights applied by XLA before the kernel (hoisted K/V/Q)
        wq1=jnp.asarray(raw["wq1"], f32), wk1=jnp.asarray(raw["wk1"], f32),
        wv1=jnp.asarray(raw["wv1"], f32),
        wk2=jnp.asarray(raw["wk2"], f32), wv2=jnp.asarray(raw["wv2"], f32),
        # in-kernel weights (matmul operands in compute dtype, biases/LN params in f32)
        wq2H=jnp.array(jnp.broadcast_to((raw["wq2"].T * scale)[None], (H, hd, hd)), cdt),
        wo1T=jnp.asarray(raw["wo1"].T, cdt), bo1=row(raw["bo1"]),
        gn=row(raw["gn"]), bn=row(raw["bn"]),
        wo2T=jnp.asarray(raw["wo2"].T, cdt), bo2=row(raw["bo2"]),
        g1=row(raw["g1"]), b1=row(raw["b1"]),
        wf1T=jnp.asarray(raw["wf1"].T, cdt), bf1=row(raw["bf1"]),
        wf2T=jnp.asarray(raw["wf2"].T, cdt), bf2=row(raw["bf2"]),
        g2=row(raw["g2"]), b2=row(raw["b2"]),
    )


@functools.partial(jax.jit,
                   static_argnames=("n_heads", "compute_dtype", "assume_causal_tgt_mask"))
def decoder_block(enc_key, enc_value, x, tgt_mask, params, *, n_heads,
                  compute_dtype=jnp.float32, assume_causal_tgt_mask=False):
    """DecoderBlock.forward(key, value, x, tgt_mask, src_mask=None), eval-mode dropout."""
    B, S_dec, E = x.shape
    S_enc = enc_key.shape[1]
    H = n_heads
    hd = E // H
    assert H * hd == E
    cdt = np.dtype(compute_dtype)
    f32 = jnp.float32
    scale = 1.0 / math.sqrt(E)

    vmem_limit, tile_cap = _vmem_config()
    q_tile = _pick_q_tile(S_dec, S_enc, H, E, tile_cap, vmem_limit)
    S_pad = _round_up(S_dec, q_tile)
    n_q = S_pad // q_tile
    pad = S_pad - S_dec

    # ----- self-attn target-mask handling -----
    if assume_causal_tgt_mask:
        mask_mode, mask_args = "causal", ()      # standard lower-triangular mask via iota
    elif tgt_mask is None:
        mask_mode, mask_args = "none", ()
    else:
        mask_mode = "explicit"
        m = tgt_mask
        if m.ndim == 4:                          # (B, 1/H, S, S) -> (B, S, S)
            m = m[:, 0]
        elif m.ndim == 2:                        # (S, S) -> (B, S, S)
            m = jnp.broadcast_to(m[None], (B, S_dec, S_dec))
        m = m.astype(f32)
        if pad:
            m = jnp.pad(m, ((0, 0), (0, pad), (0, pad)))   # padded keys stay masked
        mask_args = (m,)

    xp = jnp.pad(x, ((0, 0), (0, pad), (0, 0))) if pad else x

    # ----- K/V (and self-attn Q) per-head projections hoisted out of the kernel -----
    q1 = _project_per_head(xp, params["wq1"], H, cdt, scale=scale)   # (B,H,S_pad,hd)
    k1 = _project_per_head(xp, params["wk1"], H, cdt)
    v1 = _project_per_head(xp, params["wv1"], H, cdt)
    k2 = _project_per_head(enc_key, params["wk2"], H, cdt)           # (B,H,S_enc,hd)
    v2 = _project_per_head(enc_value, params["wv2"], H, cdt)

    weights = [params[name] for name in KERNEL_WEIGHT_NAMES]

    def const_spec(shape):
        idx = lambda b, q, _n=len(shape): (0,) * _n
        if _buffered_supported():
            # constant index_map -> one resident copy of each weight is enough
            return pl.BlockSpec(shape, idx, pipeline_mode=pl.Buffered(1))
        return pl.BlockSpec(shape, idx)

    in_specs = [pl.BlockSpec((None, q_tile, E), lambda b, q: (b, q, 0))]   # x residual rows
    if mask_mode == "explicit":
        in_specs.append(pl.BlockSpec((None, q_tile, S_pad), lambda b, q: (b, q, 0)))
    in_specs += [
        pl.BlockSpec((None, H, q_tile, hd), lambda b, q: (b, 0, q, 0)),    # self Q rows
        pl.BlockSpec((None, H, S_pad, hd), lambda b, q: (b, 0, 0, 0)),     # self K (full)
        pl.BlockSpec((None, H, S_pad, hd), lambda b, q: (b, 0, 0, 0)),     # self V (full)
        pl.BlockSpec((None, H, S_enc, hd), lambda b, q: (b, 0, 0, 0)),     # cross K
        pl.BlockSpec((None, H, S_enc, hd), lambda b, q: (b, 0, 0, 0)),     # cross V
    ]
    in_specs += [const_spec(w.shape) for w in weights]

    kern = functools.partial(decoder_block_kernel, mask_mode=mask_mode,
                             s_valid=S_dec, compute_dtype=cdt)

    out = pl.pallas_call(
        kern,
        out_shape=jax.ShapeDtypeStruct((B, S_pad, E), x.dtype),
        grid_spec=pltpu.PrefetchScalarGridSpec(
            num_scalar_prefetch=0,
            grid=(B, n_q),
            in_specs=in_specs,
            out_specs=pl.BlockSpec((None, q_tile, E), lambda b, q: (b, q, 0)),
        ),
        compiler_params=pltpu.CompilerParams(
            dimension_semantics=("parallel", "parallel"),
            vmem_limit_bytes=int(vmem_limit)),
    )(xp, *mask_args, q1, k1, v1, k2, v2, *weights)

    return out[:, :S_dec] if pad else out


# ------------------------- parameter initialization --------------------------

def init_params(key, embed_dim, n_heads, expansion_factor=4):
    hd = embed_dim // n_heads
    ks = jax.random.split(key, 20)
    lin = lambda k, o, i: 0.05 * jax.random.normal(k, (o, i), jnp.float32)
    vec = lambda k, n: 0.05 * jax.random.normal(k, (n,), jnp.float32)
    one = lambda k, n: 1.0 + 0.05 * jax.random.normal(k, (n,), jnp.float32)
    return dict(
        wq1=lin(ks[0], hd, hd), wk1=lin(ks[1], hd, hd), wv1=lin(ks[2], hd, hd),
        wo1=lin(ks[3], embed_dim, embed_dim), bo1=vec(ks[4], embed_dim),
        gn=one(ks[5], embed_dim), bn=vec(ks[6], embed_dim),
        wq2=lin(ks[7], hd, hd), wk2=lin(ks[8], hd, hd), wv2=lin(ks[9], hd, hd),
        wo2=lin(ks[10], embed_dim, embed_dim), bo2=vec(ks[11], embed_dim),
        g1=one(ks[12], embed_dim), b1=vec(ks[13], embed_dim),
        wf1=lin(ks[14], embed_dim * expansion_factor, embed_dim),
        bf1=vec(ks[15], embed_dim * expansion_factor),
        wf2=lin(ks[16], embed_dim, embed_dim * expansion_factor),
        bf2=vec(ks[17], embed_dim),
        g2=one(ks[18], embed_dim), b2=vec(ks[19], embed_dim),
    )


# --------------------------- pure-JAX reference ------------------------------

def _ref_ln(x, g, b, eps=1e-5):
    m = jnp.mean(x, axis=-1, keepdims=True)
    v = jnp.mean((x - m) ** 2, axis=-1, keepdims=True)
    return (x - m) / jnp.sqrt(v + eps) * g + b


def _ref_mha(key, query, value, Wq, Wk, Wv, Wo, bo, mask, n_heads, embed_dim):
    B, Sk, _ = key.shape
    Sq = query.shape[1]
    hd = embed_dim // n_heads
    k = jnp.einsum('bshd,od->bsho', key.reshape(B, Sk, n_heads, hd), Wk)
    q = jnp.einsum('bshd,od->bsho', query.reshape(B, Sq, n_heads, hd), Wq)
    v = jnp.einsum('bshd,od->bsho', value.reshape(B, Sk, n_heads, hd), Wv)
    k, q, v = (jnp.transpose(t, (0, 2, 1, 3)) for t in (k, q, v))
    s = jnp.einsum('bhqd,bhkd->bhqk', q, k)
    if mask is not None:
        s = jnp.where(mask == 0, -1e20, s)
    s = s / math.sqrt(embed_dim)
    p = jax.nn.softmax(s, axis=-1)
    a = jnp.einsum('bhqk,bhkd->bhqd', p, v)
    concat = jnp.transpose(a, (0, 2, 1, 3)).reshape(B, Sq, embed_dim)
    return concat @ Wo.T + bo


def reference_decoder_block(enc_key, enc_value, x, tgt_mask, p, *, n_heads):
    E = x.shape[-1]
    attn = _ref_mha(x, x, x, p["wq1"], p["wk1"], p["wv1"], p["wo1"], p["bo1"],
                    tgt_mask, n_heads, E)
    query = _ref_ln(attn + x, p["gn"], p["bn"])
    attn2 = _ref_mha(enc_key, query, enc_value, p["wq2"], p["wk2"], p["wv2"],
                     p["wo2"], p["bo2"], None, n_heads, E)
    n1 = _ref_ln(attn2 + query, p["g1"], p["b1"])
    ff = jnp.maximum(n1 @ p["wf1"].T + p["bf1"], 0.0) @ p["wf2"].T + p["bf2"]
    return _ref_ln(ff + n1, p["g2"], p["b2"])


# ----------------------------------- main ------------------------------------

if __name__ == "__main__":
    B, S_dec, S_enc, E, H = 2, 8, 16, 32, 4
    root = jax.random.PRNGKey(0)
    kx, kk, kv, kp = jax.random.split(root, 4)
    x = jax.random.normal(kx, (B, S_dec, E), jnp.float32)           # decoder input
    enc_key = jax.random.normal(kk, (B, S_enc, E), jnp.float32)     # encoder key
    enc_value = jax.random.normal(kv, (B, S_enc, E), jnp.float32)   # encoder value
    causal = jnp.tril(jnp.ones((S_dec, S_dec), jnp.float32))
    tgt_mask = jnp.tile(causal[None, None], (B, 1, 1, 1))           # (B,1,S_dec,S_dec)

    _buffered_supported()                                           # warm capability probe

    raw = init_params(kp, E, H)
    ref = reference_decoder_block(enc_key, enc_value, x, tgt_mask, raw, n_heads=H)

    # exact f32 path, caller-provided tgt_mask honored inside the kernel
    p32 = prepare_params(raw, H, E, jnp.float32)
    out_f32 = decoder_block(enc_key, enc_value, x, tgt_mask, p32,
                            n_heads=H, compute_dtype=jnp.float32)
    out_f32 = jax.block_until_ready(out_f32)
    if not bool(jnp.allclose(out_f32, ref, atol=2e-4, rtol=2e-4)):
        raise AssertionError("f32 Pallas kernel does not match JAX reference")

    # bf16 MXU path with the in-kernel causal mask (no mask DMA)
    pbf = prepare_params(raw, H, E, jnp.bfloat16)
    out_bf16 = decoder_block(enc_key, enc_value, x, tgt_mask, pbf,
                             n_heads=H, compute_dtype=jnp.bfloat16,
                             assume_causal_tgt_mask=True)
    out_bf16 = jax.block_until_ready(out_bf16)
    rel = jnp.linalg.norm(out_bf16.astype(jnp.float32) - ref) / jnp.linalg.norm(ref)
    if not bool(rel < 5e-2):
        raise AssertionError(f"bf16 Pallas kernel deviates from reference (rel={rel})")

    print("KERNEL_OK")
</pallas_src>

<mosaic_0001>
module attributes {stable_mosaic.version = 11 : i64} {
  func.func @decoder_block_kernel(%arg0: i32, %arg1: i32, %arg2: memref<1x8x32xf32, #tpu.memory_space<vmem>>, %arg3: memref<1x8x8xf32, #tpu.memory_space<vmem>>, %arg4: memref<1x4x8x8xf32, #tpu.memory_space<vmem>>, %arg5: memref<1x4x8x8xf32, #tpu.memory_space<vmem>>, %arg6: memref<1x4x8x8xf32, #tpu.memory_space<vmem>>, %arg7: memref<1x4x16x8xf32, #tpu.memory_space<vmem>>, %arg8: memref<1x4x16x8xf32, #tpu.memory_space<vmem>>, %arg9: memref<4x8x8xf32, #tpu.memory_space<vmem>>, %arg10: memref<32x32xf32, #tpu.memory_space<vmem>>, %arg11: memref<1x32xf32, #tpu.memory_space<vmem>>, %arg12: memref<1x32xf32, #tpu.memory_space<vmem>>, %arg13: memref<1x32xf32, #tpu.memory_space<vmem>>, %arg14: memref<32x32xf32, #tpu.memory_space<vmem>>, %arg15: memref<1x32xf32, #tpu.memory_space<vmem>>, %arg16: memref<1x32xf32, #tpu.memory_space<vmem>>, %arg17: memref<1x32xf32, #tpu.memory_space<vmem>>, %arg18: memref<32x128xf32, #tpu.memory_space<vmem>>, %arg19: memref<1x128xf32, #tpu.memory_space<vmem>>, %arg20: memref<128x32xf32, #tpu.memory_space<vmem>>, %arg21: memref<1x32xf32, #tpu.memory_space<vmem>>, %arg22: memref<1x32xf32, #tpu.memory_space<vmem>>, %arg23: memref<1x32xf32, #tpu.memory_space<vmem>>, %arg24: memref<1x8x32xf32, #tpu.memory_space<vmem>>) attributes {dimension_semantics = [#tpu.dimension_semantics<parallel>, #tpu.dimension_semantics<parallel>], iteration_bounds = array<i64: 2, 1>, scalar_prefetch = 0 : i64, scratch_operands = 0 : i64, tpu.core_type = #tpu.core_type<tc>, window_params = [{transform_indices = @transform_0, window_bounds = array<i64: 1, 8, 32>}, {transform_indices = @transform_1, window_bounds = array<i64: 1, 8, 8>}, {transform_indices = @transform_2, window_bounds = array<i64: 1, 4, 8, 8>}, {transform_indices = @transform_3, window_bounds = array<i64: 1, 4, 8, 8>}, {transform_indices = @transform_4, window_bounds = array<i64: 1, 4, 8, 8>}, {transform_indices = @transform_5, window_bounds = array<i64: 1, 4, 16, 8>}, {transform_indices = @transform_6, window_bounds = array<i64: 1, 4, 16, 8>}, {pipeline_mode = #tpu.pipeline_mode<synchronous>, transform_indices = @transform_7, window_bounds = array<i64: 4, 8, 8>}, {pipeline_mode = #tpu.pipeline_mode<synchronous>, transform_indices = @transform_8, window_bounds = array<i64: 32, 32>}, {pipeline_mode = #tpu.pipeline_mode<synchronous>, transform_indices = @transform_9, window_bounds = array<i64: 1, 32>}, {pipeline_mode = #tpu.pipeline_mode<synchronous>, transform_indices = @transform_10, window_bounds = array<i64: 1, 32>}, {pipeline_mode = #tpu.pipeline_mode<synchronous>, transform_indices = @transform_11, window_bounds = array<i64: 1, 32>}, {pipeline_mode = #tpu.pipeline_mode<synchronous>, transform_indices = @transform_12, window_bounds = array<i64: 32, 32>}, {pipeline_mode = #tpu.pipeline_mode<synchronous>, transform_indices = @transform_13, window_bounds = array<i64: 1, 32>}, {pipeline_mode = #tpu.pipeline_mode<synchronous>, transform_indices = @transform_14, window_bounds = array<i64: 1, 32>}, {pipeline_mode = #tpu.pipeline_mode<synchronous>, transform_indices = @transform_15, window_bounds = array<i64: 1, 32>}, {pipeline_mode = #tpu.pipeline_mode<synchronous>, transform_indices = @transform_16, window_bounds = array<i64: 32, 128>}, {pipeline_mode = #tpu.pipeline_mode<synchronous>, transform_indices = @transform_17, window_bounds = array<i64: 1, 128>}, {pipeline_mode = #tpu.pipeline_mode<synchronous>, transform_indices = @transform_18, window_bounds = array<i64: 128, 32>}, {pipeline_mode = #tpu.pipeline_mode<synchronous>, transform_indices = @transform_19, window_bounds = array<i64: 1, 32>}, {pipeline_mode = #tpu.pipeline_mode<synchronous>, transform_indices = @transform_20, window_bounds = array<i64: 1, 32>}, {pipeline_mode = #tpu.pipeline_mode<synchronous>, transform_indices = @transform_21, window_bounds = array<i64: 1, 32>}, {transform_indices = @transform_22, window_bounds = array<i64: 1, 8, 32>}]} {
    %c0 = arith.constant 0 : index
    %c0_0 = arith.constant 0 : index
    %c0_1 = arith.constant 0 : index
    %c0_2 = arith.constant 0 : index
    %0 = vector.load %arg4[%c0, %c0_0, %c0_1, %c0_2] : memref<1x4x8x8xf32, #tpu.memory_space<vmem>>, vector<1x4x8x8xf32>
    %1 = vector.shape_cast %0 : vector<1x4x8x8xf32> to vector<4x8x8xf32>
    %c0_3 = arith.constant 0 : index
    %c0_4 = arith.constant 0 : index
    %c0_5 = arith.constant 0 : index
    %c0_6 = arith.constant 0 : index
    %2 = vector.load %arg5[%c0_3, %c0_4, %c0_5, %c0_6] : memref<1x4x8x8xf32, #tpu.memory_space<vmem>>, vector<1x4x8x8xf32>
    %3 = vector.shape_cast %2 : vector<1x4x8x8xf32> to vector<4x8x8xf32>
    "tpu.trace_start"() <{level = 10 : i32, message = "hqd,hkd->hqk"}> : () -> ()
    %cst = arith.constant dense<0.000000e+00> : vector<4x8x8xf32>
    %4 = tpu.matmul %1, %3, %cst {dimension_numbers = #tpu.dot_dimension_numbers<[2], [2], [1], [1], [0, 0, 0, 1, 1, 1], [0], [0]>} : vector<4x8x8xf32>, vector<4x8x8xf32>, vector<4x8x8xf32> -> vector<4x8x8xf32>
    "tpu.trace_stop"() : () -> ()
    %c0_7 = arith.constant 0 : index
    %c0_8 = arith.constant 0 : index
    %c0_9 = arith.constant 0 : index
    %5 = vector.load %arg3[%c0_7, %c0_8, %c0_9] : memref<1x8x8xf32, #tpu.memory_space<vmem>>, vector<1x8x8xf32>
    %6 = vector.shape_cast %5 : vector<1x8x8xf32> to vector<8x8xf32>
    %7 = vector.shape_cast %6 : vector<8x8xf32> to vector<1x8x8xf32>
    %cst_10 = arith.constant 0.000000e+00 : f32
    %8 = vector.broadcast %cst_10 : f32 to vector<1x8x8xf32>
    %9 = arith.cmpf oeq, %7, %8 : vector<1x8x8xf32>
    %cst_11 = arith.constant -1.000000e+20 : f32
    %10 = vector.shape_cast %9 : vector<1x8x8xi1> to vector<1x8x8xi1>
    %11 = vector.broadcast %10 : vector<1x8x8xi1> to vector<4x8x8xi1>
    %12 = vector.broadcast %cst_11 : f32 to vector<4x8x8xf32>
    %13 = arith.select %11, %12, %4 : vector<4x8x8xi1>, vector<4x8x8xf32>
    %cst_12 = arith.constant dense<0xFF800000> : vector<4x8xf32>
    %14 = vector.multi_reduction <maximumf>, %13, %cst_12 [2] : vector<4x8x8xf32> to vector<4x8xf32>
    %15 = vector.shape_cast %14 : vector<4x8xf32> to vector<4x8x1xf32>
    %16 = vector.broadcast %15 : vector<4x8x1xf32> to vector<4x8x8xf32>
    %17 = arith.subf %13, %16 : vector<4x8x8xf32>
    %18 = math.exp %17 : vector<4x8x8xf32>
    %cst_13 = arith.constant dense<0.000000e+00> : vector<4x8xf32>
    %19 = vector.multi_reduction <add>, %18, %cst_13 [2] : vector<4x8x8xf32> to vector<4x8xf32>
    %20 = vector.shape_cast %19 : vector<4x8xf32> to vector<4x8x1xf32>
    %21 = vector.broadcast %20 : vector<4x8x1xf32> to vector<4x8x8xf32>
    %22 = arith.divf %18, %21 : vector<4x8x8xf32>
    %c0_14 = arith.constant 0 : index
    %c0_15 = arith.constant 0 : index
    %c0_16 = arith.constant 0 : index
    %c0_17 = arith.constant 0 : index
    %23 = vector.load %arg6[%c0_14, %c0_15, %c0_16, %c0_17] : memref<1x4x8x8xf32, #tpu.memory_space<vmem>>, vector<1x4x8x8xf32>
    %24 = vector.shape_cast %23 : vector<1x4x8x8xf32> to vector<4x8x8xf32>
    "tpu.trace_start"() <{level = 10 : i32, message = "hqk,hkd->hqd"}> : () -> ()
    %cst_18 = arith.constant dense<0.000000e+00> : vector<4x8x8xf32>
    %25 = tpu.matmul %22, %24, %cst_18 {dimension_numbers = #tpu.dot_dimension_numbers<[2], [1], [1], [2], [0, 0, 0, 1, 1, 2], [0], [0]>} : vector<4x8x8xf32>, vector<4x8x8xf32>, vector<4x8x8xf32> -> vector<4x8x8xf32>
    "tpu.trace_stop"() : () -> ()
    %26 = vector.extract_strided_slice %25 {offsets = [0, 0, 0], sizes = [1, 8, 8], strides = [1, 1, 1]} : vector<4x8x8xf32> to vector<1x8x8xf32>
    %27 = vector.shape_cast %26 : vector<1x8x8xf32> to vector<8x8xf32>
    %28 = vector.extract_strided_slice %25 {offsets = [1, 0, 0], sizes = [1, 8, 8], strides = [1, 1, 1]} : vector<4x8x8xf32> to vector<1x8x8xf32>
    %29 = vector.shape_cast %28 : vector<1x8x8xf32> to vector<8x8xf32>
    %30 = vector.extract_strided_slice %25 {offsets = [2, 0, 0], sizes = [1, 8, 8], strides = [1, 1, 1]} : vector<4x8x8xf32> to vector<1x8x8xf32>
    %31 = vector.shape_cast %30 : vector<1x8x8xf32> to vector<8x8xf32>
    %32 = vector.extract_strided_slice %25 {offsets = [3, 0, 0], sizes = [1, 8, 8], strides = [1, 1, 1]} : vector<4x8x8xf32> to vector<1x8x8xf32>
    %33 = vector.shape_cast %32 : vector<1x8x8xf32> to vector<8x8xf32>
    %34 = tpu.concatenate %27, %29, %31, %33 in 1 : vector<8x8xf32>, vector<8x8xf32>, vector<8x8xf32>, vector<8x8xf32> -> vector<8x32xf32>
    %c0_19 = arith.constant 0 : index
    %c0_20 = arith.constant 0 : index
    %35 = vector.load %arg10[%c0_19, %c0_20] : memref<32x32xf32, #tpu.memory_space<vmem>>, vector<32x32xf32>
    %cst_21 = arith.constant dense<0.000000e+00> : vector<8x32xf32>
    %36 = tpu.matmul %34, %35, %cst_21 {dimension_numbers = #tpu.dot_dimension_numbers<[1], [0], [0], [1], [0, 0, 1, 1], [], []>} : vector<8x32xf32>, vector<32x32xf32>, vector<8x32xf32> -> vector<8x32xf32>
    %c0_22 = arith.constant 0 : index
    %c0_23 = arith.constant 0 : index
    %37 = vector.load %arg11[%c0_22, %c0_23] : memref<1x32xf32, #tpu.memory_space<vmem>>, vector<1x32xf32>
    %38 = vector.broadcast %37 : vector<1x32xf32> to vector<8x32xf32>
    %39 = arith.addf %36, %38 : vector<8x32xf32>
    %c0_24 = arith.constant 0 : index
    %c0_25 = arith.constant 0 : index
    %c0_26 = arith.constant 0 : index
    %40 = vector.load %arg2[%c0_24, %c0_25, %c0_26] : memref<1x8x32xf32, #tpu.memory_space<vmem>>, vector<1x8x32xf32>
    %41 = vector.shape_cast %40 : vector<1x8x32xf32> to vector<8x32xf32>
    %42 = arith.addf %39, %41 : vector<8x32xf32>
    %c0_27 = arith.constant 0 : index
    %c0_28 = arith.constant 0 : index
    %43 = vector.load %arg12[%c0_27, %c0_28] : memref<1x32xf32, #tpu.memory_space<vmem>>, vector<1x32xf32>
    %c0_29 = arith.constant 0 : index
    %c0_30 = arith.constant 0 : index
    %44 = vector.load %arg13[%c0_29, %c0_30] : memref<1x32xf32, #tpu.memory_space<vmem>>, vector<1x32xf32>
    %cst_31 = arith.constant dense<0.000000e+00> : vector<8xf32>
    %45 = vector.multi_reduction <add>, %42, %cst_31 [1] : vector<8x32xf32> to vector<8xf32>
    %46 = vector.shape_cast %45 : vector<8xf32> to vector<8x1xf32>
    %cst_32 = arith.constant 3.200000e+01 : f32
    %47 = vector.broadcast %cst_32 : f32 to vector<8x1xf32>
    %48 = arith.divf %46, %47 : vector<8x1xf32>
    %49 = vector.broadcast %48 : vector<8x1xf32> to vector<8x32xf32>
    %50 = arith.subf %42, %49 : vector<8x32xf32>
    %51 = arith.mulf %50, %50 : vector<8x32xf32>
    %cst_33 = arith.constant dense<0.000000e+00> : vector<8xf32>
    %52 = vector.multi_reduction <add>, %51, %cst_33 [1] : vector<8x32xf32> to vector<8xf32>
    %53 = vector.shape_cast %52 : vector<8xf32> to vector<8x1xf32>
    %cst_34 = arith.constant 3.200000e+01 : f32
    %54 = vector.broadcast %cst_34 : f32 to vector<8x1xf32>
    %55 = arith.divf %53, %54 : vector<8x1xf32>
    %56 = vector.broadcast %48 : vector<8x1xf32> to vector<8x32xf32>
    %57 = arith.subf %42, %56 : vector<8x32xf32>
    %cst_35 = arith.constant 9.99999974E-6 : f32
    %58 = vector.broadcast %cst_35 : f32 to vector<8x1xf32>
    %59 = arith.addf %55, %58 : vector<8x1xf32>
    %60 = math.rsqrt %59 : vector<8x1xf32>
    %61 = vector.broadcast %60 : vector<8x1xf32> to vector<8x32xf32>
    %62 = arith.mulf %57, %61 : vector<8x32xf32>
    %63 = vector.broadcast %43 : vector<1x32xf32> to vector<8x32xf32>
    %64 = arith.mulf %62, %63 : vector<8x32xf32>
    %65 = vector.broadcast %44 : vector<1x32xf32> to vector<8x32xf32>
    %66 = arith.addf %64, %65 : vector<8x32xf32>
    %67 = vector.extract_strided_slice %66 {offsets = [0, 0], sizes = [8, 8], strides = [1, 1]} : vector<8x32xf32> to vector<8x8xf32>
    %68 = vector.extract_strided_slice %66 {offsets = [0, 8], sizes = [8, 8], strides = [1, 1]} : vector<8x32xf32> to vector<8x8xf32>
    %69 = vector.extract_strided_slice %66 {offsets = [0, 16], sizes = [8, 8], strides = [1, 1]} : vector<8x32xf32> to vector<8x8xf32>
    %70 = vector.extract_strided_slice %66 {offsets = [0, 24], sizes = [8, 8], strides = [1, 1]} : vector<8x32xf32> to vector<8x8xf32>
    %71 = vector.shape_cast %67 : vector<8x8xf32> to vector<1x8x8xf32>
    %72 = vector.shape_cast %68 : vector<8x8xf32> to vector<1x8x8xf32>
    %73 = vector.shape_cast %69 : vector<8x8xf32> to vector<1x8x8xf32>
    %74 = vector.shape_cast %70 : vector<8x8xf32> to vector<1x8x8xf32>
    %75 = tpu.concatenate %71, %72, %73, %74 in 0 : vector<1x8x8xf32>, vector<1x8x8xf32>, vector<1x8x8xf32>, vector<1x8x8xf32> -> vector<4x8x8xf32>
    %c0_36 = arith.constant 0 : index
    %c0_37 = arith.constant 0 : index
    %c0_38 = arith.constant 0 : index
    %76 = vector.load %arg9[%c0_36, %c0_37, %c0_38] : memref<4x8x8xf32, #tpu.memory_space<vmem>>, vector<4x8x8xf32>
    "tpu.trace_start"() <{level = 10 : i32, message = "hqd,hdo->hqo"}> : () -> ()
    %cst_39 = arith.constant dense<0.000000e+00> : vector<4x8x8xf32>
    %77 = tpu.matmul %75, %76, %cst_39 {dimension_numbers = #tpu.dot_dimension_numbers<[2], [1], [1], [2], [0, 0, 0, 1, 1, 2], [0], [0]>} : vector<4x8x8xf32>, vector<4x8x8xf32>, vector<4x8x8xf32> -> vector<4x8x8xf32>
    "tpu.trace_stop"() : () -> ()
    %c0_40 = arith.constant 0 : index
    %c0_41 = arith.constant 0 : index
    %c0_42 = arith.constant 0 : index
    %c0_43 = arith.constant 0 : index
    %78 = vector.load %arg7[%c0_40, %c0_41, %c0_42, %c0_43] : memref<1x4x16x8xf32, #tpu.memory_space<vmem>>, vector<1x4x16x8xf32>
    %79 = vector.shape_cast %78 : vector<1x4x16x8xf32> to vector<4x16x8xf32>
    "tpu.trace_start"() <{level = 10 : i32, message = "hqd,hkd->hqk"}> : () -> ()
    %cst_44 = arith.constant dense<0.000000e+00> : vector<4x8x16xf32>
    %80 = tpu.matmul %77, %79, %cst_44 {dimension_numbers = #tpu.dot_dimension_numbers<[2], [2], [1], [1], [0, 0, 0, 1, 1, 1], [0], [0]>} : vector<4x8x8xf32>, vector<4x16x8xf32>, vector<4x8x16xf32> -> vector<4x8x16xf32>
    "tpu.trace_stop"() : () -> ()
    %cst_45 = arith.constant dense<0xFF800000> : vector<4x8xf32>
    %81 = vector.multi_reduction <maximumf>, %80, %cst_45 [2] : vector<4x8x16xf32> to vector<4x8xf32>
    %82 = vector.shape_cast %81 : vector<4x8xf32> to vector<4x8x1xf32>
    %83 = vector.broadcast %82 : vector<4x8x1xf32> to vector<4x8x16xf32>
    %84 = arith.subf %80, %83 : vector<4x8x16xf32>
    %85 = math.exp %84 : vector<4x8x16xf32>
    %cst_46 = arith.constant dense<0.000000e+00> : vector<4x8xf32>
    %86 = vector.multi_reduction <add>, %85, %cst_46 [2] : vector<4x8x16xf32> to vector<4x8xf32>
    %87 = vector.shape_cast %86 : vector<4x8xf32> to vector<4x8x1xf32>
    %88 = vector.broadcast %87 : vector<4x8x1xf32> to vector<4x8x16xf32>
    %89 = arith.divf %85, %88 : vector<4x8x16xf32>
    %c0_47 = arith.constant 0 : index
    %c0_48 = arith.constant 0 : index
    %c0_49 = arith.constant 0 : index
    %c0_50 = arith.constant 0 : index
    %90 = vector.load %arg8[%c0_47, %c0_48, %c0_49, %c0_50] : memref<1x4x16x8xf32, #tpu.memory_space<vmem>>, vector<1x4x16x8xf32>
    %91 = vector.shape_cast %90 : vector<1x4x16x8xf32> to vector<4x16x8xf32>
    "tpu.trace_start"() <{level = 10 : i32, message = "hqk,hkd->hqd"}> : () -> ()
    %cst_51 = arith.constant dense<0.000000e+00> : vector<4x8x8xf32>
    %92 = tpu.matmul %89, %91, %cst_51 {dimension_numbers = #tpu.dot_dimension_numbers<[2], [1], [1], [2], [0, 0, 0, 1, 1, 2], [0], [0]>} : vector<4x8x16xf32>, vector<4x16x8xf32>, vector<4x8x8xf32> -> vector<4x8x8xf32>
    "tpu.trace_stop"() : () -> ()
    %93 = vector.extract_strided_slice %92 {offsets = [0, 0, 0], sizes = [1, 8, 8], strides = [1, 1, 1]} : vector<4x8x8xf32> to vector<1x8x8xf32>
    %94 = vector.shape_cast %93 : vector<1x8x8xf32> to vector<8x8xf32>
    %95 = vector.extract_strided_slice %92 {offsets = [1, 0, 0], sizes = [1, 8, 8], strides = [1, 1, 1]} : vector<4x8x8xf32> to vector<1x8x8xf32>
    %96 = vector.shape_cast %95 : vector<1x8x8xf32> to vector<8x8xf32>
    %97 = vector.extract_strided_slice %92 {offsets = [2, 0, 0], sizes = [1, 8, 8], strides = [1, 1, 1]} : vector<4x8x8xf32> to vector<1x8x8xf32>
    %98 = vector.shape_cast %97 : vector<1x8x8xf32> to vector<8x8xf32>
    %99 = vector.extract_strided_slice %92 {offsets = [3, 0, 0], sizes = [1, 8, 8], strides = [1, 1, 1]} : vector<4x8x8xf32> to vector<1x8x8xf32>
    %100 = vector.shape_cast %99 : vector<1x8x8xf32> to vector<8x8xf32>
    %101 = tpu.concatenate %94, %96, %98, %100 in 1 : vector<8x8xf32>, vector<8x8xf32>, vector<8x8xf32>, vector<8x8xf32> -> vector<8x32xf32>
    %c0_52 = arith.constant 0 : index
    %c0_53 = arith.constant 0 : index
    %102 = vector.load %arg14[%c0_52, %c0_53] : memref<32x32xf32, #tpu.memory_space<vmem>>, vector<32x32xf32>
    %cst_54 = arith.constant dense<0.000000e+00> : vector<8x32xf32>
    %103 = tpu.matmul %101, %102, %cst_54 {dimension_numbers = #tpu.dot_dimension_numbers<[1], [0], [0], [1], [0, 0, 1, 1], [], []>} : vector<8x32xf32>, vector<32x32xf32>, vector<8x32xf32> -> vector<8x32xf32>
    %c0_55 = arith.constant 0 : index
    %c0_56 = arith.constant 0 : index
    %104 = vector.load %arg15[%c0_55, %c0_56] : memref<1x32xf32, #tpu.memory_space<vmem>>, vector<1x32xf32>
    %105 = vector.broadcast %104 : vector<1x32xf32> to vector<8x32xf32>
    %106 = arith.addf %103, %105 : vector<8x32xf32>
    %107 = arith.addf %106, %66 : vector<8x32xf32>
    %c0_57 = arith.constant 0 : index
    %c0_58 = arith.constant 0 : index
    %108 = vector.load %arg16[%c0_57, %c0_58] : memref<1x32xf32, #tpu.memory_space<vmem>>, vector<1x32xf32>
    %c0_59 = arith.constant 0 : index
    %c0_60 = arith.constant 0 : index
    %109 = vector.load %arg17[%c0_59, %c0_60] : memref<1x32xf32, #tpu.memory_space<vmem>>, vector<1x32xf32>
    %cst_61 = arith.constant dense<0.000000e+00> : vector<8xf32>
    %110 = vector.multi_reduction <add>, %107, %cst_61 [1] : vector<8x32xf32> to vector<8xf32>
    %111 = vector.shape_cast %110 : vector<8xf32> to vector<8x1xf32>
    %cst_62 = arith.constant 3.200000e+01 : f32
    %112 = vector.broadcast %cst_62 : f32 to vector<8x1xf32>
    %113 = arith.divf %111, %112 : vector<8x1xf32>
    %114 = vector.broadcast %113 : vector<8x1xf32> to vector<8x32xf32>
    %115 = arith.subf %107, %114 : vector<8x32xf32>
    %116 = arith.mulf %115, %115 : vector<8x32xf32>
    %cst_63 = arith.constant dense<0.000000e+00> : vector<8xf32>
    %117 = vector.multi_reduction <add>, %116, %cst_63 [1] : vector<8x32xf32> to vector<8xf32>
    %118 = vector.shape_cast %117 : vector<8xf32> to vector<8x1xf32>
    %cst_64 = arith.constant 3.200000e+01 : f32
    %119 = vector.broadcast %cst_64 : f32 to vector<8x1xf32>
    %120 = arith.divf %118, %119 : vector<8x1xf32>
    %121 = vector.broadcast %113 : vector<8x1xf32> to vector<8x32xf32>
    %122 = arith.subf %107, %121 : vector<8x32xf32>
    %cst_65 = arith.constant 9.99999974E-6 : f32
    %123 = vector.broadcast %cst_65 : f32 to vector<8x1xf32>
    %124 = arith.addf %120, %123 : vector<8x1xf32>
    %125 = math.rsqrt %124 : vector<8x1xf32>
    %126 = vector.broadcast %125 : vector<8x1xf32> to vector<8x32xf32>
    %127 = arith.mulf %122, %126 : vector<8x32xf32>
    %128 = vector.broadcast %108 : vector<1x32xf32> to vector<8x32xf32>
    %129 = arith.mulf %127, %128 : vector<8x32xf32>
    %130 = vector.broadcast %109 : vector<1x32xf32> to vector<8x32xf32>
    %131 = arith.addf %129, %130 : vector<8x32xf32>
    %c0_66 = arith.constant 0 : index
    %c0_67 = arith.constant 0 : index
    %132 = vector.load %arg18[%c0_66, %c0_67] : memref<32x128xf32, #tpu.memory_space<vmem>>, vector<32x128xf32>
    %cst_68 = arith.constant dense<0.000000e+00> : vector<8x128xf32>
    %133 = tpu.matmul %131, %132, %cst_68 {dimension_numbers = #tpu.dot_dimension_numbers<[1], [0], [0], [1], [0, 0, 1, 1], [], []>} : vector<8x32xf32>, vector<32x128xf32>, vector<8x128xf32> -> vector<8x128xf32>
    %c0_69 = arith.constant 0 : index
    %c0_70 = arith.constant 0 : index
    %134 = vector.load %arg19[%c0_69, %c0_70] : memref<1x128xf32, #tpu.memory_space<vmem>>, vector<1x128xf32>
    %135 = vector.broadcast %134 : vector<1x128xf32> to vector<8x128xf32>
    %136 = arith.addf %133, %135 : vector<8x128xf32>
    %cst_71 = arith.constant 0.000000e+00 : f32
    %137 = vector.broadcast %cst_71 : f32 to vector<8x128xf32>
    %138 = arith.maximumf %136, %137 : vector<8x128xf32>
    %c0_72 = arith.constant 0 : index
    %c0_73 = arith.constant 0 : index
    %139 = vector.load %arg20[%c0_72, %c0_73] : memref<128x32xf32, #tpu.memory_space<vmem>>, vector<128x32xf32>
    %cst_74 = arith.constant dense<0.000000e+00> : vector<8x32xf32>
    %140 = tpu.matmul %138, %139, %cst_74 {dimension_numbers = #tpu.dot_dimension_numbers<[1], [0], [0], [1], [0, 0, 1, 1], [], []>} : vector<8x128xf32>, vector<128x32xf32>, vector<8x32xf32> -> vector<8x32xf32>
    %c0_75 = arith.constant 0 : index
    %c0_76 = arith.constant 0 : index
    %141 = vector.load %arg21[%c0_75, %c0_76] : memref<1x32xf32, #tpu.memory_space<vmem>>, vector<1x32xf32>
    %142 = vector.broadcast %141 : vector<1x32xf32> to vector<8x32xf32>
    %143 = arith.addf %140, %142 : vector<8x32xf32>
    %144 = arith.addf %143, %131 : vector<8x32xf32>
    %c0_77 = arith.constant 0 : index
    %c0_78 = arith.constant 0 : index
    %145 = vector.load %arg22[%c0_77, %c0_78] : memref<1x32xf32, #tpu.memory_space<vmem>>, vector<1x32xf32>
    %c0_79 = arith.constant 0 : index
    %c0_80 = arith.constant 0 : index
    %146 = vector.load %arg23[%c0_79, %c0_80] : memref<1x32xf32, #tpu.memory_space<vmem>>, vector<1x32xf32>
    %cst_81 = arith.constant dense<0.000000e+00> : vector<8xf32>
    %147 = vector.multi_reduction <add>, %144, %cst_81 [1] : vector<8x32xf32> to vector<8xf32>
    %148 = vector.shape_cast %147 : vector<8xf32> to vector<8x1xf32>
    %cst_82 = arith.constant 3.200000e+01 : f32
    %149 = vector.broadcast %cst_82 : f32 to vector<8x1xf32>
    %150 = arith.divf %148, %149 : vector<8x1xf32>
    %151 = vector.broadcast %150 : vector<8x1xf32> to vector<8x32xf32>
    %152 = arith.subf %144, %151 : vector<8x32xf32>
    %153 = arith.mulf %152, %152 : vector<8x32xf32>
    %cst_83 = arith.constant dense<0.000000e+00> : vector<8xf32>
    %154 = vector.multi_reduction <add>, %153, %cst_83 [1] : vector<8x32xf32> to vector<8xf32>
    %155 = vector.shape_cast %154 : vector<8xf32> to vector<8x1xf32>
    %cst_84 = arith.constant 3.200000e+01 : f32
    %156 = vector.broadcast %cst_84 : f32 to vector<8x1xf32>
    %157 = arith.divf %155, %156 : vector<8x1xf32>
    %158 = vector.broadcast %150 : vector<8x1xf32> to vector<8x32xf32>
    %159 = arith.subf %144, %158 : vector<8x32xf32>
    %cst_85 = arith.constant 9.99999974E-6 : f32
    %160 = vector.broadcast %cst_85 : f32 to vector<8x1xf32>
    %161 = arith.addf %157, %160 : vector<8x1xf32>
    %162 = math.rsqrt %161 : vector<8x1xf32>
    %163 = vector.broadcast %162 : vector<8x1xf32> to vector<8x32xf32>
    %164 = arith.mulf %159, %163 : vector<8x32xf32>
    %165 = vector.broadcast %145 : vector<1x32xf32> to vector<8x32xf32>
    %166 = arith.mulf %164, %165 : vector<8x32xf32>
    %167 = vector.broadcast %146 : vector<1x32xf32> to vector<8x32xf32>
    %168 = arith.addf %166, %167 : vector<8x32xf32>
    %c0_86 = arith.constant 0 : index
    %c0_87 = arith.constant 0 : index
    %c0_88 = arith.constant 0 : index
    %169 = vector.load %arg24[%c0_86, %c0_87, %c0_88] : memref<1x8x32xf32, #tpu.memory_space<vmem>>, vector<1x8x32xf32>
    %170 = vector.shape_cast %169 : vector<1x8x32xf32> to vector<8x32xf32>
    %171 = vector.shape_cast %168 : vector<8x32xf32> to vector<1x8x32xf32>
    tpu.vector_store %arg24[%c0_86, %c0_87, %c0_88], %171 {strides = array<i32>} : memref<1x8x32xf32, #tpu.memory_space<vmem>>, vector<1x8x32xf32>,
    return
  }
  func.func @transform_0(%arg0: i32, %arg1: i32) -> (i32, i32, i32) {
    %c0_i32 = arith.constant 0 : i32
    %c0_i32_0 = arith.constant 0 : i32
    return %arg0, %arg1, %c0_i32 : i32, i32, i32
  }
  func.func @transform_1(%arg0: i32, %arg1: i32) -> (i32, i32, i32) {
    %c0_i32 = arith.constant 0 : i32
    %c0_i32_0 = arith.constant 0 : i32
    return %arg0, %arg1, %c0_i32 : i32, i32, i32
  }
  func.func @transform_2(%arg0: i32, %arg1: i32) -> (i32, i32, i32, i32) {
    %c0_i32 = arith.constant 0 : i32
    %c0_i32_0 = arith.constant 0 : i32
    %c0_i32_1 = arith.constant 0 : i32
    return %arg0, %c0_i32, %arg1, %c0_i32_0 : i32, i32, i32, i32
  }
  func.func @transform_3(%arg0: i32, %arg1: i32) -> (i32, i32, i32, i32) {
    %c0_i32 = arith.constant 0 : i32
    %c0_i32_0 = arith.constant 0 : i32
    %c0_i32_1 = arith.constant 0 : i32
    %c0_i32_2 = arith.constant 0 : i32
    return %arg0, %c0_i32, %c0_i32_0, %c0_i32_1 : i32, i32, i32, i32
  }
  func.func @transform_4(%arg0: i32, %arg1: i32) -> (i32, i32, i32, i32) {
    %c0_i32 = arith.constant 0 : i32
    %c0_i32_0 = arith.constant 0 : i32
    %c0_i32_1 = arith.constant 0 : i32
    %c0_i32_2 = arith.constant 0 : i32
    return %arg0, %c0_i32, %c0_i32_0, %c0_i32_1 : i32, i32, i32, i32
  }
  func.func @transform_5(%arg0: i32, %arg1: i32) -> (i32, i32, i32, i32) {
    %c0_i32 = arith.constant 0 : i32
    %c0_i32_0 = arith.constant 0 : i32
    %c0_i32_1 = arith.constant 0 : i32
    %c0_i32_2 = arith.constant 0 : i32
    return %arg0, %c0_i32, %c0_i32_0, %c0_i32_1 : i32, i32, i32, i32
  }
  func.func @transform_6(%arg0: i32, %arg1: i32) -> (i32, i32, i32, i32) {
    %c0_i32 = arith.constant 0 : i32
    %c0_i32_0 = arith.constant 0 : i32
    %c0_i32_1 = arith.constant 0 : i32
    %c0_i32_2 = arith.constant 0 : i32
    return %arg0, %c0_i32, %c0_i32_0, %c0_i32_1 : i32, i32, i32, i32
  }
  func.func @transform_7(%arg0: i32, %arg1: i32) -> (i32, i32, i32) {
    %c0_i32 = arith.constant 0 : i32
    %c0_i32_0 = arith.constant 0 : i32
    %c0_i32_1 = arith.constant 0 : i32
    %c0_i32_2 = arith.constant 0 : i32
    return %c0_i32, %c0_i32_0, %c0_i32_1 : i32, i32, i32
  }
  func.func @transform_8(%arg0: i32, %arg1: i32) -> (i32, i32) {
    %c0_i32 = arith.constant 0 : i32
    %c0_i32_0 = arith.constant 0 : i32
    %c0_i32_1 = arith.constant 0 : i32
    return %c0_i32, %c0_i32_0 : i32, i32
  }
  func.func @transform_9(%arg0: i32, %arg1: i32) -> (i32, i32) {
    %c0_i32 = arith.constant 0 : i32
    %c0_i32_0 = arith.constant 0 : i32
    %c0_i32_1 = arith.constant 0 : i32
    return %c0_i32, %c0_i32_0 : i32, i32
  }
  func.func @transform_10(%arg0: i32, %arg1: i32) -> (i32, i32) {
    %c0_i32 = arith.constant 0 : i32
    %c0_i32_0 = arith.constant 0 : i32
    %c0_i32_1 = arith.constant 0 : i32
    return %c0_i32, %c0_i32_0 : i32, i32
  }
  func.func @transform_11(%arg0: i32, %arg1: i32) -> (i32, i32) {
    %c0_i32 = arith.constant 0 : i32
    %c0_i32_0 = arith.constant 0 : i32
    %c0_i32_1 = arith.constant 0 : i32
    return %c0_i32, %c0_i32_0 : i32, i32
  }
  func.func @transform_12(%arg0: i32, %arg1: i32) -> (i32, i32) {
    %c0_i32 = arith.constant 0 : i32
    %c0_i32_0 = arith.constant 0 : i32
    %c0_i32_1 = arith.constant 0 : i32
    return %c0_i32, %c0_i32_0 : i32, i32
  }
  func.func @transform_13(%arg0: i32, %arg1: i32) -> (i32, i32) {
    %c0_i32 = arith.constant 0 : i32
    %c0_i32_0 = arith.constant 0 : i32
    %c0_i32_1 = arith.constant 0 : i32
    return %c0_i32, %c0_i32_0 : i32, i32
  }
  func.func @transform_14(%arg0: i32, %arg1: i32) -> (i32, i32) {
    %c0_i32 = arith.constant 0 : i32
    %c0_i32_0 = arith.constant 0 : i32
    %c0_i32_1 = arith.constant 0 : i32
    return %c0_i32, %c0_i32_0 : i32, i32
  }
  func.func @transform_15(%arg0: i32, %arg1: i32) -> (i32, i32) {
    %c0_i32 = arith.constant 0 : i32
    %c0_i32_0 = arith.constant 0 : i32
    %c0_i32_1 = arith.constant 0 : i32
    return %c0_i32, %c0_i32_0 : i32, i32
  }
  func.func @transform_16(%arg0: i32, %arg1: i32) -> (i32, i32) {
    %c0_i32 = arith.constant 0 : i32
    %c0_i32_0 = arith.constant 0 : i32
    %c0_i32_1 = arith.constant 0 : i32
    return %c0_i32, %c0_i32_0 : i32, i32
  }
  func.func @transform_17(%arg0: i32, %arg1: i32) -> (i32, i32) {
    %c0_i32 = arith.constant 0 : i32
    %c0_i32_0 = arith.constant 0 : i32
    %c0_i32_1 = arith.constant 0 : i32
    return %c0_i32, %c0_i32_0 : i32, i32
  }
  func.func @transform_18(%arg0: i32, %arg1: i32) -> (i32, i32) {
    %c0_i32 = arith.constant 0 : i32
    %c0_i32_0 = arith.constant 0 : i32
    %c0_i32_1 = arith.constant 0 : i32
    return %c0_i32, %c0_i32_0 : i32, i32
  }
  func.func @transform_19(%arg0: i32, %arg1: i32) -> (i32, i32) {
    %c0_i32 = arith.constant 0 : i32
    %c0_i32_0 = arith.constant 0 : i32
    %c0_i32_1 = arith.constant 0 : i32
    return %c0_i32, %c0_i32_0 : i32, i32
  }
  func.func @transform_20(%arg0: i32, %arg1: i32) -> (i32, i32) {
    %c0_i32 = arith.constant 0 : i32
    %c0_i32_0 = arith.constant 0 : i32
    %c0_i32_1 = arith.constant 0 : i32
    return %c0_i32, %c0_i32_0 : i32, i32
  }
  func.func @transform_21(%arg0: i32, %arg1: i32) -> (i32, i32) {
    %c0_i32 = arith.constant 0 : i32
    %c0_i32_0 = arith.constant 0 : i32
    %c0_i32_1 = arith.constant 0 : i32
    return %c0_i32, %c0_i32_0 : i32, i32
  }
  func.func @transform_22(%arg0: i32, %arg1: i32) -> (i32, i32, i32) {
    %c0_i32 = arith.constant 0 : i32
    %c0_i32_0 = arith.constant 0 : i32
    return %arg0, %arg1, %c0_i32 : i32, i32, i32
  }
}

</mosaic_0001>

<llo_original>
// kernel: decoder_block.1
$region0: #{decoder_block.1}
  #allocation0 [shape = 'u32[]', space=smem, size = 0x4, offset = 0x4, fixed_abs, tag = 'smem constant byte address 0x4 - core index']
  #allocation1 [shape = 'u32[144,128]{1,0:T(1,128)}', space=vmem, size = 0x12000, scoped, tag = 'internal scratch']
  %s0 = inlined_call_operand.vmem [shape: f32[2,8,32], index: 0, kind: input, shape index: {}]
  %s1 = inlined_call_operand.vmem [shape: f32[2,8,8], index: 1, kind: input, shape index: {}]
  %s2 = inlined_call_operand.vmem [shape: f32[2,4,8,8], index: 2, kind: input, shape index: {}]
  %s3 = inlined_call_operand.vmem [shape: f32[2,4,8,8], index: 3, kind: input, shape index: {}]
  %s4 = inlined_call_operand.vmem [shape: f32[2,4,8,8], index: 4, kind: input, shape index: {}]
  %s5 = inlined_call_operand.vmem [shape: f32[2,4,16,8], index: 5, kind: input, shape index: {}]
  %s6 = inlined_call_operand.vmem [shape: f32[2,4,16,8], index: 6, kind: input, shape index: {}]
  %s7 = inlined_call_operand.vmem [shape: f32[4,8,8], index: 7, kind: input, shape index: {}]
  %s8 = inlined_call_operand.vmem [shape: f32[32,32], index: 8, kind: input, shape index: {}]
  %s9 = inlined_call_operand.vmem [shape: f32[1,32], index: 9, kind: input, shape index: {}]
  %s10 = inlined_call_operand.vmem [shape: f32[1,32], index: 10, kind: input, shape index: {}]
  %s11 = inlined_call_operand.vmem [shape: f32[1,32], index: 11, kind: input, shape index: {}]
  %s12 = inlined_call_operand.vmem [shape: f32[32,32], index: 12, kind: input, shape index: {}]
  %s13 = inlined_call_operand.vmem [shape: f32[1,32], index: 13, kind: input, shape index: {}]
  %s14 = inlined_call_operand.vmem [shape: f32[1,32], index: 14, kind: input, shape index: {}]
  %s15 = inlined_call_operand.vmem [shape: f32[1,32], index: 15, kind: input, shape index: {}]
  %s16 = inlined_call_operand.vmem [shape: f32[32,128], index: 16, kind: input, shape index: {}]
  %s17 = inlined_call_operand.vmem [shape: f32[1,128], index: 17, kind: input, shape index: {}]
  %s18 = inlined_call_operand.vmem [shape: f32[128,32], index: 18, kind: input, shape index: {}]
  %s19 = inlined_call_operand.vmem [shape: f32[1,32], index: 19, kind: input, shape index: {}]
  %s20 = inlined_call_operand.vmem [shape: f32[1,32], index: 20, kind: input, shape index: {}]
  %s21 = inlined_call_operand.vmem [shape: f32[1,32], index: 21, kind: input, shape index: {}]
  %s22 = inlined_call_operand.hbm [shape: f32[2,8,32], index: 22, kind: output, shape index: {}]
  %s23 = sld [smem:[#allocation0]]
  $region121: #{decoder_block.1} parent=0
    _
  %s25 = ssub.s32 1, %s23
  %s26 = scalar_select 0, %s25, %s23
  $region1: #{decoder_block.1} parent=0
    #allocation2 [shape = 'u8[8192]{0}', space=vmem, size = 0x2000, scoped, tag = 'output window, operand 0']
    #allocation3 [shape = 's32[2]{0}', space=sflag, size = 0x8, scoped, tag = 'scoped memory for decoder_block.1']
    %27 = vsyncpa [#allocation3], 0
    %s28 = scalar_lea.sflag [#allocation3], 1
    %29 = vsyncpa %s28, 0
    loop: start=0, step=1, limit=4
    $region2: #{decoder_block.1} parent=1 // loop_pre_header
      _
    $region3: #{decoder_block.1} parent=1 // loop_header
      %s31 = sphi 0, %s35
      %p32 = scmp.ge.s32.totalorder %s31, 4
      %s38 = sphi 0, %s50
      %s39 = sphi 0, %s46
      %s40 = sphi 0, %s38
      %s41 = sphi 0, %s39
      %s42 = sphi 0, %s40
      %s43 = sphi 0, %s41
      %s55 = sphi 0, %s57
      %s58 = sphi 0, %s55
      %s59 = sphi 0, %s58
      %s75 = sphi 0, %s59
      %s83 = sphi 0, %s85
      %s86 = sphi 0, %s83
      %s87 = sphi 0, %s86
      %s103 = sphi 0, %s87
      %s111 = sphi 0, %s113
      %s114 = sphi 0, %s111
      %s115 = sphi 0, %s114
      %s131 = sphi 0, %s115
      %s137 = sphi 0, %s139
      %s140 = sphi 0, %s137
      %s141 = sphi 0, %s140
      %s157 = sphi 0, %s141
      %s163 = sphi 0, %s165
      %s166 = sphi 0, %s163
      %s167 = sphi 0, %s166
      %s183 = sphi 0, %s167
      %s189 = sphi 0, %s191
      %s192 = sphi 0, %s189
      %s193 = sphi 0, %s192
      %s209 = sphi 0, %s193
      %s215 = sphi 0, %s217
      %s218 = sphi 0, %s215
      %s219 = sphi 0, %s218
      %s235 = sphi 0, %s219
      %s239 = sphi 0, %s239
      %s241 = sphi 0, %s239
      %s242 = sphi 0, %s241
      %s256 = sphi 0, %s242
      %s260 = sphi 0, %s260
      %s262 = sphi 0, %s260
      %s263 = sphi 0, %s262
      %s277 = sphi 0, %s263
      %s281 = sphi 0, %s281
      %s283 = sphi 0, %s281
      %s284 = sphi 0, %s283
      %s298 = sphi 0, %s284
      %s302 = sphi 0, %s302
      %s304 = sphi 0, %s302
      %s305 = sphi 0, %s304
      %s319 = sphi 0, %s305
      %s323 = sphi 0, %s323
      %s325 = sphi 0, %s323
      %s326 = sphi 0, %s325
      %s340 = sphi 0, %s326
      %s344 = sphi 0, %s344
      %s346 = sphi 0, %s344
      %s347 = sphi 0, %s346
      %s361 = sphi 0, %s347
      %s365 = sphi 0, %s365
      %s367 = sphi 0, %s365
      %s368 = sphi 0, %s367
      %s382 = sphi 0, %s368
      %s386 = sphi 0, %s386
      %s388 = sphi 0, %s386
      %s389 = sphi 0, %s388
      %s403 = sphi 0, %s389
      %s407 = sphi 0, %s407
      %s409 = sphi 0, %s407
      %s410 = sphi 0, %s409
      %s424 = sphi 0, %s410
      %s428 = sphi 0, %s428
      %s430 = sphi 0, %s428
      %s431 = sphi 0, %s430
      %s445 = sphi 0, %s431
      %s449 = sphi 0, %s449
      %s451 = sphi 0, %s449
      %s452 = sphi 0, %s451
      %s466 = sphi 0, %s452
      %s470 = sphi 0, %s470
      %s472 = sphi 0, %s470
      %s473 = sphi 0, %s472
      %s487 = sphi 0, %s473
      %s491 = sphi 0, %s491
      %s493 = sphi 0, %s491
      %s494 = sphi 0, %s493
      %s508 = sphi 0, %s494
      %s512 = sphi 0, %s512
      %s514 = sphi 0, %s512
      %s515 = sphi 0, %s514
      %s529 = sphi 0, %s515
      %s533 = sphi 0, %s533
      %s535 = sphi 0, %s533
      %s536 = sphi 0, %s535
      %s550 = sphi 0, %s536
      %s558 = sphi 0, %s560
      %s561 = sphi 0, %s558
      %s562 = sphi 0, %s561
      %s578 = sphi 0, %s562
    $region4: #{decoder_block.1} parent=1 // loop_header_branch
      %34 = sbr.rel (%p32) target = $region8
    $region5: #{decoder_block.1} parent=1 // loop_body
      %s36 = ssub.s32 %s31, 1
      %s37 = ssub.s32 %s31, 2
      %s44 = sadd.s32 1, %s39
      %p45 = scmp.ge.s32.totalorder %s44, 1
      %s46 = scalar_select %p45, 0, %s44
      %s47 = sadd.s32 1, %s38
      %s48 = scalar_select %p45, %s47, %s38
      %p49 = scmp.ge.s32.totalorder %s48, 2
      %s50 = scalar_select %p49, 0, %s48
      %s51 = ssub.s32 %s38, %s50
      %s52 = ssub.s32 %s39, %s46
      %s53 = sor.u32 %s51, %s52
      %p54 = scmp.eq.s32.totalorder %s53, 0
      %s56 = sadd.s32 %s55, 1
      %s57 = scalar_select %p54, %s55, %s56
      %p60 = pneg %p54
      %p61 = scmp.eq.s32.totalorder %s31, 1
      %p62 = por %p60, %p61
      %p63 = scmp.ne.s32.totalorder %s55, %s58
      %p64 = scmp.eq.s32.totalorder %s31, 0
      %p65 = por %p63, %p64
      %p66 = scmp.ne.s32.totalorder %s55, %s58
      %p67 = scmp.eq.s32.totalorder %s36, 1
      %p68 = por %p66, %p67
      %p69 = scmp.ne.s32.totalorder %s58, %s59
      %p70 = scmp.eq.s32.totalorder %s36, 0
      %p71 = por %p69, %p70
      %p72 = scmp.ne.s32.totalorder %s58, %s59
      %p73 = scmp.eq.s32.totalorder %s37, 1
      %p74 = por %p72, %p73
      %p76 = scmp.ne.s32.totalorder %s59, %s75
      %p77 = scmp.eq.s32.totalorder %s37, 0
      %p78 = por %p76, %p77
      %s79 = ssub.s32 %s38, %s50
      %s80 = ssub.s32 %s39, %s46
      %s81 = sor.u32 %s79, %s80
      %p82 = scmp.eq.s32.totalorder %s81, 0
      %s84 = sadd.s32 %s83, 1
      %s85 = scalar_select %p82, %s83, %s84
      %p88 = pneg %p82
      %p89 = scmp.eq.s32.totalorder %s31, 1
      %p90 = por %p88, %p89
      %p91 = scmp.ne.s32.totalorder %s83, %s86
      %p92 = scmp.eq.s32.totalorder %s31, 0
      %p93 = por %p91, %p92
      %p94 = scmp.ne.s32.totalorder %s83, %s86
      %p95 = scmp.eq.s32.totalorder %s36, 1
      %p96 = por %p94, %p95
      %p97 = scmp.ne.s32.totalorder %s86, %s87
      %p98 = scmp.eq.s32.totalorder %s36, 0
      %p99 = por %p97, %p98
      %p100 = scmp.ne.s32.totalorder %s86, %s87
      %p101 = scmp.eq.s32.totalorder %s37, 1
      %p102 = por %p100, %p101
      %p104 = scmp.ne.s32.totalorder %s87, %s103
      %p105 = scmp.eq.s32.totalorder %s37, 0
      %p106 = por %p104, %p105
      %s107 = ssub.s32 %s38, %s50
      %s108 = ssub.s32 %s39, %s46
      %s109 = sor.u32 %s107, %s108
      %p110 = scmp.eq.s32.totalorder %s109, 0
      %s112 = sadd.s32 %s111, 1
      %s113 = scalar_select %p110, %s111, %s112
      %p116 = pneg %p110
      %p117 = scmp.eq.s32.totalorder %s31, 1
      %p118 = por %p116, %p117
      %p119 = scmp.ne.s32.totalorder %s111, %s114
      %p120 = scmp.eq.s32.totalorder %s31, 0
      %p121 = por %p119, %p120
      %p122 = scmp.ne.s32.totalorder %s111, %s114
      %p123 = scmp.eq.s32.totalorder %s36, 1
      %p124 = por %p122, %p123
      %p125 = scmp.ne.s32.totalorder %s114, %s115
      %p126 = scmp.eq.s32.totalorder %s36, 0
      %p127 = por %p125, %p126
      %p128 = scmp.ne.s32.totalorder %s114, %s115
      %p129 = scmp.eq.s32.totalorder %s37, 1
      %p130 = por %p128, %p129
      %p132 = scmp.ne.s32.totalorder %s115, %s131
      %p133 = scmp.eq.s32.totalorder %s37, 0
      %p134 = por %p132, %p133
      %s135 = ssub.s32 %s38, %s50
      %p136 = scmp.eq.s32.totalorder %s135, 0
      %s138 = sadd.s32 %s137, 1
      %s139 = scalar_select %p136, %s137, %s138
      %p142 = pneg %p136
      %p143 = scmp.eq.s32.totalorder %s31, 1
      %p144 = por %p142, %p143
      %p145 = scmp.ne.s32.totalorder %s137, %s140
      %p146 = scmp.eq.s32.totalorder %s31, 0
      %p147 = por %p145, %p146
      %p148 = scmp.ne.s32.totalorder %s137, %s140
      %p149 = scmp.eq.s32.totalorder %s36, 1
      %p150 = por %p148, %p149
      %p151 = scmp.ne.s32.totalorder %s140, %s141
      %p152 = scmp.eq.s32.totalorder %s36, 0
      %p153 = por %p151, %p152
      %p154 = scmp.ne.s32.totalorder %s140, %s141
      %p155 = scmp.eq.s32.totalorder %s37, 1
      %p156 = por %p154, %p155
      %p158 = scmp.ne.s32.totalorder %s141, %s157
      %p159 = scmp.eq.s32.totalorder %s37, 0
      %p160 = por %p158, %p159
      %s161 = ssub.s32 %s38, %s50
      %p162 = scmp.eq.s32.totalorder %s161, 0
      %s164 = sadd.s32 %s163, 1
      %s165 = scalar_select %p162, %s163, %s164
      %p168 = pneg %p162
      %p169 = scmp.eq.s32.totalorder %s31, 1
      %p170 = por %p168, %p169
      %p171 = scmp.ne.s32.totalorder %s163, %s166
      %p172 = scmp.eq.s32.totalorder %s31, 0
      %p173 = por %p171, %p172
      %p174 = scmp.ne.s32.totalorder %s163, %s166
      %p175 = scmp.eq.s32.totalorder %s36, 1
      %p176 = por %p174, %p175
      %p177 = scmp.ne.s32.totalorder %s166, %s167
      %p178 = scmp.eq.s32.totalorder %s36, 0
      %p179 = por %p177, %p178
      %p180 = scmp.ne.s32.totalorder %s166, %s167
      %p181 = scmp.eq.s32.totalorder %s37, 1
      %p182 = por %p180, %p181
      %p184 = scmp.ne.s32.totalorder %s167, %s183
      %p185 = scmp.eq.s32.totalorder %s37, 0
      %p186 = por %p184, %p185
      %s187 = ssub.s32 %s38, %s50
      %p188 = scmp.eq.s32.totalorder %s187, 0
      %s190 = sadd.s32 %s189, 1
      %s191 = scalar_select %p188, %s189, %s190
      %p194 = pneg %p188
      %p195 = scmp.eq.s32.totalorder %s31, 1
      %p196 = por %p194, %p195
      %p197 = scmp.ne.s32.totalorder %s189, %s192
      %p198 = scmp.eq.s32.totalorder %s31, 0
      %p199 = por %p197, %p198
      %p200 = scmp.ne.s32.totalorder %s189, %s192
      %p201 = scmp.eq.s32.totalorder %s36, 1
      %p202 = por %p200, %p201
      %p203 = scmp.ne.s32.totalorder %s192, %s193
      %p204 = scmp.eq.s32.totalorder %s36, 0
      %p205 = por %p203, %p204
      %p206 = scmp.ne.s32.totalorder %s192, %s193
      %p207 = scmp.eq.s32.totalorder %s37, 1
      %p208 = por %p206, %p207
      %p210 = scmp.ne.s32.totalorder %s193, %s209
      %p211 = scmp.eq.s32.totalorder %s37, 0
      %p212 = por %p210, %p211
      %s213 = ssub.s32 %s38, %s50
      %p214 = scmp.eq.s32.totalorder %s213, 0
      %s216 = sadd.s32 %s215, 1
      %s217 = scalar_select %p214, %s215, %s216
      %p220 = pneg %p214
      %p221 = scmp.eq.s32.totalorder %s31, 1
      %p222 = por %p220, %p221
      %p223 = scmp.ne.s32.totalorder %s215, %s218
      %p224 = scmp.eq.s32.totalorder %s31, 0
      %p225 = por %p223, %p224
      %p226 = scmp.ne.s32.totalorder %s215, %s218
      %p227 = scmp.eq.s32.totalorder %s36, 1
      %p228 = por %p226, %p227
      %p229 = scmp.ne.s32.totalorder %s218, %s219
      %p230 = scmp.eq.s32.totalorder %s36, 0
      %p231 = por %p229, %p230
      %p232 = scmp.ne.s32.totalorder %s218, %s219
      %p233 = scmp.eq.s32.totalorder %s37, 1
      %p234 = por %p232, %p233
      %p236 = scmp.ne.s32.totalorder %s219, %s235
      %p237 = scmp.eq.s32.totalorder %s37, 0
      %p238 = por %p236, %p237
      %s240 = sadd.s32 %s239, 1
      %p243 = scmp.eq.s32.totalorder %s31, 1
      %p244 = scmp.ne.s32.totalorder %s239, %s241
      %p245 = scmp.eq.s32.totalorder %s31, 0
      %p246 = por %p244, %p245
      %p247 = scmp.ne.s32.totalorder %s239, %s241
      %p248 = scmp.eq.s32.totalorder %s36, 1
      %p249 = por %p247, %p248
      %p250 = scmp.ne.s32.totalorder %s241, %s242
      %p251 = scmp.eq.s32.totalorder %s36, 0
      %p252 = por %p250, %p251
      %p253 = scmp.ne.s32.totalorder %s241, %s242
      %p254 = scmp.eq.s32.totalorder %s37, 1
      %p255 = por %p253, %p254
      %p257 = scmp.ne.s32.totalorder %s242, %s256
      %p258 = scmp.eq.s32.totalorder %s37, 0
      %p259 = por %p257, %p258
      %s261 = sadd.s32 %s260, 1
      %p264 = scmp.eq.s32.totalorder %s31, 1
      %p265 = scmp.ne.s32.totalorder %s260, %s262
      %p266 = scmp.eq.s32.totalorder %s31, 0
      %p267 = por %p265, %p266
      %p268 = scmp.ne.s32.totalorder %s260, %s262
      %p269 = scmp.eq.s32.totalorder %s36, 1
      %p270 = por %p268, %p269
      %p271 = scmp.ne.s32.totalorder %s262, %s263
      %p272 = scmp.eq.s32.totalorder %s36, 0
      %p273 = por %p271, %p272
      %p274 = scmp.ne.s32.totalorder %s262, %s263
      %p275 = scmp.eq.s32.totalorder %s37, 1
      %p276 = por %p274, %p275
      %p278 = scmp.ne.s32.totalorder %s263, %s277
      %p279 = scmp.eq.s32.totalorder %s37, 0
      %p280 = por %p278, %p279
      %s282 = sadd.s32 %s281, 1
      %p285 = scmp.eq.s32.totalorder %s31, 1
      %p286 = scmp.ne.s32.totalorder %s281, %s283
      %p287 = scmp.eq.s32.totalorder %s31, 0
      %p288 = por %p286, %p287
      %p289 = scmp.ne.s32.totalorder %s281, %s283
      %p290 = scmp.eq.s32.totalorder %s36, 1
      %p291 = por %p289, %p290
      %p292 = scmp.ne.s32.totalorder %s283, %s284
      %p293 = scmp.eq.s32.totalorder %s36, 0
      %p294 = por %p292, %p293
      %p295 = scmp.ne.s32.totalorder %s283, %s284
      %p296 = scmp.eq.s32.totalorder %s37, 1
      %p297 = por %p295, %p296
      %p299 = scmp.ne.s32.totalorder %s284, %s298
      %p300 = scmp.eq.s32.totalorder %s37, 0
      %p301 = por %p299, %p300
      %s303 = sadd.s32 %s302, 1
      %p306 = scmp.eq.s32.totalorder %s31, 1
      %p307 = scmp.ne.s32.totalorder %s302, %s304
      %p308 = scmp.eq.s32.totalorder %s31, 0
      %p309 = por %p307, %p308
      %p310 = scmp.ne.s32.totalorder %s302, %s304
      %p311 = scmp.eq.s32.totalorder %s36, 1
      %p312 = por %p310, %p311
      %p313 = scmp.ne.s32.totalorder %s304, %s305
      %p314 = scmp.eq.s32.totalorder %s36, 0
      %p315 = por %p313, %p314
      %p316 = scmp.ne.s32.totalorder %s304, %s305
      %p317 = scmp.eq.s32.totalorder %s37, 1
      %p318 = por %p316, %p317
      %p320 = scmp.ne.s32.totalorder %s305, %s319
      %p321 = scmp.eq.s32.totalorder %s37, 0
      %p322 = por %p320, %p321
      %s324 = sadd.s32 %s323, 1
      %p327 = scmp.eq.s32.totalorder %s31, 1
      %p328 = scmp.ne.s32.totalorder %s323, %s325
      %p329 = scmp.eq.s32.totalorder %s31, 0
      %p330 = por %p328, %p329
      %p331 = scmp.ne.s32.totalorder %s323, %s325
      %p332 = scmp.eq.s32.totalorder %s36, 1
      %p333 = por %p331, %p332
      %p334 = scmp.ne.s32.totalorder %s325, %s326
      %p335 = scmp.eq.s32.totalorder %s36, 0
      %p336 = por %p334, %p335
      %p337 = scmp.ne.s32.totalorder %s325, %s326
      %p338 = scmp.eq.s32.totalorder %s37, 1
      %p339 = por %p337, %p338
      %p341 = scmp.ne.s32.totalorder %s326, %s340
      %p342 = scmp.eq.s32.totalorder %s37, 0
      %p343 = por %p341, %p342
      %s345 = sadd.s32 %s344, 1
      %p348 = scmp.eq.s32.totalorder %s31, 1
      %p349 = scmp.ne.s32.totalorder %s344, %s346
      %p350 = scmp.eq.s32.totalorder %s31, 0
      %p351 = por %p349, %p350
      %p352 = scmp.ne.s32.totalorder %s344, %s346
      %p353 = scmp.eq.s32.totalorder %s36, 1
      %p354 = por %p352, %p353
      %p355 = scmp.ne.s32.totalorder %s346, %s347
      %p356 = scmp.eq.s32.totalorder %s36, 0
      %p357 = por %p355, %p356
      %p358 = scmp.ne.s32.totalorder %s346, %s347
      %p359 = scmp.eq.s32.totalorder %s37, 1
      %p360 = por %p358, %p359
      %p362 = scmp.ne.s32.totalorder %s347, %s361
      %p363 = scmp.eq.s32.totalorder %s37, 0
      %p364 = por %p362, %p363
      %s366 = sadd.s32 %s365, 1
      %p369 = scmp.eq.s32.totalorder %s31, 1
      %p370 = scmp.ne.s32.totalorder %s365, %s367
      %p371 = scmp.eq.s32.totalorder %s31, 0
      %p372 = por %p370, %p371
      %p373 = scmp.ne.s32.totalorder %s365, %s367
      %p374 = scmp.eq.s32.totalorder %s36, 1
      %p375 = por %p373, %p374
      %p376 = scmp.ne.s32.totalorder %s367, %s368
      %p377 = scmp.eq.s32.totalorder %s36, 0
      %p378 = por %p376, %p377
      %p379 = scmp.ne.s32.totalorder %s367, %s368
      %p380 = scmp.eq.s32.totalorder %s37, 1
      %p381 = por %p379, %p380
      %p383 = scmp.ne.s32.totalorder %s368, %s382
      %p384 = scmp.eq.s32.totalorder %s37, 0
      %p385 = por %p383, %p384
      %s387 = sadd.s32 %s386, 1
      %p390 = scmp.eq.s32.totalorder %s31, 1
      %p391 = scmp.ne.s32.totalorder %s386, %s388
      %p392 = scmp.eq.s32.totalorder %s31, 0
      %p393 = por %p391, %p392
      %p394 = scmp.ne.s32.totalorder %s386, %s388
      %p395 = scmp.eq.s32.totalorder %s36, 1
      %p396 = por %p394, %p395
      %p397 = scmp.ne.s32.totalorder %s388, %s389
      %p398 = scmp.eq.s32.totalorder %s36, 0
      %p399 = por %p397, %p398
      %p400 = scmp.ne.s32.totalorder %s388, %s389
      %p401 = scmp.eq.s32.totalorder %s37, 1
      %p402 = por %p400, %p401
      %p404 = scmp.ne.s32.totalorder %s389, %s403
      %p405 = scmp.eq.s32.totalorder %s37, 0
      %p406 = por %p404, %p405
      %s408 = sadd.s32 %s407, 1
      %p411 = scmp.eq.s32.totalorder %s31, 1
      %p412 = scmp.ne.s32.totalorder %s407, %s409
      %p413 = scmp.eq.s32.totalorder %s31, 0
      %p414 = por %p412, %p413
      %p415 = scmp.ne.s32.totalorder %s407, %s409
      %p416 = scmp.eq.s32.totalorder %s36, 1
      %p417 = por %p415, %p416
      %p418 = scmp.ne.s32.totalorder %s409, %s410
      %p419 = scmp.eq.s32.totalorder %s36, 0
      %p420 = por %p418, %p419
      %p421 = scmp.ne.s32.totalorder %s409, %s410
      %p422 = scmp.eq.s32.totalorder %s37, 1
      %p423 = por %p421, %p422
      %p425 = scmp.ne.s32.totalorder %s410, %s424
      %p426 = scmp.eq.s32.totalorder %s37, 0
      %p427 = por %p425, %p426
      %s429 = sadd.s32 %s428, 1
      %p432 = scmp.eq.s32.totalorder %s31, 1
      %p433 = scmp.ne.s32.totalorder %s428, %s430
      %p434 = scmp.eq.s32.totalorder %s31, 0
      %p435 = por %p433, %p434
      %p436 = scmp.ne.s32.totalorder %s428, %s430
      %p437 = scmp.eq.s32.totalorder %s36, 1
      %p438 = por %p436, %p437
      %p439 = scmp.ne.s32.totalorder %s430, %s431
      %p440 = scmp.eq.s32.totalorder %s36, 0
      %p441 = por %p439, %p440
      %p442 = scmp.ne.s32.totalorder %s430, %s431
      %p443 = scmp.eq.s32.totalorder %s37, 1
      %p444 = por %p442, %p443
      %p446 = scmp.ne.s32.totalorder %s431, %s445
      %p447 = scmp.eq.s32.totalorder %s37, 0
      %p448 = por %p446, %p447
      %s450 = sadd.s32 %s449, 1
      %p453 = scmp.eq.s32.totalorder %s31, 1
      %p454 = scmp.ne.s32.totalorder %s449, %s451
      %p455 = scmp.eq.s32.totalorder %s31, 0
      %p456 = por %p454, %p455
      %p457 = scmp.ne.s32.totalorder %s449, %s451
      %p458 = scmp.eq.s32.totalorder %s36, 1
      %p459 = por %p457, %p458
      %p460 = scmp.ne.s32.totalorder %s451, %s452
      %p461 = scmp.eq.s32.totalorder %s36, 0
      %p462 = por %p460, %p461
      %p463 = scmp.ne.s32.totalorder %s451, %s452
      %p464 = scmp.eq.s32.totalorder %s37, 1
      %p465 = por %p463, %p464
      %p467 = scmp.ne.s32.totalorder %s452, %s466
      %p468 = scmp.eq.s32.totalorder %s37, 0
      %p469 = por %p467, %p468
      %s471 = sadd.s32 %s470, 1
      %p474 = scmp.eq.s32.totalorder %s31, 1
      %p475 = scmp.ne.s32.totalorder %s470, %s472
      %p476 = scmp.eq.s32.totalorder %s31, 0
      %p477 = por %p475, %p476
      %p478 = scmp.ne.s32.totalorder %s470, %s472
      %p479 = scmp.eq.s32.totalorder %s36, 1
      %p480 = por %p478, %p479
      %p481 = scmp.ne.s32.totalorder %s472, %s473
      %p482 = scmp.eq.s32.totalorder %s36, 0
      %p483 = por %p481, %p482
      %p484 = scmp.ne.s32.totalorder %s472, %s473
      %p485 = scmp.eq.s32.totalorder %s37, 1
      %p486 = por %p484, %p485
      %p488 = scmp.ne.s32.totalorder %s473, %s487
      %p489 = scmp.eq.s32.totalorder %s37, 0
      %p490 = por %p488, %p489
      %s492 = sadd.s32 %s491, 1
      %p495 = scmp.eq.s32.totalorder %s31, 1
      %p496 = scmp.ne.s32.totalorder %s491, %s493
      %p497 = scmp.eq.s32.totalorder %s31, 0
      %p498 = por %p496, %p497
      %p499 = scmp.ne.s32.totalorder %s491, %s493
      %p500 = scmp.eq.s32.totalorder %s36, 1
      %p501 = por %p499, %p500
      %p502 = scmp.ne.s32.totalorder %s493, %s494
      %p503 = scmp.eq.s32.totalorder %s36, 0
      %p504 = por %p502, %p503
      %p505 = scmp.ne.s32.totalorder %s493, %s494
      %p506 = scmp.eq.s32.totalorder %s37, 1
      %p507 = por %p505, %p506
      %p509 = scmp.ne.s32.totalorder %s494, %s508
      %p510 = scmp.eq.s32.totalorder %s37, 0
      %p511 = por %p509, %p510
      %s513 = sadd.s32 %s512, 1
      %p516 = scmp.eq.s32.totalorder %s31, 1
      %p517 = scmp.ne.s32.totalorder %s512, %s514
      %p518 = scmp.eq.s32.totalorder %s31, 0
      %p519 = por %p517, %p518
      %p520 = scmp.ne.s32.totalorder %s512, %s514
      %p521 = scmp.eq.s32.totalorder %s36, 1
      %p522 = por %p520, %p521
      %p523 = scmp.ne.s32.totalorder %s514, %s515
      %p524 = scmp.eq.s32.totalorder %s36, 0
      %p525 = por %p523, %p524
      %p526 = scmp.ne.s32.totalorder %s514, %s515
      %p527 = scmp.eq.s32.totalorder %s37, 1
      %p528 = por %p526, %p527
      %p530 = scmp.ne.s32.totalorder %s515, %s529
      %p531 = scmp.eq.s32.totalorder %s37, 0
      %p532 = por %p530, %p531
      %s534 = sadd.s32 %s533, 1
      %p537 = scmp.eq.s32.totalorder %s31, 1
      %p538 = scmp.ne.s32.totalorder %s533, %s535
      %p539 = scmp.eq.s32.totalorder %s31, 0
      %p540 = por %p538, %p539
      %p541 = scmp.ne.s32.totalorder %s533, %s535
      %p542 = scmp.eq.s32.totalorder %s36, 1
      %p543 = por %p541, %p542
      %p544 = scmp.ne.s32.totalorder %s535, %s536
      %p545 = scmp.eq.s32.totalorder %s36, 0
      %p546 = por %p544, %p545
      %p547 = scmp.ne.s32.totalorder %s535, %s536
      %p548 = scmp.eq.s32.totalorder %s37, 1
      %p549 = por %p547, %p548
      %p551 = scmp.ne.s32.totalorder %s536, %s550
      %p552 = scmp.eq.s32.totalorder %s37, 0
      %p553 = por %p551, %p552
      %s554 = ssub.s32 %s38, %s50
      %s555 = ssub.s32 %s39, %s46
      %s556 = sor.u32 %s554, %s555
      %p557 = scmp.eq.s32.totalorder %s556, 0
      %s559 = sadd.s32 %s558, 1
      %s560 = scalar_select %p557, %s558, %s559
      %p563 = pneg %p557
      %p564 = scmp.eq.s32.totalorder %s31, 1
      %p565 = por %p563, %p564
      %p566 = scmp.ne.s32.totalorder %s558, %s561
      %p567 = scmp.eq.s32.totalorder %s31, 0
      %p568 = por %p566, %p567
      %p569 = scmp.ne.s32.totalorder %s558, %s561
      %p570 = scmp.eq.s32.totalorder %s36, 1
      %p571 = por %p569, %p570
      %p572 = scmp.ne.s32.totalorder %s561, %s562
      %p573 = scmp.eq.s32.totalorder %s36, 0
      %p574 = por %p572, %p573
      %p575 = scmp.ne.s32.totalorder %s561, %s562
      %p576 = scmp.eq.s32.totalorder %s37, 1
      %p577 = por %p575, %p576
      %p579 = scmp.ne.s32.totalorder %s562, %s578
      %p580 = scmp.eq.s32.totalorder %s37, 0
      %p581 = por %p579, %p580
      %p582 = scmp.le.s32.totalorder 1, %s31
      %p583 = scmp.lt.s32.totalorder %s31, 3
      %p584 = pnand %p582, %p583
      %p585 = pneg %p584
      // Predicated region
      $region9: #{decoder_block.1} parent=5 // pred_check
        _
      $region10: #{decoder_block.1} parent=5 // pred_check_branch
        %587 = sbr.rel (%p584) target = $region12
      $region11: #{decoder_block.1} parent=5 // pred_region
        %s588 = ssub.s32 %s31, 1
        // Predicated region
        $region13: #{decoder_block.1} parent=11 // pred_check
          %p589 = pneg %p252
        $region14: #{decoder_block.1} parent=11 // pred_check_branch
          %591 = sbr.rel (%p589) target = $region16
        $region15: #{decoder_block.1} parent=11 // pred_region
          _
        $region16: #{decoder_block.1} parent=11 // pred_fallthru
          _
        // Predicated region
        $region17: #{decoder_block.1} parent=11 // pred_check
          %p592 = pneg %p273
        $region18: #{decoder_block.1} parent=11 // pred_check_branch
          %594 = sbr.rel (%p592) target = $region20
        $region19: #{decoder_block.1} parent=11 // pred_region
          _
        $region20: #{decoder_block.1} parent=11 // pred_fallthru
          _
        // Predicated region
        $region21: #{decoder_block.1} parent=11 // pred_check
          %p595 = pneg %p294
        $region22: #{decoder_block.1} parent=11 // pred_check_branch
          %597 = sbr.rel (%p595) target = $region24
        $region23: #{decoder_block.1} parent=11 // pred_region
          _
        $region24: #{decoder_block.1} parent=11 // pred_fallthru
          _
        // Predicated region
        $region25: #{decoder_block.1} parent=11 // pred_check
          %p598 = pneg %p315
        $region26: #{decoder_block.1} parent=11 // pred_check_branch
          %600 = sbr.rel (%p598) target = $region28
        $region27: #{decoder_block.1} parent=11 // pred_region
          _
        $region28: #{decoder_block.1} parent=11 // pred_fallthru
          _
        // Predicated region
        $region29: #{decoder_block.1} parent=11 // pred_check
          %p601 = pneg %p336
        $region30: #{decoder_block.1} parent=11 // pred_check_branch
          %603 = sbr.rel (%p601) target = $region32
        $region31: #{decoder_block.1} parent=11 // pred_region
          _
        $region32: #{decoder_block.1} parent=11 // pred_fallthru
          _
        // Predicated region
        $region33: #{decoder_block.1} parent=11 // pred_check
          %p604 = pneg %p357
        $region34: #{decoder_block.1} parent=11 // pred_check_branch
          %606 = sbr.rel (%p604) target = $region36
        $region35: #{decoder_block.1} parent=11 // pred_region
          _
        $region36: #{decoder_block.1} parent=11 // pred_fallthru
          _
        // Predicated region
        $region37: #{decoder_block.1} parent=11 // pred_check
          %p607 = pneg %p378
        $region38: #{decoder_block.1} parent=11 // pred_check_branch
          %609 = sbr.rel (%p607) target = $region40
        $region39: #{decoder_block.1} parent=11 // pred_region
          _
        $region40: #{decoder_block.1} parent=11 // pred_fallthru
          _
        // Predicated region
        $region41: #{decoder_block.1} parent=11 // pred_check
          %p610 = pneg %p399
        $region42: #{decoder_block.1} parent=11 // pred_check_branch
          %612 = sbr.rel (%p610) target = $region44
        $region43: #{decoder_block.1} parent=11 // pred_region
          _
        $region44: #{decoder_block.1} parent=11 // pred_fallthru
          _
        // Predicated region
        $region45: #{decoder_block.1} parent=11 // pred_check
          %p613 = pneg %p420
        $region46: #{decoder_block.1} parent=11 // pred_check_branch
          %615 = sbr.rel (%p613) target = $region48
        $region47: #{decoder_block.1} parent=11 // pred_region
          _
        $region48: #{decoder_block.1} parent=11 // pred_fallthru
          _
        // Predicated region
        $region49: #{decoder_block.1} parent=11 // pred_check
          %p616 = pneg %p441
        $region50: #{decoder_block.1} parent=11 // pred_check_branch
          %618 = sbr.rel (%p616) target = $region52
        $region51: #{decoder_block.1} parent=11 // pred_region
          _
        $region52: #{decoder_block.1} parent=11 // pred_fallthru
          _
        // Predicated region
        $region53: #{decoder_block.1} parent=11 // pred_check
          %p619 = pneg %p462
        $region54: #{decoder_block.1} parent=11 // pred_check_branch
          %621 = sbr.rel (%p619) target = $region56
        $region55: #{decoder_block.1} parent=11 // pred_region
          _
        $region56: #{decoder_block.1} parent=11 // pred_fallthru
          _
        // Predicated region
        $region57: #{decoder_block.1} parent=11 // pred_check
          %p622 = pneg %p483
        $region58: #{decoder_block.1} parent=11 // pred_check_branch
          %624 = sbr.rel (%p622) target = $region60
        $region59: #{decoder_block.1} parent=11 // pred_region
          _
        $region60: #{decoder_block.1} parent=11 // pred_fallthru
          _
        // Predicated region
        $region61: #{decoder_block.1} parent=11 // pred_check
          %p625 = pneg %p504
        $region62: #{decoder_block.1} parent=11 // pred_check_branch
          %627 = sbr.rel (%p625) target = $region64
        $region63: #{decoder_block.1} parent=11 // pred_region
          _
        $region64: #{decoder_block.1} parent=11 // pred_fallthru
          _
        // Predicated region
        $region65: #{decoder_block.1} parent=11 // pred_check
          %p628 = pneg %p525
        $region66: #{decoder_block.1} parent=11 // pred_check_branch
          %630 = sbr.rel (%p628) target = $region68
        $region67: #{decoder_block.1} parent=11 // pred_region
          _
        $region68: #{decoder_block.1} parent=11 // pred_fallthru
          _
        // Predicated region
        $region69: #{decoder_block.1} parent=11 // pred_check
          %p631 = pneg %p546
        $region70: #{decoder_block.1} parent=11 // pred_check_branch
          %633 = sbr.rel (%p631) target = $region72
        $region71: #{decoder_block.1} parent=11 // pred_region
          _
        $region72: #{decoder_block.1} parent=11 // pred_fallthru
          _
      $region12: #{decoder_block.1} parent=5 // pred_fallthru
        _
      %p634 = scmp.lt.s32.totalorder %s31, 2
      // Predicated region
      $region73: #{decoder_block.1} parent=5 // pred_check
        %p635 = pneg %p634
      $region74: #{decoder_block.1} parent=5 // pred_check_branch
        %637 = sbr.rel (%p635) target = $region76
      $region75: #{decoder_block.1} parent=5 // pred_region
        // Predicated region
        $region77: #{decoder_block.1} parent=75 // pred_check
          %p638 = pneg %p65
        $region78: #{decoder_block.1} parent=75 // pred_check_branch
          %640 = sbr.rel (%p638) target = $region80
        $region79: #{decoder_block.1} parent=75 // pred_region
          %p641 = scmp.lt.s32.totalorder %s38, 1
          %s642 = scalar_select %p641, %s38, 1
          %p643 = scmp.lt.s32.totalorder %s39, 0
          %s644 = scalar_select %p643, %s39, 0
          %s645 = sadd.s32 %s644, %s642
          %s646 = smul.addr %s645, 8
          %s647 = scalar_lea.vmem %s0, %s646
        $region80: #{decoder_block.1} parent=75 // pred_fallthru
          _
        // Predicated region
        $region81: #{decoder_block.1} parent=75 // pred_check
          %p648 = pneg %p93
        $region82: #{decoder_block.1} parent=75 // pred_check_branch
          %650 = sbr.rel (%p648) target = $region84
        $region83: #{decoder_block.1} parent=75 // pred_region
          %p651 = scmp.lt.s32.totalorder %s38, 1
          %s652 = scalar_select %p651, %s38, 1
          %p653 = scmp.lt.s32.totalorder %s39, 0
          %s654 = scalar_select %p653, %s39, 0
          %s655 = sadd.s32 %s654, %s652
          %s656 = smul.addr %s655, 8
          %s657 = scalar_lea.vmem %s1, %s656
        $region84: #{decoder_block.1} parent=75 // pred_fallthru
          _
        // Predicated region
        $region85: #{decoder_block.1} parent=75 // pred_check
          %p658 = pneg %p121
        $region86: #{decoder_block.1} parent=75 // pred_check_branch
          %660 = sbr.rel (%p658) target = $region88
        $region87: #{decoder_block.1} parent=75 // pred_region
          %p661 = scmp.lt.s32.totalorder %s38, 1
          %s662 = scalar_select %p661, %s38, 1
          %p663 = scmp.lt.s32.totalorder %s39, 0
          %s664 = scalar_select %p663, %s39, 0
          %s665 = smul.addr %s662, 4
          %s666 = sadd.s32 %s664, %s665
          %s667 = smul.addr %s666, 8
          %s668 = scalar_lea.vmem %s2, %s667
        $region88: #{decoder_block.1} parent=75 // pred_fallthru
          _
        // Predicated region
        $region89: #{decoder_block.1} parent=75 // pred_check
          %p669 = pneg %p147
        $region90: #{decoder_block.1} parent=75 // pred_check_branch
          %671 = sbr.rel (%p669) target = $region92
        $region91: #{decoder_block.1} parent=75 // pred_region
          %p672 = scmp.lt.s32.totalorder %s38, 1
          %s673 = scalar_select %p672, %s38, 1
          %s674 = smul.addr %s673, 4
          %s675 = smul.addr %s674, 8
          %s676 = scalar_lea.vmem %s3, %s675
        $region92: #{decoder_block.1} parent=75 // pred_fallthru
          _
        // Predicated region
        $region93: #{decoder_block.1} parent=75 // pred_check
          %p677 = pneg %p173
        $region94: #{decoder_block.1} parent=75 // pred_check_branch
          %679 = sbr.rel (%p677) target = $region96
        $region95: #{decoder_block.1} parent=75 // pred_region
          %p680 = scmp.lt.s32.totalorder %s38, 1
          %s681 = scalar_select %p680, %s38, 1
          %s682 = smul.addr %s681, 4
          %s683 = smul.addr %s682, 8
          %s684 = scalar_lea.vmem %s4, %s683
        $region96: #{decoder_block.1} parent=75 // pred_fallthru
          _
        // Predicated region
        $region97: #{decoder_block.1} parent=75 // pred_check
          %p685 = pneg %p199
        $region98: #{decoder_block.1} parent=75 // pred_check_branch
          %687 = sbr.rel (%p685) target = $region100
        $region99: #{decoder_block.1} parent=75 // pred_region
          %p688 = scmp.lt.s32.totalorder %s38, 1
          %s689 = scalar_select %p688, %s38, 1
          %s690 = smul.addr %s689, 8
          %s691 = smul.addr %s690, 8
          %s692 = scalar_lea.vmem %s5, %s691
        $region100: #{decoder_block.1} parent=75 // pred_fallthru
          _
        // Predicated region
        $region101: #{decoder_block.1} parent=75 // pred_check
          %p693 = pneg %p225
        $region102: #{decoder_block.1} parent=75 // pred_check_branch
          %695 = sbr.rel (%p693) target = $region104
        $region103: #{decoder_block.1} parent=75 // pred_region
          %p696 = scmp.lt.s32.totalorder %s38, 1
          %s697 = scalar_select %p696, %s38, 1
          %s698 = smul.addr %s697, 8
          %s699 = smul.addr %s698, 8
          %s700 = scalar_lea.vmem %s6, %s699
        $region104: #{decoder_block.1} parent=75 // pred_fallthru
          _
      $region76: #{decoder_block.1} parent=5 // pred_fallthru
        _
      %p701 = scmp.le.s32.totalorder 1, %s31
      %p702 = scmp.lt.s32.totalorder %s31, 3
      %p703 = pnand %p701, %p702
      %p704 = pneg %p703
      // Predicated region
      $region105: #{decoder_block.1} parent=5 // pred_check
        _
      $region106: #{decoder_block.1} parent=5 // pred_check_branch
        %706 = sbr.rel (%p703) target = $region108
      $region107: #{decoder_block.1} parent=5 // pred_region
        %s707 = ssub.s32 %s31, 1
        %p708 = scmp.lt.s32.totalorder %s40, 1
        %s709 = scalar_select %p708, %s40, 1
        %p710 = scmp.lt.s32.totalorder %s41, 0
        %s711 = scalar_select %p710, %s41, 0
        %s712 = sadd.s32 %s711, %s709
        %s713 = smul.addr %s712, 8
        %s714 = scalar_lea.vmem %s0, %s713
        %p715 = pneg %p71
        %p716 = pneg %p68
        %p717 = scmp.lt.s32.totalorder %s40, 1
        %s718 = scalar_select %p717, %s40, 1
        %p719 = scmp.lt.s32.totalorder %s41, 0
        %s720 = scalar_select %p719, %s41, 0
        %s721 = sadd.s32 %s720, %s718
        %s722 = smul.addr %s721, 8
        %s723 = scalar_lea.vmem %s1, %s722
        %p724 = pneg %p99
        %p725 = pneg %p96
        %p726 = scmp.lt.s32.totalorder %s40, 1
        %s727 = scalar_select %p726, %s40, 1
        %p728 = scmp.lt.s32.totalorder %s41, 0
        %s729 = scalar_select %p728, %s41, 0
        %s730 = smul.addr %s727, 4
        %s731 = sadd.s32 %s729, %s730
        %s732 = smul.addr %s731, 8
        %s733 = scalar_lea.vmem %s2, %s732
        %p734 = pneg %p127
        %p735 = pneg %p124
        %p736 = scmp.lt.s32.totalorder %s40, 1
        %s737 = scalar_select %p736, %s40, 1
        %s738 = smul.addr %s737, 4
        %s739 = smul.addr %s738, 8
        %s740 = scalar_lea.vmem %s3, %s739
        %p741 = pneg %p153
        %p742 = pneg %p150
        %p743 = scmp.lt.s32.totalorder %s40, 1
        %s744 = scalar_select %p743, %s40, 1
        %s745 = smul.addr %s744, 4
        %s746 = smul.addr %s745, 8
        %s747 = scalar_lea.vmem %s4, %s746
        %p748 = pneg %p179
        %p749 = pneg %p176
        %p750 = scmp.lt.s32.totalorder %s40, 1
        %s751 = scalar_select %p750, %s40, 1
        %s752 = smul.addr %s751, 8
        %s753 = smul.addr %s752, 8
        %s754 = scalar_lea.vmem %s5, %s753
        %p755 = pneg %p205
        %p756 = pneg %p202
        %p757 = scmp.lt.s32.totalorder %s40, 1
        %s758 = scalar_select %p757, %s40, 1
        %s759 = smul.addr %s758, 8
        %s760 = smul.addr %s759, 8
        %s761 = scalar_lea.vmem %s6, %s760
        %p762 = pneg %p231
        %p763 = pneg %p228
        %p764 = pneg %p252
        %p765 = pneg %p249
        %p766 = pneg %p273
        %p767 = pneg %p270
        %p768 = pneg %p294
        %p769 = pneg %p291
        %p770 = pneg %p315
        %p771 = pneg %p312
        %p772 = pneg %p336
        %p773 = pneg %p333
        %p774 = pneg %p357
        %p775 = pneg %p354
        %p776 = pneg %p378
        %p777 = pneg %p375
        %p778 = pneg %p399
        %p779 = pneg %p396
        %p780 = pneg %p420
        %p781 = pneg %p417
        %p782 = pneg %p441
        %p783 = pneg %p438
        %p784 = pneg %p462
        %p785 = pneg %p459
        %p786 = pneg %p483
        %p787 = pneg %p480
        %p788 = pneg %p504
        %p789 = pneg %p501
        %p790 = pneg %p525
        %p791 = pneg %p522
        %p792 = pneg %p546
        %p793 = pneg %p543
        %p794 = pneg %p574
        %p795 = pneg %p571
        %s796 = sand.u32 %s561, 1
        %s797 = scalar_lea.sflag [#allocation3], %s796
        %s798 = sand.u32 %s561, 1
        %s799 = smul.addr %s798, 8
        %s800 = scalar_lea.vmem [#allocation2], %s799
        %p801 = scmp.lt.s32.totalorder %s40, 1
        %s802 = scalar_select %p801, %s40, 1
        %p803 = scmp.lt.s32.totalorder %s41, 0
        %s804 = scalar_select %p803, %s41, 0
        %s805 = sadd.s32 %s804, %s802
        %s806 = smul.addr %s805, 8
        %s807 = scalar_lea.vmem %s0, %s806
        %p808 = scmp.lt.s32.totalorder %s40, 1
        %s809 = scalar_select %p808, %s40, 1
        %p810 = scmp.lt.s32.totalorder %s41, 0
        %s811 = scalar_select %p810, %s41, 0
        %s812 = sadd.s32 %s811, %s809
        %s813 = smul.addr %s812, 8
        %s814 = scalar_lea.vmem %s1, %s813
        %p815 = scmp.lt.s32.totalorder %s40, 1
        %s816 = scalar_select %p815, %s40, 1
        %p817 = scmp.lt.s32.totalorder %s41, 0
        %s818 = scalar_select %p817, %s41, 0
        %s819 = smul.addr %s816, 4
        %s820 = sadd.s32 %s818, %s819
        %s821 = smul.addr %s820, 8
        %s822 = scalar_lea.vmem %s2, %s821
        %p823 = scmp.lt.s32.totalorder %s40, 1
        %s824 = scalar_select %p823, %s40, 1
        %s825 = smul.addr %s824, 4
        %s826 = smul.addr %s825, 8
        %s827 = scalar_lea.vmem %s3, %s826
        %p828 = scmp.lt.s32.totalorder %s40, 1
        %s829 = scalar_select %p828, %s40, 1
        %s830 = smul.addr %s829, 4
        %s831 = smul.addr %s830, 8
        %s832 = scalar_lea.vmem %s4, %s831
        %p833 = scmp.lt.s32.totalorder %s40, 1
        %s834 = scalar_select %p833, %s40, 1
        %s835 = smul.addr %s834, 8
        %s836 = smul.addr %s835, 8
        %s837 = scalar_lea.vmem %s5, %s836
        %p838 = scmp.lt.s32.totalorder %s40, 1
        %s839 = scalar_select %p838, %s40, 1
        %s840 = smul.addr %s839, 8
        %s841 = smul.addr %s840, 8
        %s842 = scalar_lea.vmem %s6, %s841
        %v843 = vld [vmem:[%s822] sm:$0xff]
        %v844 = vld [vmem:[%s822 + $0x8] sm:$0xff]
        %v845 = vld [vmem:[%s822 + $0x10] sm:$0xff]
        %v846 = vld [vmem:[%s822 + $0x18] sm:$0xff]
        %v847 = vld [vmem:[%s827] sm:$0xff]
        %v848 = vld [vmem:[%s827 + $0x8] sm:$0xff]
        %v849 = vld [vmem:[%s827 + $0x10] sm:$0xff]
        %v850 = vld [vmem:[%s827 + $0x18] sm:$0xff]
        %vm851 = vcmask 64512
        %v853 = vsel %vm851, %v843, 0
        %v856 = vsel %vm851, %v847, 0
        %858 = vmatprep.subr.mxu0 0.0
        %859 = vmatpush1.xpose.msra.mxu0 %v856
        %860 = vmatprep.subr.mxu0 0.0
        %861 = vmatpush1.xpose.msra.mxu0 0.0
        %862 = vmatprep.subr.mxu0 0.0
        %863 = vmatpush1.xpose.msra.mxu0 0.0
        %864 = vmatprep.subr.mxu0 0.0
        %865 = vmatpush1.xpose.msra.mxu0 0.0
        %866 = vmatprep.subr.mxu0 0.0
        %867 = vmatpush1.xpose.msra.mxu0 0.0
        %868 = vmatprep.subr.mxu0 0.0
        %869 = vmatpush1.xpose.msra.mxu0 0.0
        %870 = vmatprep.subr.mxu0 0.0
        %871 = vmatpush1.xpose.msra.mxu0 0.0
        %872 = vmatprep.subr.mxu0 0.0
        %873 = vmatpush1.xpose.msra.mxu0 0.0
        %874 = vmatprep.subr.mxu0 0.0
        %875 = vmatpush1.xpose.msra.mxu0 0.0
        %876 = vmatprep.subr.mxu0 0.0
        %877 = vmatpush1.xpose.msra.mxu0 0.0
        %878 = vmatprep.subr.mxu0 0.0
        %879 = vmatpush1.xpose.msra.mxu0 0.0
        %880 = vmatprep.subr.mxu0 0.0
        %881 = vmatpush1.xpose.msra.mxu0 0.0
        %882 = vmatprep.subr.mxu0 0.0
        %883 = vmatpush1.xpose.msra.mxu0 0.0
        %884 = vmatprep.subr.mxu0 0.0
        %885 = vmatpush1.xpose.msra.mxu0 0.0
        %886 = vmatprep.subr.mxu0 0.0
        %887 = vmatpush1.xpose.msra.mxu0 0.0
        %888 = vmatprep.subr.mxu0 0.0
        %889 = vmatpush1.xpose.msra.mxu0 0.0
        %890 = vmatprep.subr.mxu0 0.0
        %891 = vmatpush1.xpose.msra.mxu0 0.0
        %892 = vmatprep.subr.mxu0 0.0
        %893 = vmatpush1.xpose.msra.mxu0 0.0
        %894 = vmatprep.subr.mxu0 0.0
        %895 = vmatpush1.xpose.msra.mxu0 0.0
        %896 = vmatprep.subr.mxu0 0.0
        %897 = vmatpush1.xpose.msra.mxu0 0.0
        %898 = vmatprep.subr.mxu0 0.0
        %899 = vmatpush1.xpose.msra.mxu0 0.0
        %900 = vmatprep.subr.mxu0 0.0
        %901 = vmatpush1.xpose.msra.mxu0 0.0
        %902 = vmatprep.subr.mxu0 0.0
        %903 = vmatpush1.xpose.msra.mxu0 0.0
        %904 = vmatprep.subr.mxu0 0.0
        %905 = vmatpush1.xpose.msra.mxu0 0.0
        %906 = vmatprep.subr.mxu0 0.0
        %907 = vmatpush1.xpose.msra.mxu0 0.0
        %908 = vmatprep.subr.mxu0 0.0
        %909 = vmatpush1.xpose.msra.mxu0 0.0
        %910 = vmatprep.subr.mxu0 0.0
        %911 = vmatpush1.xpose.msra.mxu0 0.0
        %912 = vmatprep.subr.mxu0 0.0
        %913 = vmatpush1.xpose.msra.mxu0 0.0
        %914 = vmatprep.subr.mxu0 0.0
        %915 = vmatpush1.xpose.msra.mxu0 0.0
        %916 = vmatprep.subr.mxu0 0.0
        %917 = vmatpush1.xpose.msra.mxu0 0.0
        %918 = vmatprep.subr.mxu0 0.0
        %919 = vmatpush1.xpose.msra.mxu0 0.0
        %920 = vmatprep.subr.mxu0 0.0
        %921 = vmatpush1.xpose.msra.mxu0 0.0
        %922 = vmatprep.mubr.f32.mxu0 0.0
        %923 = vmatmul.mubr.f32.gmra.mrb[0].mxu0 %v853
        %v924 = vpop.f32.mrb[0].mxu0
        %v925 = vadd.f32 0.0, %v924
        %v926 = vpop.f32.mrb[0].mxu0
        %927 = vdwg.mxu0
        %v929 = vsel %vm851, %v844, 0
        %v932 = vsel %vm851, %v848, 0
        %934 = vmatprep.subr.mxu0 0.0
        %935 = vmatpush1.xpose.msra.mxu0 %v932
        %936 = vmatprep.subr.mxu0 0.0
        %937 = vmatpush1.xpose.msra.mxu0 0.0
        %938 = vmatprep.subr.mxu0 0.0
        %939 = vmatpush1.xpose.msra.mxu0 0.0
        %940 = vmatprep.subr.mxu0 0.0
        %941 = vmatpush1.xpose.msra.mxu0 0.0
        %942 = vmatprep.subr.mxu0 0.0
        %943 = vmatpush1.xpose.msra.mxu0 0.0
        %944 = vmatprep.subr.mxu0 0.0
        %945 = vmatpush1.xpose.msra.mxu0 0.0
        %946 = vmatprep.subr.mxu0 0.0
        %947 = vmatpush1.xpose.msra.mxu0 0.0
        %948 = vmatprep.subr.mxu0 0.0
        %949 = vmatpush1.xpose.msra.mxu0 0.0
        %950 = vmatprep.subr.mxu0 0.0
        %951 = vmatpush1.xpose.msra.mxu0 0.0
        %952 = vmatprep.subr.mxu0 0.0
        %953 = vmatpush1.xpose.msra.mxu0 0.0
        %954 = vmatprep.subr.mxu0 0.0
        %955 = vmatpush1.xpose.msra.mxu0 0.0
        %956 = vmatprep.subr.mxu0 0.0
        %957 = vmatpush1.xpose.msra.mxu0 0.0
        %958 = vmatprep.subr.mxu0 0.0
        %959 = vmatpush1.xpose.msra.mxu0 0.0
        %960 = vmatprep.subr.mxu0 0.0
        %961 = vmatpush1.xpose.msra.mxu0 0.0
        %962 = vmatprep.subr.mxu0 0.0
        %963 = vmatpush1.xpose.msra.mxu0 0.0
        %964 = vmatprep.subr.mxu0 0.0
        %965 = vmatpush1.xpose.msra.mxu0 0.0
        %966 = vmatprep.subr.mxu0 0.0
        %967 = vmatpush1.xpose.msra.mxu0 0.0
        %968 = vmatprep.subr.mxu0 0.0
        %969 = vmatpush1.xpose.msra.mxu0 0.0
        %970 = vmatprep.subr.mxu0 0.0
        %971 = vmatpush1.xpose.msra.mxu0 0.0
        %972 = vmatprep.subr.mxu0 0.0
        %973 = vmatpush1.xpose.msra.mxu0 0.0
        %974 = vmatprep.subr.mxu0 0.0
        %975 = vmatpush1.xpose.msra.mxu0 0.0
        %976 = vmatprep.subr.mxu0 0.0
        %977 = vmatpush1.xpose.msra.mxu0 0.0
        %978 = vmatprep.subr.mxu0 0.0
        %979 = vmatpush1.xpose.msra.mxu0 0.0
        %980 = vmatprep.subr.mxu0 0.0
        %981 = vmatpush1.xpose.msra.mxu0 0.0
        %982 = vmatprep.subr.mxu0 0.0
        %983 = vmatpush1.xpose.msra.mxu0 0.0
        %984 = vmatprep.subr.mxu0 0.0
        %985 = vmatpush1.xpose.msra.mxu0 0.0
        %986 = vmatprep.subr.mxu0 0.0
        %987 = vmatpush1.xpose.msra.mxu0 0.0
        %988 = vmatprep.subr.mxu0 0.0
        %989 = vmatpush1.xpose.msra.mxu0 0.0
        %990 = vmatprep.subr.mxu0 0.0
        %991 = vmatpush1.xpose.msra.mxu0 0.0
        %992 = vmatprep.subr.mxu0 0.0
        %993 = vmatpush1.xpose.msra.mxu0 0.0
        %994 = vmatprep.subr.mxu0 0.0
        %995 = vmatpush1.xpose.msra.mxu0 0.0
        %996 = vmatprep.subr.mxu0 0.0
        %997 = vmatpush1.xpose.msra.mxu0 0.0
        %998 = vmatprep.mubr.f32.mxu0 0.0
        %999 = vmatmul.mubr.f32.gmra.mrb[0].mxu0 %v929
        %v1000 = vpop.f32.mrb[0].mxu0
        %v1001 = vadd.f32 0.0, %v1000
        %v1002 = vpop.f32.mrb[0].mxu0
        %1003 = vdwg.mxu0
        %v1005 = vsel %vm851, %v845, 0
        %v1008 = vsel %vm851, %v849, 0
        %1010 = vmatprep.subr.mxu0 0.0
        %1011 = vmatpush1.xpose.msra.mxu0 %v1008
        %1012 = vmatprep.subr.mxu0 0.0
        %1013 = vmatpush1.xpose.msra.mxu0 0.0
        %1014 = vmatprep.subr.mxu0 0.0
        %1015 = vmatpush1.xpose.msra.mxu0 0.0
        %1016 = vmatprep.subr.mxu0 0.0
        %1017 = vmatpush1.xpose.msra.mxu0 0.0
        %1018 = vmatprep.subr.mxu0 0.0
        %1019 = vmatpush1.xpose.msra.mxu0 0.0
        %1020 = vmatprep.subr.mxu0 0.0
        %1021 = vmatpush1.xpose.msra.mxu0 0.0
        %1022 = vmatprep.subr.mxu0 0.0
        %1023 = vmatpush1.xpose.msra.mxu0 0.0
        %1024 = vmatprep.subr.mxu0 0.0
        %1025 = vmatpush1.xpose.msra.mxu0 0.0
        %1026 = vmatprep.subr.mxu0 0.0
        %1027 = vmatpush1.xpose.msra.mxu0 0.0
        %1028 = vmatprep.subr.mxu0 0.0
        %1029 = vmatpush1.xpose.msra.mxu0 0.0
        %1030 = vmatprep.subr.mxu0 0.0
        %1031 = vmatpush1.xpose.msra.mxu0 0.0
        %1032 = vmatprep.subr.mxu0 0.0
        %1033 = vmatpush1.xpose.msra.mxu0 0.0
        %1034 = vmatprep.subr.mxu0 0.0
        %1035 = vmatpush1.xpose.msra.mxu0 0.0
        %1036 = vmatprep.subr.mxu0 0.0
        %1037 = vmatpush1.xpose.msra.mxu0 0.0
        %1038 = vmatprep.subr.mxu0 0.0
        %1039 = vmatpush1.xpose.msra.mxu0 0.0
        %1040 = vmatprep.subr.mxu0 0.0
        %1041 = vmatpush1.xpose.msra.mxu0 0.0
        %1042 = vmatprep.subr.mxu0 0.0
        %1043 = vmatpush1.xpose.msra.mxu0 0.0
        %1044 = vmatprep.subr.mxu0 0.0
        %1045 = vmatpush1.xpose.msra.mxu0 0.0
        %1046 = vmatprep.subr.mxu0 0.0
        %1047 = vmatpush1.xpose.msra.mxu0 0.0
        %1048 = vmatprep.subr.mxu0 0.0
        %1049 = vmatpush1.xpose.msra.mxu0 0.0
        %1050 = vmatprep.subr.mxu0 0.0
        %1051 = vmatpush1.xpose.msra.mxu0 0.0
        %1052 = vmatprep.subr.mxu0 0.0
        %1053 = vmatpush1.xpose.msra.mxu0 0.0
        %1054 = vmatprep.subr.mxu0 0.0
        %1055 = vmatpush1.xpose.msra.mxu0 0.0
        %1056 = vmatprep.subr.mxu0 0.0
        %1057 = vmatpush1.xpose.msra.mxu0 0.0
        %1058 = vmatprep.subr.mxu0 0.0
        %1059 = vmatpush1.xpose.msra.mxu0 0.0
        %1060 = vmatprep.subr.mxu0 0.0
        %1061 = vmatpush1.xpose.msra.mxu0 0.0
        %1062 = vmatprep.subr.mxu0 0.0
        %1063 = vmatpush1.xpose.msra.mxu0 0.0
        %1064 = vmatprep.subr.mxu0 0.0
        %1065 = vmatpush1.xpose.msra.mxu0 0.0
        %1066 = vmatprep.subr.mxu0 0.0
        %1067 = vmatpush1.xpose.msra.mxu0 0.0
        %1068 = vmatprep.subr.mxu0 0.0
        %1069 = vmatpush1.xpose.msra.mxu0 0.0
        %1070 = vmatprep.subr.mxu0 0.0
        %1071 = vmatpush1.xpose.msra.mxu0 0.0
        %1072 = vmatprep.subr.mxu0 0.0
        %1073 = vmatpush1.xpose.msra.mxu0 0.0
        %1074 = vmatprep.mubr.f32.mxu0 0.0
        %1075 = vmatmul.mubr.f32.gmra.mrb[0].mxu0 %v1005
        %v1076 = vpop.f32.mrb[0].mxu0
        %v1077 = vadd.f32 0.0, %v1076
        %v1078 = vpop.f32.mrb[0].mxu0
        %1079 = vdwg.mxu0
        %v1081 = vsel %vm851, %v846, 0
        %v1084 = vsel %vm851, %v850, 0
        %1086 = vmatprep.subr.mxu0 0.0
        %1087 = vmatpush1.xpose.msra.mxu0 %v1084
        %1088 = vmatprep.subr.mxu0 0.0
        %1089 = vmatpush1.xpose.msra.mxu0 0.0
        %1090 = vmatprep.subr.mxu0 0.0
        %1091 = vmatpush1.xpose.msra.mxu0 0.0
        %1092 = vmatprep.subr.mxu0 0.0
        %1093 = vmatpush1.xpose.msra.mxu0 0.0
        %1094 = vmatprep.subr.mxu0 0.0
        %1095 = vmatpush1.xpose.msra.mxu0 0.0
        %1096 = vmatprep.subr.mxu0 0.0
        %1097 = vmatpush1.xpose.msra.mxu0 0.0
        %1098 = vmatprep.subr.mxu0 0.0
        %1099 = vmatpush1.xpose.msra.mxu0 0.0
        %1100 = vmatprep.subr.mxu0 0.0
        %1101 = vmatpush1.xpose.msra.mxu0 0.0
        %1102 = vmatprep.subr.mxu0 0.0
        %1103 = vmatpush1.xpose.msra.mxu0 0.0
        %1104 = vmatprep.subr.mxu0 0.0
        %1105 = vmatpush1.xpose.msra.mxu0 0.0
        %1106 = vmatprep.subr.mxu0 0.0
        %1107 = vmatpush1.xpose.msra.mxu0 0.0
        %1108 = vmatprep.subr.mxu0 0.0
        %1109 = vmatpush1.xpose.msra.mxu0 0.0
        %1110 = vmatprep.subr.mxu0 0.0
        %1111 = vmatpush1.xpose.msra.mxu0 0.0
        %1112 = vmatprep.subr.mxu0 0.0
        %1113 = vmatpush1.xpose.msra.mxu0 0.0
        %1114 = vmatprep.subr.mxu0 0.0
        %1115 = vmatpush1.xpose.msra.mxu0 0.0
        %1116 = vmatprep.subr.mxu0 0.0
        %1117 = vmatpush1.xpose.msra.mxu0 0.0
        %1118 = vmatprep.subr.mxu0 0.0
        %1119 = vmatpush1.xpose.msra.mxu0 0.0
        %1120 = vmatprep.subr.mxu0 0.0
        %1121 = vmatpush1.xpose.msra.mxu0 0.0
        %1122 = vmatprep.subr.mxu0 0.0
        %1123 = vmatpush1.xpose.msra.mxu0 0.0
        %1124 = vmatprep.subr.mxu0 0.0
        %1125 = vmatpush1.xpose.msra.mxu0 0.0
        %1126 = vmatprep.subr.mxu0 0.0
        %1127 = vmatpush1.xpose.msra.mxu0 0.0
        %1128 = vmatprep.subr.mxu0 0.0
        %1129 = vmatpush1.xpose.msra.mxu0 0.0
        %1130 = vmatprep.subr.mxu0 0.0
        %1131 = vmatpush1.xpose.msra.mxu0 0.0
        %1132 = vmatprep.subr.mxu0 0.0
        %1133 = vmatpush1.xpose.msra.mxu0 0.0
        %1134 = vmatprep.subr.mxu0 0.0
        %1135 = vmatpush1.xpose.msra.mxu0 0.0
        %1136 = vmatprep.subr.mxu0 0.0
        %1137 = vmatpush1.xpose.msra.mxu0 0.0
        %1138 = vmatprep.subr.mxu0 0.0
        %1139 = vmatpush1.xpose.msra.mxu0 0.0
        %1140 = vmatprep.subr.mxu0 0.0
        %1141 = vmatpush1.xpose.msra.mxu0 0.0
        %1142 = vmatprep.subr.mxu0 0.0
        %1143 = vmatpush1.xpose.msra.mxu0 0.0
        %1144 = vmatprep.subr.mxu0 0.0
        %1145 = vmatpush1.xpose.msra.mxu0 0.0
        %1146 = vmatprep.subr.mxu0 0.0
        %1147 = vmatpush1.xpose.msra.mxu0 0.0
        %1148 = vmatprep.subr.mxu0 0.0
        %1149 = vmatpush1.xpose.msra.mxu0 0.0
        %1150 = vmatprep.mubr.f32.mxu0 0.0
        %1151 = vmatmul.mubr.f32.gmra.mrb[0].mxu0 %v1081
        %v1152 = vpop.f32.mrb[0].mxu0
        %v1153 = vadd.f32 0.0, %v1152
        %v1154 = vpop.f32.mrb[0].mxu0
        %1155 = vdwg.mxu0
        %v1156 = vld [vmem:[%s814] sm:$0xff]
        %vm1157 = vcmp.eq.f32.partialorder %v1156, 0.0
        %v1158 = vsel %vm1157, 1, 0
        %vm1159 = vcmp.eq.s32.totalorder %v1158, 1
        %v1160 = vsel %vm1159, -1e+20, %v925
        %v1161 = vsel %vm1159, -1e+20, %v1001
        %v1162 = vsel %vm1159, -1e+20, %v1077
        %v1163 = vsel %vm1159, -1e+20, %v1153
        %v1164 = vsel %vm851, %v1160, -inf
        %1165 = vmax.xlane.f32.xlu0 %v1164
        %v1166 = vpop.xlane.xlu0 %1165
        %v1167 = vsel %vm851, %v1161, -inf
        %1168 = vmax.xlane.f32.xlu0 %v1167
        %v1169 = vpop.xlane.xlu0 %1168
        %v1170 = vsel %vm851, %v1162, -inf
        %1171 = vmax.xlane.f32.xlu0 %v1170
        %v1172 = vpop.xlane.xlu0 %1171
        %v1173 = vsel %vm851, %v1163, -inf
        %1174 = vmax.xlane.f32.xlu0 %v1173
        %v1175 = vpop.xlane.xlu0 %1174
        %v1176 = vsub.f32 %v1160, %v1166
        %v1177 = vsub.f32 %v1161, %v1169
        %v1178 = vsub.f32 %v1162, %v1172
        %v1179 = vsub.f32 %v1163, %v1175
        %v1180 = vmul.f32 %v1176, 1.442695
        %v1181 = vpow.pop %v1180
        %v1182 = vmul.f32 %v1177, 1.442695
        %v1183 = vpow.pop %v1182
        %v1184 = vmul.f32 %v1178, 1.442695
        %v1185 = vpow.pop %v1184
        %v1186 = vmul.f32 %v1179, 1.442695
        %v1187 = vpow.pop %v1186
        %v1188 = vsel %vm851, %v1181, 0.0
        %1189 = vadd.xlane.f32.xlu0 %v1188
        %v1190 = vpop.xlane.xlu0 %1189
        %v1191 = vsel %vm851, %v1183, 0.0
        %1192 = vadd.xlane.f32.xlu0 %v1191
        %v1193 = vpop.xlane.xlu0 %1192
        %v1194 = vsel %vm851, %v1185, 0.0
        %1195 = vadd.xlane.f32.xlu0 %v1194
        %v1196 = vpop.xlane.xlu0 %1195
        %v1197 = vsel %vm851, %v1187, 0.0
        %1198 = vadd.xlane.f32.xlu0 %v1197
        %v1199 = vpop.xlane.xlu0 %1198
        %v1200 = vrcp.pop %v1190
        %v1201 = vmul.f32 %v1181, %v1200
        %v1202 = vrcp.pop %v1193
        %v1203 = vmul.f32 %v1183, %v1202
        %v1204 = vrcp.pop %v1196
        %v1205 = vmul.f32 %v1185, %v1204
        %v1206 = vrcp.pop %v1199
        %v1207 = vmul.f32 %v1187, %v1206
        %v1208 = vld [vmem:[%s832] sm:$0xff]
        %v1209 = vld [vmem:[%s832 + $0x8] sm:$0xff]
        %v1210 = vld [vmem:[%s832 + $0x10] sm:$0xff]
        %v1211 = vld [vmem:[%s832 + $0x18] sm:$0xff]
        %v1213 = vsel %vm851, %v1201, 0
        %1215 = vmatprep.subr.mxu0 0.0
        %1216 = vmatpush1.msra.mxu0 %v1208
        %1217 = vmatprep.subr.mxu0 0.0
        %1218 = vmatpush1.msra.mxu0 0.0
        %1219 = vmatprep.subr.mxu0 0.0
        %1220 = vmatpush1.msra.mxu0 0.0
        %1221 = vmatprep.subr.mxu0 0.0
        %1222 = vmatpush1.msra.mxu0 0.0
        %1223 = vmatprep.subr.mxu0 0.0
        %1224 = vmatpush1.msra.mxu0 0.0
        %1225 = vmatprep.subr.mxu0 0.0
        %1226 = vmatpush1.msra.mxu0 0.0
        %1227 = vmatprep.subr.mxu0 0.0
        %1228 = vmatpush1.msra.mxu0 0.0
        %1229 = vmatprep.subr.mxu0 0.0
        %1230 = vmatpush1.msra.mxu0 0.0
        %1231 = vmatprep.subr.mxu0 0.0
        %1232 = vmatpush1.msra.mxu0 0.0
        %1233 = vmatprep.subr.mxu0 0.0
        %1234 = vmatpush1.msra.mxu0 0.0
        %1235 = vmatprep.subr.mxu0 0.0
        %1236 = vmatpush1.msra.mxu0 0.0
        %1237 = vmatprep.subr.mxu0 0.0
        %1238 = vmatpush1.msra.mxu0 0.0
        %1239 = vmatprep.subr.mxu0 0.0
        %1240 = vmatpush1.msra.mxu0 0.0
        %1241 = vmatprep.subr.mxu0 0.0
        %1242 = vmatpush1.msra.mxu0 0.0
        %1243 = vmatprep.subr.mxu0 0.0
        %1244 = vmatpush1.msra.mxu0 0.0
        %1245 = vmatprep.subr.mxu0 0.0
        %1246 = vmatpush1.msra.mxu0 0.0
        %1247 = vmatprep.subr.mxu0 0.0
        %1248 = vmatpush1.msra.mxu0 0.0
        %1249 = vmatprep.subr.mxu0 0.0
        %1250 = vmatpush1.msra.mxu0 0.0
        %1251 = vmatprep.subr.mxu0 0.0
        %1252 = vmatpush1.msra.mxu0 0.0
        %1253 = vmatprep.subr.mxu0 0.0
        %1254 = vmatpush1.msra.mxu0 0.0
        %1255 = vmatprep.subr.mxu0 0.0
        %1256 = vmatpush1.msra.mxu0 0.0
        %1257 = vmatprep.subr.mxu0 0.0
        %1258 = vmatpush1.msra.mxu0 0.0
        %1259 = vmatprep.subr.mxu0 0.0
        %1260 = vmatpush1.msra.mxu0 0.0
        %1261 = vmatprep.subr.mxu0 0.0
        %1262 = vmatpush1.msra.mxu0 0.0
        %1263 = vmatprep.subr.mxu0 0.0
        %1264 = vmatpush1.msra.mxu0 0.0
        %1265 = vmatprep.subr.mxu0 0.0
        %1266 = vmatpush1.msra.mxu0 0.0
        %1267 = vmatprep.subr.mxu0 0.0
        %1268 = vmatpush1.msra.mxu0 0.0
        %1269 = vmatprep.subr.mxu0 0.0
        %1270 = vmatpush1.msra.mxu0 0.0
        %1271 = vmatprep.subr.mxu0 0.0
        %1272 = vmatpush1.msra.mxu0 0.0
        %1273 = vmatprep.subr.mxu0 0.0
        %1274 = vmatpush1.msra.mxu0 0.0
        %1275 = vmatprep.subr.mxu0 0.0
        %1276 = vmatpush1.msra.mxu0 0.0
        %1277 = vmatprep.subr.mxu0 0.0
        %1278 = vmatpush1.msra.mxu0 0.0
        %1279 = vmatprep.mubr.f32.mxu0 0.0
        %1280 = vmatmul.mubr.f32.gmra.mrb[0].mxu0 %v1213
        %v1281 = vpop.f32.mrb[0].mxu0
        %v1282 = vadd.f32 0.0, %v1281
        %v1283 = vpop.f32.mrb[0].mxu0
        %1284 = vdwg.mxu0
        %v1286 = vsel %vm851, %v1203, 0
        %1288 = vmatprep.subr.mxu0 0.0
        %1289 = vmatpush1.msra.mxu0 %v1209
        %1290 = vmatprep.subr.mxu0 0.0
        %1291 = vmatpush1.msra.mxu0 0.0
        %1292 = vmatprep.subr.mxu0 0.0
        %1293 = vmatpush1.msra.mxu0 0.0
        %1294 = vmatprep.subr.mxu0 0.0
        %1295 = vmatpush1.msra.mxu0 0.0
        %1296 = vmatprep.subr.mxu0 0.0
        %1297 = vmatpush1.msra.mxu0 0.0
        %1298 = vmatprep.subr.mxu0 0.0
        %1299 = vmatpush1.msra.mxu0 0.0
        %1300 = vmatprep.subr.mxu0 0.0
        %1301 = vmatpush1.msra.mxu0 0.0
        %1302 = vmatprep.subr.mxu0 0.0
        %1303 = vmatpush1.msra.mxu0 0.0
        %1304 = vmatprep.subr.mxu0 0.0
        %1305 = vmatpush1.msra.mxu0 0.0
        %1306 = vmatprep.subr.mxu0 0.0
        %1307 = vmatpush1.msra.mxu0 0.0
        %1308 = vmatprep.subr.mxu0 0.0
        %1309 = vmatpush1.msra.mxu0 0.0
        %1310 = vmatprep.subr.mxu0 0.0
        %1311 = vmatpush1.msra.mxu0 0.0
        %1312 = vmatprep.subr.mxu0 0.0
        %1313 = vmatpush1.msra.mxu0 0.0
        %1314 = vmatprep.subr.mxu0 0.0
        %1315 = vmatpush1.msra.mxu0 0.0
        %1316 = vmatprep.subr.mxu0 0.0
        %1317 = vmatpush1.msra.mxu0 0.0
        %1318 = vmatprep.subr.mxu0 0.0
        %1319 = vmatpush1.msra.mxu0 0.0
        %1320 = vmatprep.subr.mxu0 0.0
        %1321 = vmatpush1.msra.mxu0 0.0
        %1322 = vmatprep.subr.mxu0 0.0
        %1323 = vmatpush1.msra.mxu0 0.0
        %1324 = vmatprep.subr.mxu0 0.0
        %1325 = vmatpush1.msra.mxu0 0.0
        %1326 = vmatprep.subr.mxu0 0.0
        %1327 = vmatpush1.msra.mxu0 0.0
        %1328 = vmatprep.subr.mxu0 0.0
        %1329 = vmatpush1.msra.mxu0 0.0
        %1330 = vmatprep.subr.mxu0 0.0
        %1331 = vmatpush1.msra.mxu0 0.0
        %1332 = vmatprep.subr.mxu0 0.0
        %1333 = vmatpush1.msra.mxu0 0.0
        %1334 = vmatprep.subr.mxu0 0.0
        %1335 = vmatpush1.msra.mxu0 0.0
        %1336 = vmatprep.subr.mxu0 0.0
        %1337 = vmatpush1.msra.mxu0 0.0
        %1338 = vmatprep.subr.mxu0 0.0
        %1339 = vmatpush1.msra.mxu0 0.0
        %1340 = vmatprep.subr.mxu0 0.0
        %1341 = vmatpush1.msra.mxu0 0.0
        %1342 = vmatprep.subr.mxu0 0.0
        %1343 = vmatpush1.msra.mxu0 0.0
        %1344 = vmatprep.subr.mxu0 0.0
        %1345 = vmatpush1.msra.mxu0 0.0
        %1346 = vmatprep.subr.mxu0 0.0
        %1347 = vmatpush1.msra.mxu0 0.0
        %1348 = vmatprep.subr.mxu0 0.0
        %1349 = vmatpush1.msra.mxu0 0.0
        %1350 = vmatprep.subr.mxu0 0.0
        %1351 = vmatpush1.msra.mxu0 0.0
        %1352 = vmatprep.mubr.f32.mxu0 0.0
        %1353 = vmatmul.mubr.f32.gmra.mrb[0].mxu0 %v1286
        %v1354 = vpop.f32.mrb[0].mxu0
        %v1355 = vadd.f32 0.0, %v1354
        %v1356 = vpop.f32.mrb[0].mxu0
        %1357 = vdwg.mxu0
        %v1359 = vsel %vm851, %v1205, 0
        %1361 = vmatprep.subr.mxu0 0.0
        %1362 = vmatpush1.msra.mxu0 %v1210
        %1363 = vmatprep.subr.mxu0 0.0
        %1364 = vmatpush1.msra.mxu0 0.0
        %1365 = vmatprep.subr.mxu0 0.0
        %1366 = vmatpush1.msra.mxu0 0.0
        %1367 = vmatprep.subr.mxu0 0.0
        %1368 = vmatpush1.msra.mxu0 0.0
        %1369 = vmatprep.subr.mxu0 0.0
        %1370 = vmatpush1.msra.mxu0 0.0
        %1371 = vmatprep.subr.mxu0 0.0
        %1372 = vmatpush1.msra.mxu0 0.0
        %1373 = vmatprep.subr.mxu0 0.0
        %1374 = vmatpush1.msra.mxu0 0.0
        %1375 = vmatprep.subr.mxu0 0.0
        %1376 = vmatpush1.msra.mxu0 0.0
        %1377 = vmatprep.subr.mxu0 0.0
        %1378 = vmatpush1.msra.mxu0 0.0
        %1379 = vmatprep.subr.mxu0 0.0
        %1380 = vmatpush1.msra.mxu0 0.0
        %1381 = vmatprep.subr.mxu0 0.0
        %1382 = vmatpush1.msra.mxu0 0.0
        %1383 = vmatprep.subr.mxu0 0.0
        %1384 = vmatpush1.msra.mxu0 0.0
        %1385 = vmatprep.subr.mxu0 0.0
        %1386 = vmatpush1.msra.mxu0 0.0
        %1387 = vmatprep.subr.mxu0 0.0
        %1388 = vmatpush1.msra.mxu0 0.0
        %1389 = vmatprep.subr.mxu0 0.0
        %1390 = vmatpush1.msra.mxu0 0.0
        %1391 = vmatprep.subr.mxu0 0.0
        %1392 = vmatpush1.msra.mxu0 0.0
        %1393 = vmatprep.subr.mxu0 0.0
        %1394 = vmatpush1.msra.mxu0 0.0
        %1395 = vmatprep.subr.mxu0 0.0
        %1396 = vmatpush1.msra.mxu0 0.0
        %1397 = vmatprep.subr.mxu0 0.0
        %1398 = vmatpush1.msra.mxu0 0.0
        %1399 = vmatprep.subr.mxu0 0.0
        %1400 = vmatpush1.msra.mxu0 0.0
        %1401 = vmatprep.subr.mxu0 0.0
        %1402 = vmatpush1.msra.mxu0 0.0
        %1403 = vmatprep.subr.mxu0 0.0
        %1404 = vmatpush1.msra.mxu0 0.0
        %1405 = vmatprep.subr.mxu0 0.0
        %1406 = vmatpush1.msra.mxu0 0.0
        %1407 = vmatprep.subr.mxu0 0.0
        %1408 = vmatpush1.msra.mxu0 0.0
        %1409 = vmatprep.subr.mxu0 0.0
        %1410 = vmatpush1.msra.mxu0 0.0
        %1411 = vmatprep.subr.mxu0 0.0
        %1412 = vmatpush1.msra.mxu0 0.0
        %1413 = vmatprep.subr.mxu0 0.0
        %1414 = vmatpush1.msra.mxu0 0.0
        %1415 = vmatprep.subr.mxu0 0.0
        %1416 = vmatpush1.msra.mxu0 0.0
        %1417 = vmatprep.subr.mxu0 0.0
        %1418 = vmatpush1.msra.mxu0 0.0
        %1419 = vmatprep.subr.mxu0 0.0
        %1420 = vmatpush1.msra.mxu0 0.0
        %1421 = vmatprep.subr.mxu0 0.0
        %1422 = vmatpush1.msra.mxu0 0.0
        %1423 = vmatprep.subr.mxu0 0.0
        %1424 = vmatpush1.msra.mxu0 0.0
        %1425 = vmatprep.mubr.f32.mxu0 0.0
        %1426 = vmatmul.mubr.f32.gmra.mrb[0].mxu0 %v1359
        %v1427 = vpop.f32.mrb[0].mxu0
        %v1428 = vadd.f32 0.0, %v1427
        %v1429 = vpop.f32.mrb[0].mxu0
        %1430 = vdwg.mxu0
        %v1432 = vsel %vm851, %v1207, 0
        %1434 = vmatprep.subr.mxu0 0.0
        %1435 = vmatpush1.msra.mxu0 %v1211
        %1436 = vmatprep.subr.mxu0 0.0
        %1437 = vmatpush1.msra.mxu0 0.0
        %1438 = vmatprep.subr.mxu0 0.0
        %1439 = vmatpush1.msra.mxu0 0.0
        %1440 = vmatprep.subr.mxu0 0.0
        %1441 = vmatpush1.msra.mxu0 0.0
        %1442 = vmatprep.subr.mxu0 0.0
        %1443 = vmatpush1.msra.mxu0 0.0
        %1444 = vmatprep.subr.mxu0 0.0
        %1445 = vmatpush1.msra.mxu0 0.0
        %1446 = vmatprep.subr.mxu0 0.0
        %1447 = vmatpush1.msra.mxu0 0.0
        %1448 = vmatprep.subr.mxu0 0.0
        %1449 = vmatpush1.msra.mxu0 0.0
        %1450 = vmatprep.subr.mxu0 0.0
        %1451 = vmatpush1.msra.mxu0 0.0
        %1452 = vmatprep.subr.mxu0 0.0
        %1453 = vmatpush1.msra.mxu0 0.0
        %1454 = vmatprep.subr.mxu0 0.0
        %1455 = vmatpush1.msra.mxu0 0.0
        %1456 = vmatprep.subr.mxu0 0.0
        %1457 = vmatpush1.msra.mxu0 0.0
        %1458 = vmatprep.subr.mxu0 0.0
        %1459 = vmatpush1.msra.mxu0 0.0
        %1460 = vmatprep.subr.mxu0 0.0
        %1461 = vmatpush1.msra.mxu0 0.0
        %1462 = vmatprep.subr.mxu0 0.0
        %1463 = vmatpush1.msra.mxu0 0.0
        %1464 = vmatprep.subr.mxu0 0.0
        %1465 = vmatpush1.msra.mxu0 0.0
        %1466 = vmatprep.subr.mxu0 0.0
        %1467 = vmatpush1.msra.mxu0 0.0
        %1468 = vmatprep.subr.mxu0 0.0
        %1469 = vmatpush1.msra.mxu0 0.0
        %1470 = vmatprep.subr.mxu0 0.0
        %1471 = vmatpush1.msra.mxu0 0.0
        %1472 = vmatprep.subr.mxu0 0.0
        %1473 = vmatpush1.msra.mxu0 0.0
        %1474 = vmatprep.subr.mxu0 0.0
        %1475 = vmatpush1.msra.mxu0 0.0
        %1476 = vmatprep.subr.mxu0 0.0
        %1477 = vmatpush1.msra.mxu0 0.0
        %1478 = vmatprep.subr.mxu0 0.0
        %1479 = vmatpush1.msra.mxu0 0.0
        %1480 = vmatprep.subr.mxu0 0.0
        %1481 = vmatpush1.msra.mxu0 0.0
        %1482 = vmatprep.subr.mxu0 0.0
        %1483 = vmatpush1.msra.mxu0 0.0
        %1484 = vmatprep.subr.mxu0 0.0
        %1485 = vmatpush1.msra.mxu0 0.0
        %1486 = vmatprep.subr.mxu0 0.0
        %1487 = vmatpush1.msra.mxu0 0.0
        %1488 = vmatprep.subr.mxu0 0.0
        %1489 = vmatpush1.msra.mxu0 0.0
        %1490 = vmatprep.subr.mxu0 0.0
        %1491 = vmatpush1.msra.mxu0 0.0
        %1492 = vmatprep.subr.mxu0 0.0
        %1493 = vmatpush1.msra.mxu0 0.0
        %1494 = vmatprep.subr.mxu0 0.0
        %1495 = vmatpush1.msra.mxu0 0.0
        %1496 = vmatprep.subr.mxu0 0.0
        %1497 = vmatpush1.msra.mxu0 0.0
        %1498 = vmatprep.mubr.f32.mxu0 0.0
        %1499 = vmatmul.mubr.f32.gmra.mrb[0].mxu0 %v1432
        %v1500 = vpop.f32.mrb[0].mxu0
        %v1501 = vadd.f32 0.0, %v1500
        %v1502 = vpop.f32.mrb[0].mxu0
        %1503 = vdwg.mxu0
        %1505 = vrot.lane.b32.xlu0 %v1355, 8
        %v1506 = vpop.permute.xlu0 %1505
        %1509 = vrot.lane.b32.xlu0 %v1428, 16
        %v1510 = vpop.permute.xlu0 %1509
        %1513 = vrot.lane.b32.xlu0 %v1501, 24
        %v1514 = vpop.permute.xlu0 %1513
        %v1516 = vsel %vm851, %v1282, %v1506
        %vm1517 = vcmask 130048
        %v1518 = vsel %vm1517, %v1516, %v1510
        %vm1519 = vcmask 195584
        %v1520 = vsel %vm1519, %v1518, %v1514
        %v1521 = vld [vmem:[%s8] sm:$0xff]
        %v1522 = vld [vmem:[%s8 + $0x8] sm:$0xff]
        %v1523 = vld [vmem:[%s8 + $0x10] sm:$0xff]
        %v1524 = vld [vmem:[%s8 + $0x18] sm:$0xff]
        %v1525 = vld [vmem:[%s9] sm:$0x1]
        %v1527 = vlaneseq
        %v1528 = vshrl.u32 %v1527, 7
        %v1529 = vsub.s32 0, %v1528
        %v1530 = vrot.slane %v1525, %v1529
        %vm1532 = vcmask 261120
        %v1534 = vsel %vm1532, %v1520, 0
        %1536 = vmatprep.subr.mxu0 0.0
        %1537 = vmatpush1.msra.mxu0 %v1521
        %1538 = vmatprep.subr.mxu0 0.0
        %1539 = vmatpush1.msra.mxu0 %v1522
        %1540 = vmatprep.subr.mxu0 0.0
        %1541 = vmatpush1.msra.mxu0 %v1523
        %1542 = vmatprep.subr.mxu0 0.0
        %1543 = vmatpush1.msra.mxu0 %v1524
        %1544 = vmatprep.subr.mxu0 0.0
        %1545 = vmatpush1.msra.mxu0 0.0
        %1546 = vmatprep.subr.mxu0 0.0
        %1547 = vmatpush1.msra.mxu0 0.0
        %1548 = vmatprep.subr.mxu0 0.0
        %1549 = vmatpush1.msra.mxu0 0.0
        %1550 = vmatprep.subr.mxu0 0.0
        %1551 = vmatpush1.msra.mxu0 0.0
        %1552 = vmatprep.subr.mxu0 0.0
        %1553 = vmatpush1.msra.mxu0 0.0
        %1554 = vmatprep.subr.mxu0 0.0
        %1555 = vmatpush1.msra.mxu0 0.0
        %1556 = vmatprep.subr.mxu0 0.0
        %1557 = vmatpush1.msra.mxu0 0.0
        %1558 = vmatprep.subr.mxu0 0.0
        %1559 = vmatpush1.msra.mxu0 0.0
        %1560 = vmatprep.subr.mxu0 0.0
        %1561 = vmatpush1.msra.mxu0 0.0
        %1562 = vmatprep.subr.mxu0 0.0
        %1563 = vmatpush1.msra.mxu0 0.0
        %1564 = vmatprep.subr.mxu0 0.0
        %1565 = vmatpush1.msra.mxu0 0.0
        %1566 = vmatprep.subr.mxu0 0.0
        %1567 = vmatpush1.msra.mxu0 0.0
        %1568 = vmatprep.subr.mxu0 0.0
        %1569 = vmatpush1.msra.mxu0 0.0
        %1570 = vmatprep.subr.mxu0 0.0
        %1571 = vmatpush1.msra.mxu0 0.0
        %1572 = vmatprep.subr.mxu0 0.0
        %1573 = vmatpush1.msra.mxu0 0.0
        %1574 = vmatprep.subr.mxu0 0.0
        %1575 = vmatpush1.msra.mxu0 0.0
        %1576 = vmatprep.subr.mxu0 0.0
        %1577 = vmatpush1.msra.mxu0 0.0
        %1578 = vmatprep.subr.mxu0 0.0
        %1579 = vmatpush1.msra.mxu0 0.0
        %1580 = vmatprep.subr.mxu0 0.0
        %1581 = vmatpush1.msra.mxu0 0.0
        %1582 = vmatprep.subr.mxu0 0.0
        %1583 = vmatpush1.msra.mxu0 0.0
        %1584 = vmatprep.subr.mxu0 0.0
        %1585 = vmatpush1.msra.mxu0 0.0
        %1586 = vmatprep.subr.mxu0 0.0
        %1587 = vmatpush1.msra.mxu0 0.0
        %1588 = vmatprep.subr.mxu0 0.0
        %1589 = vmatpush1.msra.mxu0 0.0
        %1590 = vmatprep.subr.mxu0 0.0
        %1591 = vmatpush1.msra.mxu0 0.0
        %1592 = vmatprep.subr.mxu0 0.0
        %1593 = vmatpush1.msra.mxu0 0.0
        %1594 = vmatprep.subr.mxu0 0.0
        %1595 = vmatpush1.msra.mxu0 0.0
        %1596 = vmatprep.subr.mxu0 0.0
        %1597 = vmatpush1.msra.mxu0 0.0
        %1598 = vmatprep.subr.mxu0 0.0
        %1599 = vmatpush1.msra.mxu0 0.0
        %1600 = vmatprep.mubr.f32.mxu0 0.0
        %1601 = vmatmul.mubr.f32.gmra.mrb[0].mxu0 %v1534
        %v1602 = vpop.f32.mrb[0].mxu0
        %v1603 = vadd.f32 %v1530, %v1602
        %v1604 = vpop.f32.mrb[0].mxu0
        %1605 = vdwg.mxu0
        %v1606 = vld [vmem:[%s807] sm:$0xff]
        %v1607 = vadd.f32 %v1603, %v1606
        %v1608 = vld [vmem:[%s10] sm:$0x1]
        %v1609 = vld [vmem:[%s11] sm:$0x1]
        %v1610 = vsel %vm1532, %v1607, 0.0
        %1611 = vadd.xlane.f32.xlu0 %v1610
        %v1612 = vpop.xlane.xlu0 %1611
        %v1613 = vrcp.pop 32.0
        %v1614 = vmul.f32 %v1612, %v1613
        %v1615 = vsub.f32 %v1607, %v1614
        %v1616 = vmul.f32 %v1615, %v1615
        %v1617 = vsel %vm1532, %v1616, 0.0
        %1618 = vadd.xlane.f32.xlu0 %v1617
        %v1619 = vpop.xlane.xlu0 %1618
        %v1620 = vmul.f32 %v1619, %v1613
        %v1621 = vadd.f32 %v1620, 1e-05
        %v1622 = vrsqrt.pop %v1621
        %v1623 = vmul.f32 %v1615, %v1622
        %v1625 = vlaneseq
        %v1626 = vshrl.u32 %v1625, 7
        %v1627 = vsub.s32 0, %v1626
        %v1628 = vrot.slane %v1608, %v1627
        %v1630 = vmul.f32 %v1623, %v1628
        %v1632 = vlaneseq
        %v1633 = vshrl.u32 %v1632, 7
        %v1634 = vsub.s32 0, %v1633
        %v1635 = vrot.slane %v1609, %v1634
        %v1637 = vadd.f32 %v1630, %v1635
        %1639 = vrot.lane.b32.xlu0 %v1637, 120
        %v1640 = vpop.permute.xlu0 %1639
        %1641 = vrot.lane.b32.xlu0 %v1637, 112
        %v1642 = vpop.permute.xlu0 %1641
        %1643 = vrot.lane.b32.xlu0 %v1637, 104
        %v1644 = vpop.permute.xlu0 %1643
        %v1645 = vld [vmem:[%s7] sm:$0xff]
        %v1646 = vld [vmem:[%s7 + $0x8] sm:$0xff]
        %v1647 = vld [vmem:[%s7 + $0x10] sm:$0xff]
        %v1648 = vld [vmem:[%s7 + $0x18] sm:$0xff]
        %v1649 = vsel %vm851, %v1637, 0
        %1651 = vmatprep.subr.mxu0 0.0
        %1652 = vmatpush1.msra.mxu0 %v1645
        %1653 = vmatprep.subr.mxu0 0.0
        %1654 = vmatpush1.msra.mxu0 0.0
        %1655 = vmatprep.subr.mxu0 0.0
        %1656 = vmatpush1.msra.mxu0 0.0
        %1657 = vmatprep.subr.mxu0 0.0
        %1658 = vmatpush1.msra.mxu0 0.0
        %1659 = vmatprep.subr.mxu0 0.0
        %1660 = vmatpush1.msra.mxu0 0.0
        %1661 = vmatprep.subr.mxu0 0.0
        %1662 = vmatpush1.msra.mxu0 0.0
        %1663 = vmatprep.subr.mxu0 0.0
        %1664 = vmatpush1.msra.mxu0 0.0
        %1665 = vmatprep.subr.mxu0 0.0
        %1666 = vmatpush1.msra.mxu0 0.0
        %1667 = vmatprep.subr.mxu0 0.0
        %1668 = vmatpush1.msra.mxu0 0.0
        %1669 = vmatprep.subr.mxu0 0.0
        %1670 = vmatpush1.msra.mxu0 0.0
        %1671 = vmatprep.subr.mxu0 0.0
        %1672 = vmatpush1.msra.mxu0 0.0
        %1673 = vmatprep.subr.mxu0 0.0
        %1674 = vmatpush1.msra.mxu0 0.0
        %1675 = vmatprep.subr.mxu0 0.0
        %1676 = vmatpush1.msra.mxu0 0.0
        %1677 = vmatprep.subr.mxu0 0.0
        %1678 = vmatpush1.msra.mxu0 0.0
        %1679 = vmatprep.subr.mxu0 0.0
        %1680 = vmatpush1.msra.mxu0 0.0
        %1681 = vmatprep.subr.mxu0 0.0
        %1682 = vmatpush1.msra.mxu0 0.0
        %1683 = vmatprep.subr.mxu0 0.0
        %1684 = vmatpush1.msra.mxu0 0.0
        %1685 = vmatprep.subr.mxu0 0.0
        %1686 = vmatpush1.msra.mxu0 0.0
        %1687 = vmatprep.subr.mxu0 0.0
        %1688 = vmatpush1.msra.mxu0 0.0
        %1689 = vmatprep.subr.mxu0 0.0
        %1690 = vmatpush1.msra.mxu0 0.0
        %1691 = vmatprep.subr.mxu0 0.0
        %1692 = vmatpush1.msra.mxu0 0.0
        %1693 = vmatprep.subr.mxu0 0.0
        %1694 = vmatpush1.msra.mxu0 0.0
        %1695 = vmatprep.subr.mxu0 0.0
        %1696 = vmatpush1.msra.mxu0 0.0
        %1697 = vmatprep.subr.mxu0 0.0
        %1698 = vmatpush1.msra.mxu0 0.0
        %1699 = vmatprep.subr.mxu0 0.0
        %1700 = vmatpush1.msra.mxu0 0.0
        %1701 = vmatprep.subr.mxu0 0.0
        %1702 = vmatpush1.msra.mxu0 0.0
        %1703 = vmatprep.subr.mxu0 0.0
        %1704 = vmatpush1.msra.mxu0 0.0
        %1705 = vmatprep.subr.mxu0 0.0
        %1706 = vmatpush1.msra.mxu0 0.0
        %1707 = vmatprep.subr.mxu0 0.0
        %1708 = vmatpush1.msra.mxu0 0.0
        %1709 = vmatprep.subr.mxu0 0.0
        %1710 = vmatpush1.msra.mxu0 0.0
        %1711 = vmatprep.subr.mxu0 0.0
        %1712 = vmatpush1.msra.mxu0 0.0
        %1713 = vmatprep.subr.mxu0 0.0
        %1714 = vmatpush1.msra.mxu0 0.0
        %1715 = vmatprep.mubr.f32.mxu0 0.0
        %1716 = vmatmul.mubr.f32.gmra.mrb[0].mxu0 %v1649
        %v1717 = vpop.f32.mrb[0].mxu0
        %v1718 = vadd.f32 0.0, %v1717
        %v1719 = vpop.f32.mrb[0].mxu0
        %1720 = vdwg.mxu0
        %v1721 = vsel %vm851, %v1640, 0
        %1723 = vmatprep.subr.mxu0 0.0
        %1724 = vmatpush1.msra.mxu0 %v1646
        %1725 = vmatprep.subr.mxu0 0.0
        %1726 = vmatpush1.msra.mxu0 0.0
        %1727 = vmatprep.subr.mxu0 0.0
        %1728 = vmatpush1.msra.mxu0 0.0
        %1729 = vmatprep.subr.mxu0 0.0
        %1730 = vmatpush1.msra.mxu0 0.0
        %1731 = vmatprep.subr.mxu0 0.0
        %1732 = vmatpush1.msra.mxu0 0.0
        %1733 = vmatprep.subr.mxu0 0.0
        %1734 = vmatpush1.msra.mxu0 0.0
        %1735 = vmatprep.subr.mxu0 0.0
        %1736 = vmatpush1.msra.mxu0 0.0
        %1737 = vmatprep.subr.mxu0 0.0
        %1738 = vmatpush1.msra.mxu0 0.0
        %1739 = vmatprep.subr.mxu0 0.0
        %1740 = vmatpush1.msra.mxu0 0.0
        %1741 = vmatprep.subr.mxu0 0.0
        %1742 = vmatpush1.msra.mxu0 0.0
        %1743 = vmatprep.subr.mxu0 0.0
        %1744 = vmatpush1.msra.mxu0 0.0
        %1745 = vmatprep.subr.mxu0 0.0
        %1746 = vmatpush1.msra.mxu0 0.0
        %1747 = vmatprep.subr.mxu0 0.0
        %1748 = vmatpush1.msra.mxu0 0.0
        %1749 = vmatprep.subr.mxu0 0.0
        %1750 = vmatpush1.msra.mxu0 0.0
        %1751 = vmatprep.subr.mxu0 0.0
        %1752 = vmatpush1.msra.mxu0 0.0
        %1753 = vmatprep.subr.mxu0 0.0
        %1754 = vmatpush1.msra.mxu0 0.0
        %1755 = vmatprep.subr.mxu0 0.0
        %1756 = vmatpush1.msra.mxu0 0.0
        %1757 = vmatprep.subr.mxu0 0.0
        %1758 = vmatpush1.msra.mxu0 0.0
        %1759 = vmatprep.subr.mxu0 0.0
        %1760 = vmatpush1.msra.mxu0 0.0
        %1761 = vmatprep.subr.mxu0 0.0
        %1762 = vmatpush1.msra.mxu0 0.0
        %1763 = vmatprep.subr.mxu0 0.0
        %1764 = vmatpush1.msra.mxu0 0.0
        %1765 = vmatprep.subr.mxu0 0.0
        %1766 = vmatpush1.msra.mxu0 0.0
        %1767 = vmatprep.subr.mxu0 0.0
        %1768 = vmatpush1.msra.mxu0 0.0
        %1769 = vmatprep.subr.mxu0 0.0
        %1770 = vmatpush1.msra.mxu0 0.0
        %1771 = vmatprep.subr.mxu0 0.0
        %1772 = vmatpush1.msra.mxu0 0.0
        %1773 = vmatprep.subr.mxu0 0.0
        %1774 = vmatpush1.msra.mxu0 0.0
        %1775 = vmatprep.subr.mxu0 0.0
        %1776 = vmatpush1.msra.mxu0 0.0
        %1777 = vmatprep.subr.mxu0 0.0
        %1778 = vmatpush1.msra.mxu0 0.0
        %1779 = vmatprep.subr.mxu0 0.0
        %1780 = vmatpush1.msra.mxu0 0.0
        %1781 = vmatprep.subr.mxu0 0.0
        %1782 = vmatpush1.msra.mxu0 0.0
        %1783 = vmatprep.subr.mxu0 0.0
        %1784 = vmatpush1.msra.mxu0 0.0
        %1785 = vmatprep.subr.mxu0 0.0
        %1786 = vmatpush1.msra.mxu0 0.0
        %1787 = vmatprep.mubr.f32.mxu0 0.0
        %1788 = vmatmul.mubr.f32.gmra.mrb[0].mxu0 %v1721
        %v1789 = vpop.f32.mrb[0].mxu0
        %v1790 = vadd.f32 0.0, %v1789
        %v1791 = vpop.f32.mrb[0].mxu0
        %1792 = vdwg.mxu0
        %v1793 = vsel %vm851, %v1642, 0
        %1795 = vmatprep.subr.mxu0 0.0
        %1796 = vmatpush1.msra.mxu0 %v1647
        %1797 = vmatprep.subr.mxu0 0.0
        %1798 = vmatpush1.msra.mxu0 0.0
        %1799 = vmatprep.subr.mxu0 0.0
        %1800 = vmatpush1.msra.mxu0 0.0
        %1801 = vmatprep.subr.mxu0 0.0
        %1802 = vmatpush1.msra.mxu0 0.0
        %1803 = vmatprep.subr.mxu0 0.0
        %1804 = vmatpush1.msra.mxu0 0.0
        %1805 = vmatprep.subr.mxu0 0.0
        %1806 = vmatpush1.msra.mxu0 0.0
        %1807 = vmatprep.subr.mxu0 0.0
        %1808 = vmatpush1.msra.mxu0 0.0
        %1809 = vmatprep.subr.mxu0 0.0
        %1810 = vmatpush1.msra.mxu0 0.0
        %1811 = vmatprep.subr.mxu0 0.0
        %1812 = vmatpush1.msra.mxu0 0.0
        %1813 = vmatprep.subr.mxu0 0.0
        %1814 = vmatpush1.msra.mxu0 0.0
        %1815 = vmatprep.subr.mxu0 0.0
        %1816 = vmatpush1.msra.mxu0 0.0
        %1817 = vmatprep.subr.mxu0 0.0
        %1818 = vmatpush1.msra.mxu0 0.0
        %1819 = vmatprep.subr.mxu0 0.0
        %1820 = vmatpush1.msra.mxu0 0.0
        %1821 = vmatprep.subr.mxu0 0.0
        %1822 = vmatpush1.msra.mxu0 0.0
        %1823 = vmatprep.subr.mxu0 0.0
        %1824 = vmatpush1.msra.mxu0 0.0
        %1825 = vmatprep.subr.mxu0 0.0
        %1826 = vmatpush1.msra.mxu0 0.0
        %1827 = vmatprep.subr.mxu0 0.0
        %1828 = vmatpush1.msra.mxu0 0.0
        %1829 = vmatprep.subr.mxu0 0.0
        %1830 = vmatpush1.msra.mxu0 0.0
        %1831 = vmatprep.subr.mxu0 0.0
        %1832 = vmatpush1.msra.mxu0 0.0
        %1833 = vmatprep.subr.mxu0 0.0
        %1834 = vmatpush1.msra.mxu0 0.0
        %1835 = vmatprep.subr.mxu0 0.0
        %1836 = vmatpush1.msra.mxu0 0.0
        %1837 = vmatprep.subr.mxu0 0.0
        %1838 = vmatpush1.msra.mxu0 0.0
        %1839 = vmatprep.subr.mxu0 0.0
        %1840 = vmatpush1.msra.mxu0 0.0
        %1841 = vmatprep.subr.mxu0 0.0
        %1842 = vmatpush1.msra.mxu0 0.0
        %1843 = vmatprep.subr.mxu0 0.0
        %1844 = vmatpush1.msra.mxu0 0.0
        %1845 = vmatprep.subr.mxu0 0.0
        %1846 = vmatpush1.msra.mxu0 0.0
        %1847 = vmatprep.subr.mxu0 0.0
        %1848 = vmatpush1.msra.mxu0 0.0
        %1849 = vmatprep.subr.mxu0 0.0
        %1850 = vmatpush1.msra.mxu0 0.0
        %1851 = vmatprep.subr.mxu0 0.0
        %1852 = vmatpush1.msra.mxu0 0.0
        %1853 = vmatprep.subr.mxu0 0.0
        %1854 = vmatpush1.msra.mxu0 0.0
        %1855 = vmatprep.subr.mxu0 0.0
        %1856 = vmatpush1.msra.mxu0 0.0
        %1857 = vmatprep.subr.mxu0 0.0
        %1858 = vmatpush1.msra.mxu0 0.0
        %1859 = vmatprep.mubr.f32.mxu0 0.0
        %1860 = vmatmul.mubr.f32.gmra.mrb[0].mxu0 %v1793
        %v1861 = vpop.f32.mrb[0].mxu0
        %v1862 = vadd.f32 0.0, %v1861
        %v1863 = vpop.f32.mrb[0].mxu0
        %1864 = vdwg.mxu0
        %v1865 = vsel %vm851, %v1644, 0
        %1867 = vmatprep.subr.mxu0 0.0
        %1868 = vmatpush1.msra.mxu0 %v1648
        %1869 = vmatprep.subr.mxu0 0.0
        %1870 = vmatpush1.msra.mxu0 0.0
        %1871 = vmatprep.subr.mxu0 0.0
        %1872 = vmatpush1.msra.mxu0 0.0
        %1873 = vmatprep.subr.mxu0 0.0
        %1874 = vmatpush1.msra.mxu0 0.0
        %1875 = vmatprep.subr.mxu0 0.0
        %1876 = vmatpush1.msra.mxu0 0.0
        %1877 = vmatprep.subr.mxu0 0.0
        %1878 = vmatpush1.msra.mxu0 0.0
        %1879 = vmatprep.subr.mxu0 0.0
        %1880 = vmatpush1.msra.mxu0 0.0
        %1881 = vmatprep.subr.mxu0 0.0
        %1882 = vmatpush1.msra.mxu0 0.0
        %1883 = vmatprep.subr.mxu0 0.0
        %1884 = vmatpush1.msra.mxu0 0.0
        %1885 = vmatprep.subr.mxu0 0.0
        %1886 = vmatpush1.msra.mxu0 0.0
        %1887 = vmatprep.subr.mxu0 0.0
        %1888 = vmatpush1.msra.mxu0 0.0
        %1889 = vmatprep.subr.mxu0 0.0
        %1890 = vmatpush1.msra.mxu0 0.0
        %1891 = vmatprep.subr.mxu0 0.0
        %1892 = vmatpush1.msra.mxu0 0.0
        %1893 = vmatprep.subr.mxu0 0.0
        %1894 = vmatpush1.msra.mxu0 0.0
        %1895 = vmatprep.subr.mxu0 0.0
        %1896 = vmatpush1.msra.mxu0 0.0
        %1897 = vmatprep.subr.mxu0 0.0
        %1898 = vmatpush1.msra.mxu0 0.0
        %1899 = vmatprep.subr.mxu0 0.0
        %1900 = vmatpush1.msra.mxu0 0.0
        %1901 = vmatprep.subr.mxu0 0.0
        %1902 = vmatpush1.msra.mxu0 0.0
        %1903 = vmatprep.subr.mxu0 0.0
        %1904 = vmatpush1.msra.mxu0 0.0
        %1905 = vmatprep.subr.mxu0 0.0
        %1906 = vmatpush1.msra.mxu0 0.0
        %1907 = vmatprep.subr.mxu0 0.0
        %1908 = vmatpush1.msra.mxu0 0.0
        %1909 = vmatprep.subr.mxu0 0.0
        %1910 = vmatpush1.msra.mxu0 0.0
        %1911 = vmatprep.subr.mxu0 0.0
        %1912 = vmatpush1.msra.mxu0 0.0
        %1913 = vmatprep.subr.mxu0 0.0
        %1914 = vmatpush1.msra.mxu0 0.0
        %1915 = vmatprep.subr.mxu0 0.0
        %1916 = vmatpush1.msra.mxu0 0.0
        %1917 = vmatprep.subr.mxu0 0.0
        %1918 = vmatpush1.msra.mxu0 0.0
        %1919 = vmatprep.subr.mxu0 0.0
        %1920 = vmatpush1.msra.mxu0 0.0
        %1921 = vmatprep.subr.mxu0 0.0
        %1922 = vmatpush1.msra.mxu0 0.0
        %1923 = vmatprep.subr.mxu0 0.0
        %1924 = vmatpush1.msra.mxu0 0.0
        %1925 = vmatprep.subr.mxu0 0.0
        %1926 = vmatpush1.msra.mxu0 0.0
        %1927 = vmatprep.subr.mxu0 0.0
        %1928 = vmatpush1.msra.mxu0 0.0
        %1929 = vmatprep.subr.mxu0 0.0
        %1930 = vmatpush1.msra.mxu0 0.0
        %1931 = vmatprep.mubr.f32.mxu0 0.0
        %1932 = vmatmul.mubr.f32.gmra.mrb[0].mxu0 %v1865
        %v1933 = vpop.f32.mrb[0].mxu0
        %v1934 = vadd.f32 0.0, %v1933
        %v1935 = vpop.f32.mrb[0].mxu0
        %1936 = vdwg.mxu0
        %v1937 = vld [vmem:[%s837] sm:$0xff]
        %v1938 = vld [vmem:[%s837 + $0x8] sm:$0xff]
        %v1939 = vld [vmem:[%s837 + $0x10] sm:$0xff]
        %v1940 = vld [vmem:[%s837 + $0x18] sm:$0xff]
        %v1941 = vld [vmem:[%s837 + $0x20] sm:$0xff]
        %v1942 = vld [vmem:[%s837 + $0x28] sm:$0xff]
        %v1943 = vld [vmem:[%s837 + $0x30] sm:$0xff]
        %v1944 = vld [vmem:[%s837 + $0x38] sm:$0xff]
        %v1946 = vsel %vm851, %v1718, 0
        %v1949 = vsel %vm851, %v1937, 0
        %v1952 = vsel %vm851, %v1938, 0
        %1954 = vmatprep.subr.mxu0 0.0
        %1955 = vmatpush1.xpose.msra.mxu0 %v1949
        %1956 = vmatprep.subr.mxu0 0.0
        %1957 = vmatpush1.xpose.msra.mxu0 %v1952
        %1958 = vmatprep.subr.mxu0 0.0
        %1959 = vmatpush1.xpose.msra.mxu0 0.0
        %1960 = vmatprep.subr.mxu0 0.0
        %1961 = vmatpush1.xpose.msra.mxu0 0.0
        %1962 = vmatprep.subr.mxu0 0.0
        %1963 = vmatpush1.xpose.msra.mxu0 0.0
        %1964 = vmatprep.subr.mxu0 0.0
        %1965 = vmatpush1.xpose.msra.mxu0 0.0
        %1966 = vmatprep.subr.mxu0 0.0
        %1967 = vmatpush1.xpose.msra.mxu0 0.0
        %1968 = vmatprep.subr.mxu0 0.0
        %1969 = vmatpush1.xpose.msra.mxu0 0.0
        %1970 = vmatprep.subr.mxu0 0.0
        %1971 = vmatpush1.xpose.msra.mxu0 0.0
        %1972 = vmatprep.subr.mxu0 0.0
        %1973 = vmatpush1.xpose.msra.mxu0 0.0
        %1974 = vmatprep.subr.mxu0 0.0
        %1975 = vmatpush1.xpose.msra.mxu0 0.0
        %1976 = vmatprep.subr.mxu0 0.0
        %1977 = vmatpush1.xpose.msra.mxu0 0.0
        %1978 = vmatprep.subr.mxu0 0.0
        %1979 = vmatpush1.xpose.msra.mxu0 0.0
        %1980 = vmatprep.subr.mxu0 0.0
        %1981 = vmatpush1.xpose.msra.mxu0 0.0
        %1982 = vmatprep.subr.mxu0 0.0
        %1983 = vmatpush1.xpose.msra.mxu0 0.0
        %1984 = vmatprep.subr.mxu0 0.0
        %1985 = vmatpush1.xpose.msra.mxu0 0.0
        %1986 = vmatprep.subr.mxu0 0.0
        %1987 = vmatpush1.xpose.msra.mxu0 0.0
        %1988 = vmatprep.subr.mxu0 0.0
        %1989 = vmatpush1.xpose.msra.mxu0 0.0
        %1990 = vmatprep.subr.mxu0 0.0
        %1991 = vmatpush1.xpose.msra.mxu0 0.0
        %1992 = vmatprep.subr.mxu0 0.0
        %1993 = vmatpush1.xpose.msra.mxu0 0.0
        %1994 = vmatprep.subr.mxu0 0.0
        %1995 = vmatpush1.xpose.msra.mxu0 0.0
        %1996 = vmatprep.subr.mxu0 0.0
        %1997 = vmatpush1.xpose.msra.mxu0 0.0
        %1998 = vmatprep.subr.mxu0 0.0
        %1999 = vmatpush1.xpose.msra.mxu0 0.0
        %2000 = vmatprep.subr.mxu0 0.0
        %2001 = vmatpush1.xpose.msra.mxu0 0.0
        %2002 = vmatprep.subr.mxu0 0.0
        %2003 = vmatpush1.xpose.msra.mxu0 0.0
        %2004 = vmatprep.subr.mxu0 0.0
        %2005 = vmatpush1.xpose.msra.mxu0 0.0
        %2006 = vmatprep.subr.mxu0 0.0
        %2007 = vmatpush1.xpose.msra.mxu0 0.0
        %2008 = vmatprep.subr.mxu0 0.0
        %2009 = vmatpush1.xpose.msra.mxu0 0.0
        %2010 = vmatprep.subr.mxu0 0.0
        %2011 = vmatpush1.xpose.msra.mxu0 0.0
        %2012 = vmatprep.subr.mxu0 0.0
        %2013 = vmatpush1.xpose.msra.mxu0 0.0
        %2014 = vmatprep.subr.mxu0 0.0
        %2015 = vmatpush1.xpose.msra.mxu0 0.0
        %2016 = vmatprep.subr.mxu0 0.0
        %2017 = vmatpush1.xpose.msra.mxu0 0.0
        %2018 = vmatprep.mubr.f32.mxu0 0.0
        %2019 = vmatmul.mubr.f32.gmra.mrb[0].mxu0 %v1946
        %v2020 = vpop.f32.mrb[0].mxu0
        %v2021 = vadd.f32 0.0, %v2020
        %v2022 = vpop.f32.mrb[0].mxu0
        %2023 = vdwg.mxu0
        %v2025 = vsel %vm851, %v1790, 0
        %v2028 = vsel %vm851, %v1939, 0
        %v2031 = vsel %vm851, %v1940, 0
        %2033 = vmatprep.subr.mxu0 0.0
        %2034 = vmatpush1.xpose.msra.mxu0 %v2028
        %2035 = vmatprep.subr.mxu0 0.0
        %2036 = vmatpush1.xpose.msra.mxu0 %v2031
        %2037 = vmatprep.subr.mxu0 0.0
        %2038 = vmatpush1.xpose.msra.mxu0 0.0
        %2039 = vmatprep.subr.mxu0 0.0
        %2040 = vmatpush1.xpose.msra.mxu0 0.0
        %2041 = vmatprep.subr.mxu0 0.0
        %2042 = vmatpush1.xpose.msra.mxu0 0.0
        %2043 = vmatprep.subr.mxu0 0.0
        %2044 = vmatpush1.xpose.msra.mxu0 0.0
        %2045 = vmatprep.subr.mxu0 0.0
        %2046 = vmatpush1.xpose.msra.mxu0 0.0
        %2047 = vmatprep.subr.mxu0 0.0
        %2048 = vmatpush1.xpose.msra.mxu0 0.0
        %2049 = vmatprep.subr.mxu0 0.0
        %2050 = vmatpush1.xpose.msra.mxu0 0.0
        %2051 = vmatprep.subr.mxu0 0.0
        %2052 = vmatpush1.xpose.msra.mxu0 0.0
        %2053 = vmatprep.subr.mxu0 0.0
        %2054 = vmatpush1.xpose.msra.mxu0 0.0
        %2055 = vmatprep.subr.mxu0 0.0
        %2056 = vmatpush1.xpose.msra.mxu0 0.0
        %2057 = vmatprep.subr.mxu0 0.0
        %2058 = vmatpush1.xpose.msra.mxu0 0.0
        %2059 = vmatprep.subr.mxu0 0.0
        %2060 = vmatpush1.xpose.msra.mxu0 0.0
        %2061 = vmatprep.subr.mxu0 0.0
        %2062 = vmatpush1.xpose.msra.mxu0 0.0
        %2063 = vmatprep.subr.mxu0 0.0
        %2064 = vmatpush1.xpose.msra.mxu0 0.0
        %2065 = vmatprep.subr.mxu0 0.0
        %2066 = vmatpush1.xpose.msra.mxu0 0.0
        %2067 = vmatprep.subr.mxu0 0.0
        %2068 = vmatpush1.xpose.msra.mxu0 0.0
        %2069 = vmatprep.subr.mxu0 0.0
        %2070 = vmatpush1.xpose.msra.mxu0 0.0
        %2071 = vmatprep.subr.mxu0 0.0
        %2072 = vmatpush1.xpose.msra.mxu0 0.0
        %2073 = vmatprep.subr.mxu0 0.0
        %2074 = vmatpush1.xpose.msra.mxu0 0.0
        %2075 = vmatprep.subr.mxu0 0.0
        %2076 = vmatpush1.xpose.msra.mxu0 0.0
        %2077 = vmatprep.subr.mxu0 0.0
        %2078 = vmatpush1.xpose.msra.mxu0 0.0
        %2079 = vmatprep.subr.mxu0 0.0
        %2080 = vmatpush1.xpose.msra.mxu0 0.0
        %2081 = vmatprep.subr.mxu0 0.0
        %2082 = vmatpush1.xpose.msra.mxu0 0.0
        %2083 = vmatprep.subr.mxu0 0.0
        %2084 = vmatpush1.xpose.msra.mxu0 0.0
        %2085 = vmatprep.subr.mxu0 0.0
        %2086 = vmatpush1.xpose.msra.mxu0 0.0
        %2087 = vmatprep.subr.mxu0 0.0
        %2088 = vmatpush1.xpose.msra.mxu0 0.0
        %2089 = vmatprep.subr.mxu0 0.0
        %2090 = vmatpush1.xpose.msra.mxu0 0.0
        %2091 = vmatprep.subr.mxu0 0.0
        %2092 = vmatpush1.xpose.msra.mxu0 0.0
        %2093 = vmatprep.subr.mxu0 0.0
        %2094 = vmatpush1.xpose.msra.mxu0 0.0
        %2095 = vmatprep.subr.mxu0 0.0
        %2096 = vmatpush1.xpose.msra.mxu0 0.0
        %2097 = vmatprep.mubr.f32.mxu0 0.0
        %2098 = vmatmul.mubr.f32.gmra.mrb[0].mxu0 %v2025
        %v2099 = vpop.f32.mrb[0].mxu0
        %v2100 = vadd.f32 0.0, %v2099
        %v2101 = vpop.f32.mrb[0].mxu0
        %2102 = vdwg.mxu0
        %v2104 = vsel %vm851, %v1862, 0
        %v2107 = vsel %vm851, %v1941, 0
        %v2110 = vsel %vm851, %v1942, 0
        %2112 = vmatprep.subr.mxu0 0.0
        %2113 = vmatpush1.xpose.msra.mxu0 %v2107
        %2114 = vmatprep.subr.mxu0 0.0
        %2115 = vmatpush1.xpose.msra.mxu0 %v2110
        %2116 = vmatprep.subr.mxu0 0.0
        %2117 = vmatpush1.xpose.msra.mxu0 0.0
        %2118 = vmatprep.subr.mxu0 0.0
        %2119 = vmatpush1.xpose.msra.mxu0 0.0
        %2120 = vmatprep.subr.mxu0 0.0
        %2121 = vmatpush1.xpose.msra.mxu0 0.0
        %2122 = vmatprep.subr.mxu0 0.0
        %2123 = vmatpush1.xpose.msra.mxu0 0.0
        %2124 = vmatprep.subr.mxu0 0.0
        %2125 = vmatpush1.xpose.msra.mxu0 0.0
        %2126 = vmatprep.subr.mxu0 0.0
        %2127 = vmatpush1.xpose.msra.mxu0 0.0
        %2128 = vmatprep.subr.mxu0 0.0
        %2129 = vmatpush1.xpose.msra.mxu0 0.0
        %2130 = vmatprep.subr.mxu0 0.0
        %2131 = vmatpush1.xpose.msra.mxu0 0.0
        %2132 = vmatprep.subr.mxu0 0.0
        %2133 = vmatpush1.xpose.msra.mxu0 0.0
        %2134 = vmatprep.subr.mxu0 0.0
        %2135 = vmatpush1.xpose.msra.mxu0 0.0
        %2136 = vmatprep.subr.mxu0 0.0
        %2137 = vmatpush1.xpose.msra.mxu0 0.0
        %2138 = vmatprep.subr.mxu0 0.0
        %2139 = vmatpush1.xpose.msra.mxu0 0.0
        %2140 = vmatprep.subr.mxu0 0.0
        %2141 = vmatpush1.xpose.msra.mxu0 0.0
        %2142 = vmatprep.subr.mxu0 0.0
        %2143 = vmatpush1.xpose.msra.mxu0 0.0
        %2144 = vmatprep.subr.mxu0 0.0
        %2145 = vmatpush1.xpose.msra.mxu0 0.0
        %2146 = vmatprep.subr.mxu0 0.0
        %2147 = vmatpush1.xpose.msra.mxu0 0.0
        %2148 = vmatprep.subr.mxu0 0.0
        %2149 = vmatpush1.xpose.msra.mxu0 0.0
        %2150 = vmatprep.subr.mxu0 0.0
        %2151 = vmatpush1.xpose.msra.mxu0 0.0
        %2152 = vmatprep.subr.mxu0 0.0
        %2153 = vmatpush1.xpose.msra.mxu0 0.0
        %2154 = vmatprep.subr.mxu0 0.0
        %2155 = vmatpush1.xpose.msra.mxu0 0.0
        %2156 = vmatprep.subr.mxu0 0.0
        %2157 = vmatpush1.xpose.msra.mxu0 0.0
        %2158 = vmatprep.subr.mxu0 0.0
        %2159 = vmatpush1.xpose.msra.mxu0 0.0
        %2160 = vmatprep.subr.mxu0 0.0
        %2161 = vmatpush1.xpose.msra.mxu0 0.0
        %2162 = vmatprep.subr.mxu0 0.0
        %2163 = vmatpush1.xpose.msra.mxu0 0.0
        %2164 = vmatprep.subr.mxu0 0.0
        %2165 = vmatpush1.xpose.msra.mxu0 0.0
        %2166 = vmatprep.subr.mxu0 0.0
        %2167 = vmatpush1.xpose.msra.mxu0 0.0
        %2168 = vmatprep.subr.mxu0 0.0
        %2169 = vmatpush1.xpose.msra.mxu0 0.0
        %2170 = vmatprep.subr.mxu0 0.0
        %2171 = vmatpush1.xpose.msra.mxu0 0.0
        %2172 = vmatprep.subr.mxu0 0.0
        %2173 = vmatpush1.xpose.msra.mxu0 0.0
        %2174 = vmatprep.subr.mxu0 0.0
        %2175 = vmatpush1.xpose.msra.mxu0 0.0
        %2176 = vmatprep.mubr.f32.mxu0 0.0
        %2177 = vmatmul.mubr.f32.gmra.mrb[0].mxu0 %v2104
        %v2178 = vpop.f32.mrb[0].mxu0
        %v2179 = vadd.f32 0.0, %v2178
        %v2180 = vpop.f32.mrb[0].mxu0
        %2181 = vdwg.mxu0
        %v2183 = vsel %vm851, %v1934, 0
        %v2186 = vsel %vm851, %v1943, 0
        %v2189 = vsel %vm851, %v1944, 0
        %2191 = vmatprep.subr.mxu0 0.0
        %2192 = vmatpush1.xpose.msra.mxu0 %v2186
        %2193 = vmatprep.subr.mxu0 0.0
        %2194 = vmatpush1.xpose.msra.mxu0 %v2189
        %2195 = vmatprep.subr.mxu0 0.0
        %2196 = vmatpush1.xpose.msra.mxu0 0.0
        %2197 = vmatprep.subr.mxu0 0.0
        %2198 = vmatpush1.xpose.msra.mxu0 0.0
        %2199 = vmatprep.subr.mxu0 0.0
        %2200 = vmatpush1.xpose.msra.mxu0 0.0
        %2201 = vmatprep.subr.mxu0 0.0
        %2202 = vmatpush1.xpose.msra.mxu0 0.0
        %2203 = vmatprep.subr.mxu0 0.0
        %2204 = vmatpush1.xpose.msra.mxu0 0.0
        %2205 = vmatprep.subr.mxu0 0.0
        %2206 = vmatpush1.xpose.msra.mxu0 0.0
        %2207 = vmatprep.subr.mxu0 0.0
        %2208 = vmatpush1.xpose.msra.mxu0 0.0
        %2209 = vmatprep.subr.mxu0 0.0
        %2210 = vmatpush1.xpose.msra.mxu0 0.0
        %2211 = vmatprep.subr.mxu0 0.0
        %2212 = vmatpush1.xpose.msra.mxu0 0.0
        %2213 = vmatprep.subr.mxu0 0.0
        %2214 = vmatpush1.xpose.msra.mxu0 0.0
        %2215 = vmatprep.subr.mxu0 0.0
        %2216 = vmatpush1.xpose.msra.mxu0 0.0
        %2217 = vmatprep.subr.mxu0 0.0
        %2218 = vmatpush1.xpose.msra.mxu0 0.0
        %2219 = vmatprep.subr.mxu0 0.0
        %2220 = vmatpush1.xpose.msra.mxu0 0.0
        %2221 = vmatprep.subr.mxu0 0.0
        %2222 = vmatpush1.xpose.msra.mxu0 0.0
        %2223 = vmatprep.subr.mxu0 0.0
        %2224 = vmatpush1.xpose.msra.mxu0 0.0
        %2225 = vmatprep.subr.mxu0 0.0
        %2226 = vmatpush1.xpose.msra.mxu0 0.0
        %2227 = vmatprep.subr.mxu0 0.0
        %2228 = vmatpush1.xpose.msra.mxu0 0.0
        %2229 = vmatprep.subr.mxu0 0.0
        %2230 = vmatpush1.xpose.msra.mxu0 0.0
        %2231 = vmatprep.subr.mxu0 0.0
        %2232 = vmatpush1.xpose.msra.mxu0 0.0
        %2233 = vmatprep.subr.mxu0 0.0
        %2234 = vmatpush1.xpose.msra.mxu0 0.0
        %2235 = vmatprep.subr.mxu0 0.0
        %2236 = vmatpush1.xpose.msra.mxu0 0.0
        %2237 = vmatprep.subr.mxu0 0.0
        %2238 = vmatpush1.xpose.msra.mxu0 0.0
        %2239 = vmatprep.subr.mxu0 0.0
        %2240 = vmatpush1.xpose.msra.mxu0 0.0
        %2241 = vmatprep.subr.mxu0 0.0
        %2242 = vmatpush1.xpose.msra.mxu0 0.0
        %2243 = vmatprep.subr.mxu0 0.0
        %2244 = vmatpush1.xpose.msra.mxu0 0.0
        %2245 = vmatprep.subr.mxu0 0.0
        %2246 = vmatpush1.xpose.msra.mxu0 0.0
        %2247 = vmatprep.subr.mxu0 0.0
        %2248 = vmatpush1.xpose.msra.mxu0 0.0
        %2249 = vmatprep.subr.mxu0 0.0
        %2250 = vmatpush1.xpose.msra.mxu0 0.0
        %2251 = vmatprep.subr.mxu0 0.0
        %2252 = vmatpush1.xpose.msra.mxu0 0.0
        %2253 = vmatprep.subr.mxu0 0.0
        %2254 = vmatpush1.xpose.msra.mxu0 0.0
        %2255 = vmatprep.mubr.f32.mxu0 0.0
        %2256 = vmatmul.mubr.f32.gmra.mrb[0].mxu0 %v2183
        %v2257 = vpop.f32.mrb[0].mxu0
        %v2258 = vadd.f32 0.0, %v2257
        %v2259 = vpop.f32.mrb[0].mxu0
        %2260 = vdwg.mxu0
        %v2261 = vsel %vm1517, %v2021, -inf
        %2262 = vmax.xlane.f32.xlu0 %v2261
        %v2263 = vpop.xlane.xlu0 %2262
        %v2264 = vsel %vm1517, %v2100, -inf
        %2265 = vmax.xlane.f32.xlu0 %v2264
        %v2266 = vpop.xlane.xlu0 %2265
        %v2267 = vsel %vm1517, %v2179, -inf
        %2268 = vmax.xlane.f32.xlu0 %v2267
        %v2269 = vpop.xlane.xlu0 %2268
        %v2270 = vsel %vm1517, %v2258, -inf
        %2271 = vmax.xlane.f32.xlu0 %v2270
        %v2272 = vpop.xlane.xlu0 %2271
        %v2273 = vsub.f32 %v2021, %v2263
        %v2274 = vsub.f32 %v2100, %v2266
        %v2275 = vsub.f32 %v2179, %v2269
        %v2276 = vsub.f32 %v2258, %v2272
        %v2277 = vmul.f32 %v2273, 1.442695
        %v2278 = vpow.pop %v2277
        %v2279 = vmul.f32 %v2274, 1.442695
        %v2280 = vpow.pop %v2279
        %v2281 = vmul.f32 %v2275, 1.442695
        %v2282 = vpow.pop %v2281
        %v2283 = vmul.f32 %v2276, 1.442695
        %v2284 = vpow.pop %v2283
        %v2285 = vsel %vm1517, %v2278, 0.0
        %2286 = vadd.xlane.f32.xlu0 %v2285
        %v2287 = vpop.xlane.xlu0 %2286
        %v2288 = vsel %vm1517, %v2280, 0.0
        %2289 = vadd.xlane.f32.xlu0 %v2288
        %v2290 = vpop.xlane.xlu0 %2289
        %v2291 = vsel %vm1517, %v2282, 0.0
        %2292 = vadd.xlane.f32.xlu0 %v2291
        %v2293 = vpop.xlane.xlu0 %2292
        %v2294 = vsel %vm1517, %v2284, 0.0
        %2295 = vadd.xlane.f32.xlu0 %v2294
        %v2296 = vpop.xlane.xlu0 %2295
        %v2297 = vrcp.pop %v2287
        %v2298 = vmul.f32 %v2278, %v2297
        %v2299 = vrcp.pop %v2290
        %v2300 = vmul.f32 %v2280, %v2299
        %v2301 = vrcp.pop %v2293
        %v2302 = vmul.f32 %v2282, %v2301
        %v2303 = vrcp.pop %v2296
        %v2304 = vmul.f32 %v2284, %v2303
        %v2305 = vld [vmem:[%s842] sm:$0xff]
        %v2306 = vld [vmem:[%s842 + $0x8] sm:$0xff]
        %v2307 = vld [vmem:[%s842 + $0x10] sm:$0xff]
        %v2308 = vld [vmem:[%s842 + $0x18] sm:$0xff]
        %v2309 = vld [vmem:[%s842 + $0x20] sm:$0xff]
        %v2310 = vld [vmem:[%s842 + $0x28] sm:$0xff]
        %v2311 = vld [vmem:[%s842 + $0x30] sm:$0xff]
        %v2312 = vld [vmem:[%s842 + $0x38] sm:$0xff]
        %v2314 = vsel %vm1517, %v2298, 0
        %2316 = vmatprep.subr.mxu0 0.0
        %2317 = vmatpush1.msra.mxu0 %v2305
        %2318 = vmatprep.subr.mxu0 0.0
        %2319 = vmatpush1.msra.mxu0 %v2306
        %2320 = vmatprep.subr.mxu0 0.0
        %2321 = vmatpush1.msra.mxu0 0.0
        %2322 = vmatprep.subr.mxu0 0.0
        %2323 = vmatpush1.msra.mxu0 0.0
        %2324 = vmatprep.subr.mxu0 0.0
        %2325 = vmatpush1.msra.mxu0 0.0
        %2326 = vmatprep.subr.mxu0 0.0
        %2327 = vmatpush1.msra.mxu0 0.0
        %2328 = vmatprep.subr.mxu0 0.0
        %2329 = vmatpush1.msra.mxu0 0.0
        %2330 = vmatprep.subr.mxu0 0.0
        %2331 = vmatpush1.msra.mxu0 0.0
        %2332 = vmatprep.subr.mxu0 0.0
        %2333 = vmatpush1.msra.mxu0 0.0
        %2334 = vmatprep.subr.mxu0 0.0
        %2335 = vmatpush1.msra.mxu0 0.0
        %2336 = vmatprep.subr.mxu0 0.0
        %2337 = vmatpush1.msra.mxu0 0.0
        %2338 = vmatprep.subr.mxu0 0.0
        %2339 = vmatpush1.msra.mxu0 0.0
        %2340 = vmatprep.subr.mxu0 0.0
        %2341 = vmatpush1.msra.mxu0 0.0
        %2342 = vmatprep.subr.mxu0 0.0
        %2343 = vmatpush1.msra.mxu0 0.0
        %2344 = vmatprep.subr.mxu0 0.0
        %2345 = vmatpush1.msra.mxu0 0.0
        %2346 = vmatprep.subr.mxu0 0.0
        %2347 = vmatpush1.msra.mxu0 0.0
        %2348 = vmatprep.subr.mxu0 0.0
        %2349 = vmatpush1.msra.mxu0 0.0
        %2350 = vmatprep.subr.mxu0 0.0
        %2351 = vmatpush1.msra.mxu0 0.0
        %2352 = vmatprep.subr.mxu0 0.0
        %2353 = vmatpush1.msra.mxu0 0.0
        %2354 = vmatprep.subr.mxu0 0.0
        %2355 = vmatpush1.msra.mxu0 0.0
        %2356 = vmatprep.subr.mxu0 0.0
        %2357 = vmatpush1.msra.mxu0 0.0
        %2358 = vmatprep.subr.mxu0 0.0
        %2359 = vmatpush1.msra.mxu0 0.0
        %2360 = vmatprep.subr.mxu0 0.0
        %2361 = vmatpush1.msra.mxu0 0.0
        %2362 = vmatprep.subr.mxu0 0.0
        %2363 = vmatpush1.msra.mxu0 0.0
        %2364 = vmatprep.subr.mxu0 0.0
        %2365 = vmatpush1.msra.mxu0 0.0
        %2366 = vmatprep.subr.mxu0 0.0
        %2367 = vmatpush1.msra.mxu0 0.0
        %2368 = vmatprep.subr.mxu0 0.0
        %2369 = vmatpush1.msra.mxu0 0.0
        %2370 = vmatprep.subr.mxu0 0.0
        %2371 = vmatpush1.msra.mxu0 0.0
        %2372 = vmatprep.subr.mxu0 0.0
        %2373 = vmatpush1.msra.mxu0 0.0
        %2374 = vmatprep.subr.mxu0 0.0
        %2375 = vmatpush1.msra.mxu0 0.0
        %2376 = vmatprep.subr.mxu0 0.0
        %2377 = vmatpush1.msra.mxu0 0.0
        %2378 = vmatprep.subr.mxu0 0.0
        %2379 = vmatpush1.msra.mxu0 0.0
        %2380 = vmatprep.mubr.f32.mxu0 0.0
        %2381 = vmatmul.mubr.f32.gmra.mrb[0].mxu0 %v2314
        %v2382 = vpop.f32.mrb[0].mxu0
        %v2383 = vadd.f32 0.0, %v2382
        %v2384 = vpop.f32.mrb[0].mxu0
        %2385 = vdwg.mxu0
        %v2387 = vsel %vm1517, %v2300, 0
        %2389 = vmatprep.subr.mxu0 0.0
        %2390 = vmatpush1.msra.mxu0 %v2307
        %2391 = vmatprep.subr.mxu0 0.0
        %2392 = vmatpush1.msra.mxu0 %v2308
        %2393 = vmatprep.subr.mxu0 0.0
        %2394 = vmatpush1.msra.mxu0 0.0
        %2395 = vmatprep.subr.mxu0 0.0
        %2396 = vmatpush1.msra.mxu0 0.0
        %2397 = vmatprep.subr.mxu0 0.0
        %2398 = vmatpush1.msra.mxu0 0.0
        %2399 = vmatprep.subr.mxu0 0.0
        %2400 = vmatpush1.msra.mxu0 0.0
        %2401 = vmatprep.subr.mxu0 0.0
        %2402 = vmatpush1.msra.mxu0 0.0
        %2403 = vmatprep.subr.mxu0 0.0
        %2404 = vmatpush1.msra.mxu0 0.0
        %2405 = vmatprep.subr.mxu0 0.0
        %2406 = vmatpush1.msra.mxu0 0.0
        %2407 = vmatprep.subr.mxu0 0.0
        %2408 = vmatpush1.msra.mxu0 0.0
        %2409 = vmatprep.subr.mxu0 0.0
        %2410 = vmatpush1.msra.mxu0 0.0
        %2411 = vmatprep.subr.mxu0 0.0
        %2412 = vmatpush1.msra.mxu0 0.0
        %2413 = vmatprep.subr.mxu0 0.0
        %2414 = vmatpush1.msra.mxu0 0.0
        %2415 = vmatprep.subr.mxu0 0.0
        %2416 = vmatpush1.msra.mxu0 0.0
        %2417 = vmatprep.subr.mxu0 0.0
        %2418 = vmatpush1.msra.mxu0 0.0
        %2419 = vmatprep.subr.mxu0 0.0
        %2420 = vmatpush1.msra.mxu0 0.0
        %2421 = vmatprep.subr.mxu0 0.0
        %2422 = vmatpush1.msra.mxu0 0.0
        %2423 = vmatprep.subr.mxu0 0.0
        %2424 = vmatpush1.msra.mxu0 0.0
        %2425 = vmatprep.subr.mxu0 0.0
        %2426 = vmatpush1.msra.mxu0 0.0
        %2427 = vmatprep.subr.mxu0 0.0
        %2428 = vmatpush1.msra.mxu0 0.0
        %2429 = vmatprep.subr.mxu0 0.0
        %2430 = vmatpush1.msra.mxu0 0.0
        %2431 = vmatprep.subr.mxu0 0.0
        %2432 = vmatpush1.msra.mxu0 0.0
        %2433 = vmatprep.subr.mxu0 0.0
        %2434 = vmatpush1.msra.mxu0 0.0
        %2435 = vmatprep.subr.mxu0 0.0
        %2436 = vmatpush1.msra.mxu0 0.0
        %2437 = vmatprep.subr.mxu0 0.0
        %2438 = vmatpush1.msra.mxu0 0.0
        %2439 = vmatprep.subr.mxu0 0.0
        %2440 = vmatpush1.msra.mxu0 0.0
        %2441 = vmatprep.subr.mxu0 0.0
        %2442 = vmatpush1.msra.mxu0 0.0
        %2443 = vmatprep.subr.mxu0 0.0
        %2444 = vmatpush1.msra.mxu0 0.0
        %2445 = vmatprep.subr.mxu0 0.0
        %2446 = vmatpush1.msra.mxu0 0.0
        %2447 = vmatprep.subr.mxu0 0.0
        %2448 = vmatpush1.msra.mxu0 0.0
        %2449 = vmatprep.subr.mxu0 0.0
        %2450 = vmatpush1.msra.mxu0 0.0
        %2451 = vmatprep.subr.mxu0 0.0
        %2452 = vmatpush1.msra.mxu0 0.0
        %2453 = vmatprep.mubr.f32.mxu0 0.0
        %2454 = vmatmul.mubr.f32.gmra.mrb[0].mxu0 %v2387
        %v2455 = vpop.f32.mrb[0].mxu0
        %v2456 = vadd.f32 0.0, %v2455
        %v2457 = vpop.f32.mrb[0].mxu0
        %2458 = vdwg.mxu0
        %v2460 = vsel %vm1517, %v2302, 0
        %2462 = vmatprep.subr.mxu0 0.0
        %2463 = vmatpush1.msra.mxu0 %v2309
        %2464 = vmatprep.subr.mxu0 0.0
        %2465 = vmatpush1.msra.mxu0 %v2310
        %2466 = vmatprep.subr.mxu0 0.0
        %2467 = vmatpush1.msra.mxu0 0.0
        %2468 = vmatprep.subr.mxu0 0.0
        %2469 = vmatpush1.msra.mxu0 0.0
        %2470 = vmatprep.subr.mxu0 0.0
        %2471 = vmatpush1.msra.mxu0 0.0
        %2472 = vmatprep.subr.mxu0 0.0
        %2473 = vmatpush1.msra.mxu0 0.0
        %2474 = vmatprep.subr.mxu0 0.0
        %2475 = vmatpush1.msra.mxu0 0.0
        %2476 = vmatprep.subr.mxu0 0.0
        %2477 = vmatpush1.msra.mxu0 0.0
        %2478 = vmatprep.subr.mxu0 0.0
        %2479 = vmatpush1.msra.mxu0 0.0
        %2480 = vmatprep.subr.mxu0 0.0
        %2481 = vmatpush1.msra.mxu0 0.0
        %2482 = vmatprep.subr.mxu0 0.0
        %2483 = vmatpush1.msra.mxu0 0.0
        %2484 = vmatprep.subr.mxu0 0.0
        %2485 = vmatpush1.msra.mxu0 0.0
        %2486 = vmatprep.subr.mxu0 0.0
        %2487 = vmatpush1.msra.mxu0 0.0
        %2488 = vmatprep.subr.mxu0 0.0
        %2489 = vmatpush1.msra.mxu0 0.0
        %2490 = vmatprep.subr.mxu0 0.0
        %2491 = vmatpush1.msra.mxu0 0.0
        %2492 = vmatprep.subr.mxu0 0.0
        %2493 = vmatpush1.msra.mxu0 0.0
        %2494 = vmatprep.subr.mxu0 0.0
        %2495 = vmatpush1.msra.mxu0 0.0
        %2496 = vmatprep.subr.mxu0 0.0
        %2497 = vmatpush1.msra.mxu0 0.0
        %2498 = vmatprep.subr.mxu0 0.0
        %2499 = vmatpush1.msra.mxu0 0.0
        %2500 = vmatprep.subr.mxu0 0.0
        %2501 = vmatpush1.msra.mxu0 0.0
        %2502 = vmatprep.subr.mxu0 0.0
        %2503 = vmatpush1.msra.mxu0 0.0
        %2504 = vmatprep.subr.mxu0 0.0
        %2505 = vmatpush1.msra.mxu0 0.0
        %2506 = vmatprep.subr.mxu0 0.0
        %2507 = vmatpush1.msra.mxu0 0.0
        %2508 = vmatprep.subr.mxu0 0.0
        %2509 = vmatpush1.msra.mxu0 0.0
        %2510 = vmatprep.subr.mxu0 0.0
        %2511 = vmatpush1.msra.mxu0 0.0
        %2512 = vmatprep.subr.mxu0 0.0
        %2513 = vmatpush1.msra.mxu0 0.0
        %2514 = vmatprep.subr.mxu0 0.0
        %2515 = vmatpush1.msra.mxu0 0.0
        %2516 = vmatprep.subr.mxu0 0.0
        %2517 = vmatpush1.msra.mxu0 0.0
        %2518 = vmatprep.subr.mxu0 0.0
        %2519 = vmatpush1.msra.mxu0 0.0
        %2520 = vmatprep.subr.mxu0 0.0
        %2521 = vmatpush1.msra.mxu0 0.0
        %2522 = vmatprep.subr.mxu0 0.0
        %2523 = vmatpush1.msra.mxu0 0.0
        %2524 = vmatprep.subr.mxu0 0.0
        %2525 = vmatpush1.msra.mxu0 0.0
        %2526 = vmatprep.mubr.f32.mxu0 0.0
        %2527 = vmatmul.mubr.f32.gmra.mrb[0].mxu0 %v2460
        %v2528 = vpop.f32.mrb[0].mxu0
        %v2529 = vadd.f32 0.0, %v2528
        %v2530 = vpop.f32.mrb[0].mxu0
        %2531 = vdwg.mxu0
        %v2533 = vsel %vm1517, %v2304, 0
        %2535 = vmatprep.subr.mxu0 0.0
        %2536 = vmatpush1.msra.mxu0 %v2311
        %2537 = vmatprep.subr.mxu0 0.0
        %2538 = vmatpush1.msra.mxu0 %v2312
        %2539 = vmatprep.subr.mxu0 0.0
        %2540 = vmatpush1.msra.mxu0 0.0
        %2541 = vmatprep.subr.mxu0 0.0
        %2542 = vmatpush1.msra.mxu0 0.0
        %2543 = vmatprep.subr.mxu0 0.0
        %2544 = vmatpush1.msra.mxu0 0.0
        %2545 = vmatprep.subr.mxu0 0.0
        %2546 = vmatpush1.msra.mxu0 0.0
        %2547 = vmatprep.subr.mxu0 0.0
        %2548 = vmatpush1.msra.mxu0 0.0
        %2549 = vmatprep.subr.mxu0 0.0
        %2550 = vmatpush1.msra.mxu0 0.0
        %2551 = vmatprep.subr.mxu0 0.0
        %2552 = vmatpush1.msra.mxu0 0.0
        %2553 = vmatprep.subr.mxu0 0.0
        %2554 = vmatpush1.msra.mxu0 0.0
        %2555 = vmatprep.subr.mxu0 0.0
        %2556 = vmatpush1.msra.mxu0 0.0
        %2557 = vmatprep.subr.mxu0 0.0
        %2558 = vmatpush1.msra.mxu0 0.0
        %2559 = vmatprep.subr.mxu0 0.0
        %2560 = vmatpush1.msra.mxu0 0.0
        %2561 = vmatprep.subr.mxu0 0.0
        %2562 = vmatpush1.msra.mxu0 0.0
        %2563 = vmatprep.subr.mxu0 0.0
        %2564 = vmatpush1.msra.mxu0 0.0
        %2565 = vmatprep.subr.mxu0 0.0
        %2566 = vmatpush1.msra.mxu0 0.0
        %2567 = vmatprep.subr.mxu0 0.0
        %2568 = vmatpush1.msra.mxu0 0.0
        %2569 = vmatprep.subr.mxu0 0.0
        %2570 = vmatpush1.msra.mxu0 0.0
        %2571 = vmatprep.subr.mxu0 0.0
        %2572 = vmatpush1.msra.mxu0 0.0
        %2573 = vmatprep.subr.mxu0 0.0
        %2574 = vmatpush1.msra.mxu0 0.0
        %2575 = vmatprep.subr.mxu0 0.0
        %2576 = vmatpush1.msra.mxu0 0.0
        %2577 = vmatprep.subr.mxu0 0.0
        %2578 = vmatpush1.msra.mxu0 0.0
        %2579 = vmatprep.subr.mxu0 0.0
        %2580 = vmatpush1.msra.mxu0 0.0
        %2581 = vmatprep.subr.mxu0 0.0
        %2582 = vmatpush1.msra.mxu0 0.0
        %2583 = vmatprep.subr.mxu0 0.0
        %2584 = vmatpush1.msra.mxu0 0.0
        %2585 = vmatprep.subr.mxu0 0.0
        %2586 = vmatpush1.msra.mxu0 0.0
        %2587 = vmatprep.subr.mxu0 0.0
        %2588 = vmatpush1.msra.mxu0 0.0
        %2589 = vmatprep.subr.mxu0 0.0
        %2590 = vmatpush1.msra.mxu0 0.0
        %2591 = vmatprep.subr.mxu0 0.0
        %2592 = vmatpush1.msra.mxu0 0.0
        %2593 = vmatprep.subr.mxu0 0.0
        %2594 = vmatpush1.msra.mxu0 0.0
        %2595 = vmatprep.subr.mxu0 0.0
        %2596 = vmatpush1.msra.mxu0 0.0
        %2597 = vmatprep.subr.mxu0 0.0
        %2598 = vmatpush1.msra.mxu0 0.0
        %2599 = vmatprep.mubr.f32.mxu0 0.0
        %2600 = vmatmul.mubr.f32.gmra.mrb[0].mxu0 %v2533
        %v2601 = vpop.f32.mrb[0].mxu0
        %v2602 = vadd.f32 0.0, %v2601
        %v2603 = vpop.f32.mrb[0].mxu0
        %2604 = vdwg.mxu0
        %2606 = vrot.lane.b32.xlu0 %v2456, 8
        %v2607 = vpop.permute.xlu0 %2606
        %2610 = vrot.lane.b32.xlu0 %v2529, 16
        %v2611 = vpop.permute.xlu0 %2610
        %2614 = vrot.lane.b32.xlu0 %v2602, 24
        %v2615 = vpop.permute.xlu0 %2614
        %v2617 = vsel %vm851, %v2383, %v2607
        %v2618 = vsel %vm1517, %v2617, %v2611
        %v2619 = vsel %vm1519, %v2618, %v2615
        %v2620 = vld [vmem:[%s12] sm:$0xff]
        %v2621 = vld [vmem:[%s12 + $0x8] sm:$0xff]
        %v2622 = vld [vmem:[%s12 + $0x10] sm:$0xff]
        %v2623 = vld [vmem:[%s12 + $0x18] sm:$0xff]
        %v2624 = vld [vmem:[%s13] sm:$0x1]
        %v2626 = vlaneseq
        %v2627 = vshrl.u32 %v2626, 7
        %v2628 = vsub.s32 0, %v2627
        %v2629 = vrot.slane %v2624, %v2628
        %v2632 = vsel %vm1532, %v2619, 0
        %2634 = vmatprep.subr.mxu0 0.0
        %2635 = vmatpush1.msra.mxu0 %v2620
        %2636 = vmatprep.subr.mxu0 0.0
        %2637 = vmatpush1.msra.mxu0 %v2621
        %2638 = vmatprep.subr.mxu0 0.0
        %2639 = vmatpush1.msra.mxu0 %v2622
        %2640 = vmatprep.subr.mxu0 0.0
        %2641 = vmatpush1.msra.mxu0 %v2623
        %2642 = vmatprep.subr.mxu0 0.0
        %2643 = vmatpush1.msra.mxu0 0.0
        %2644 = vmatprep.subr.mxu0 0.0
        %2645 = vmatpush1.msra.mxu0 0.0
        %2646 = vmatprep.subr.mxu0 0.0
        %2647 = vmatpush1.msra.mxu0 0.0
        %2648 = vmatprep.subr.mxu0 0.0
        %2649 = vmatpush1.msra.mxu0 0.0
        %2650 = vmatprep.subr.mxu0 0.0
        %2651 = vmatpush1.msra.mxu0 0.0
        %2652 = vmatprep.subr.mxu0 0.0
        %2653 = vmatpush1.msra.mxu0 0.0
        %2654 = vmatprep.subr.mxu0 0.0
        %2655 = vmatpush1.msra.mxu0 0.0
        %2656 = vmatprep.subr.mxu0 0.0
        %2657 = vmatpush1.msra.mxu0 0.0
        %2658 = vmatprep.subr.mxu0 0.0
        %2659 = vmatpush1.msra.mxu0 0.0
        %2660 = vmatprep.subr.mxu0 0.0
        %2661 = vmatpush1.msra.mxu0 0.0
        %2662 = vmatprep.subr.mxu0 0.0
        %2663 = vmatpush1.msra.mxu0 0.0
        %2664 = vmatprep.subr.mxu0 0.0
        %2665 = vmatpush1.msra.mxu0 0.0
        %2666 = vmatprep.subr.mxu0 0.0
        %2667 = vmatpush1.msra.mxu0 0.0
        %2668 = vmatprep.subr.mxu0 0.0
        %2669 = vmatpush1.msra.mxu0 0.0
        %2670 = vmatprep.subr.mxu0 0.0
        %2671 = vmatpush1.msra.mxu0 0.0
        %2672 = vmatprep.subr.mxu0 0.0
        %2673 = vmatpush1.msra.mxu0 0.0
        %2674 = vmatprep.subr.mxu0 0.0
        %2675 = vmatpush1.msra.mxu0 0.0
        %2676 = vmatprep.subr.mxu0 0.0
        %2677 = vmatpush1.msra.mxu0 0.0
        %2678 = vmatprep.subr.mxu0 0.0
        %2679 = vmatpush1.msra.mxu0 0.0
        %2680 = vmatprep.subr.mxu0 0.0
        %2681 = vmatpush1.msra.mxu0 0.0
        %2682 = vmatprep.subr.mxu0 0.0
        %2683 = vmatpush1.msra.mxu0 0.0
        %2684 = vmatprep.subr.mxu0 0.0
        %2685 = vmatpush1.msra.mxu0 0.0
        %2686 = vmatprep.subr.mxu0 0.0
        %2687 = vmatpush1.msra.mxu0 0.0
        %2688 = vmatprep.subr.mxu0 0.0
        %2689 = vmatpush1.msra.mxu0 0.0
        %2690 = vmatprep.subr.mxu0 0.0
        %2691 = vmatpush1.msra.mxu0 0.0
        %2692 = vmatprep.subr.mxu0 0.0
        %2693 = vmatpush1.msra.mxu0 0.0
        %2694 = vmatprep.subr.mxu0 0.0
        %2695 = vmatpush1.msra.mxu0 0.0
        %2696 = vmatprep.subr.mxu0 0.0
        %2697 = vmatpush1.msra.mxu0 0.0
        %2698 = vmatprep.mubr.f32.mxu0 0.0
        %2699 = vmatmul.mubr.f32.gmra.mrb[0].mxu0 %v2632
        %v2700 = vpop.f32.mrb[0].mxu0
        %v2701 = vadd.f32 %v2629, %v2700
        %v2702 = vpop.f32.mrb[0].mxu0
        %2703 = vdwg.mxu0
        %v2704 = vadd.f32 %v2701, %v1637
        %v2705 = vld [vmem:[%s14] sm:$0x1]
        %v2706 = vld [vmem:[%s15] sm:$0x1]
        %v2707 = vsel %vm1532, %v2704, 0.0
        %2708 = vadd.xlane.f32.xlu0 %v2707
        %v2709 = vpop.xlane.xlu0 %2708
        %v2710 = vmul.f32 %v2709, %v1613
        %v2711 = vsub.f32 %v2704, %v2710
        %v2712 = vmul.f32 %v2711, %v2711
        %v2713 = vsel %vm1532, %v2712, 0.0
        %2714 = vadd.xlane.f32.xlu0 %v2713
        %v2715 = vpop.xlane.xlu0 %2714
        %v2716 = vmul.f32 %v2715, %v1613
        %v2717 = vadd.f32 %v2716, 1e-05
        %v2718 = vrsqrt.pop %v2717
        %v2719 = vmul.f32 %v2711, %v2718
        %v2721 = vlaneseq
        %v2722 = vshrl.u32 %v2721, 7
        %v2723 = vsub.s32 0, %v2722
        %v2724 = vrot.slane %v2705, %v2723
        %v2726 = vmul.f32 %v2719, %v2724
        %v2728 = vlaneseq
        %v2729 = vshrl.u32 %v2728, 7
        %v2730 = vsub.s32 0, %v2729
        %v2731 = vrot.slane %v2706, %v2730
        %v2733 = vadd.f32 %v2726, %v2731
        %v2734 = vld [vmem:[%s16] sm:$0xff]
        %v2735 = vld [vmem:[%s16 + $0x8] sm:$0xff]
        %v2736 = vld [vmem:[%s16 + $0x10] sm:$0xff]
        %v2737 = vld [vmem:[%s16 + $0x18] sm:$0xff]
        %v2738 = vld [vmem:[%s17] sm:$0x1]
        %v2740 = vlaneseq
        %v2741 = vshrl.u32 %v2740, 7
        %v2742 = vsub.s32 0, %v2741
        %v2743 = vrot.slane %v2738, %v2742
        %v2746 = vsel %vm1532, %v2733, 0
        %2748 = vmatprep.subr.mxu0 0.0
        %2749 = vmatpush1.msra.mxu0 %v2734
        %2750 = vmatprep.subr.mxu0 0.0
        %2751 = vmatpush1.msra.mxu0 %v2735
        %2752 = vmatprep.subr.mxu0 0.0
        %2753 = vmatpush1.msra.mxu0 %v2736
        %2754 = vmatprep.subr.mxu0 0.0
        %2755 = vmatpush1.msra.mxu0 %v2737
        %2756 = vmatprep.subr.mxu0 0.0
        %2757 = vmatpush1.msra.mxu0 0.0
        %2758 = vmatprep.subr.mxu0 0.0
        %2759 = vmatpush1.msra.mxu0 0.0
        %2760 = vmatprep.subr.mxu0 0.0
        %2761 = vmatpush1.msra.mxu0 0.0
        %2762 = vmatprep.subr.mxu0 0.0
        %2763 = vmatpush1.msra.mxu0 0.0
        %2764 = vmatprep.subr.mxu0 0.0
        %2765 = vmatpush1.msra.mxu0 0.0
        %2766 = vmatprep.subr.mxu0 0.0
        %2767 = vmatpush1.msra.mxu0 0.0
        %2768 = vmatprep.subr.mxu0 0.0
        %2769 = vmatpush1.msra.mxu0 0.0
        %2770 = vmatprep.subr.mxu0 0.0
        %2771 = vmatpush1.msra.mxu0 0.0
        %2772 = vmatprep.subr.mxu0 0.0
        %2773 = vmatpush1.msra.mxu0 0.0
        %2774 = vmatprep.subr.mxu0 0.0
        %2775 = vmatpush1.msra.mxu0 0.0
        %2776 = vmatprep.subr.mxu0 0.0
        %2777 = vmatpush1.msra.mxu0 0.0
        %2778 = vmatprep.subr.mxu0 0.0
        %2779 = vmatpush1.msra.mxu0 0.0
        %2780 = vmatprep.subr.mxu0 0.0
        %2781 = vmatpush1.msra.mxu0 0.0
        %2782 = vmatprep.subr.mxu0 0.0
        %2783 = vmatpush1.msra.mxu0 0.0
        %2784 = vmatprep.subr.mxu0 0.0
        %2785 = vmatpush1.msra.mxu0 0.0
        %2786 = vmatprep.subr.mxu0 0.0
        %2787 = vmatpush1.msra.mxu0 0.0
        %2788 = vmatprep.subr.mxu0 0.0
        %2789 = vmatpush1.msra.mxu0 0.0
        %2790 = vmatprep.subr.mxu0 0.0
        %2791 = vmatpush1.msra.mxu0 0.0
        %2792 = vmatprep.subr.mxu0 0.0
        %2793 = vmatpush1.msra.mxu0 0.0
        %2794 = vmatprep.subr.mxu0 0.0
        %2795 = vmatpush1.msra.mxu0 0.0
        %2796 = vmatprep.subr.mxu0 0.0
        %2797 = vmatpush1.msra.mxu0 0.0
        %2798 = vmatprep.subr.mxu0 0.0
        %2799 = vmatpush1.msra.mxu0 0.0
        %2800 = vmatprep.subr.mxu0 0.0
        %2801 = vmatpush1.msra.mxu0 0.0
        %2802 = vmatprep.subr.mxu0 0.0
        %2803 = vmatpush1.msra.mxu0 0.0
        %2804 = vmatprep.subr.mxu0 0.0
        %2805 = vmatpush1.msra.mxu0 0.0
        %2806 = vmatprep.subr.mxu0 0.0
        %2807 = vmatpush1.msra.mxu0 0.0
        %2808 = vmatprep.subr.mxu0 0.0
        %2809 = vmatpush1.msra.mxu0 0.0
        %2810 = vmatprep.subr.mxu0 0.0
        %2811 = vmatpush1.msra.mxu0 0.0
        %2812 = vmatprep.mubr.f32.mxu0 0.0
        %2813 = vmatmul.mubr.f32.gmra.mrb[0].mxu0 %v2746
        %v2814 = vpop.f32.mrb[0].mxu0
        %v2815 = vadd.f32 %v2743, %v2814
        %v2816 = vpop.f32.mrb[0].mxu0
        %2817 = vdwg.mxu0
        %v2818 = vmax.f32 %v2815, 0.0
        %v2819 = vld [vmem:[%s18] sm:$0xff]
        %v2820 = vld [vmem:[%s18 + $0x8] sm:$0xff]
        %v2821 = vld [vmem:[%s18 + $0x10] sm:$0xff]
        %v2822 = vld [vmem:[%s18 + $0x18] sm:$0xff]
        %v2823 = vld [vmem:[%s18 + $0x20] sm:$0xff]
        %v2824 = vld [vmem:[%s18 + $0x28] sm:$0xff]
        %v2825 = vld [vmem:[%s18 + $0x30] sm:$0xff]
        %v2826 = vld [vmem:[%s18 + $0x38] sm:$0xff]
        %v2827 = vld [vmem:[%s18 + $0x40] sm:$0xff]
        %v2828 = vld [vmem:[%s18 + $0x48] sm:$0xff]
        %v2829 = vld [vmem:[%s18 + $0x50] sm:$0xff]
        %v2830 = vld [vmem:[%s18 + $0x58] sm:$0xff]
        %v2831 = vld [vmem:[%s18 + $0x60] sm:$0xff]
        %v2832 = vld [vmem:[%s18 + $0x68] sm:$0xff]
        %v2833 = vld [vmem:[%s18 + $0x70] sm:$0xff]
        %v2834 = vld [vmem:[%s18 + $0x78] sm:$0xff]
        %v2835 = vld [vmem:[%s19] sm:$0x1]
        %v2837 = vlaneseq
        %v2838 = vshrl.u32 %v2837, 7
        %v2839 = vsub.s32 0, %v2838
        %v2840 = vrot.slane %v2835, %v2839
        %2842 = vmatprep.subr.mxu0 0.0
        %2843 = vmatpush1.msra.mxu0 %v2819
        %2844 = vmatprep.subr.mxu0 0.0
        %2845 = vmatpush1.msra.mxu0 %v2820
        %2846 = vmatprep.subr.mxu0 0.0
        %2847 = vmatpush1.msra.mxu0 %v2821
        %2848 = vmatprep.subr.mxu0 0.0
        %2849 = vmatpush1.msra.mxu0 %v2822
        %2850 = vmatprep.subr.mxu0 0.0
        %2851 = vmatpush1.msra.mxu0 %v2823
        %2852 = vmatprep.subr.mxu0 0.0
        %2853 = vmatpush1.msra.mxu0 %v2824
        %2854 = vmatprep.subr.mxu0 0.0
        %2855 = vmatpush1.msra.mxu0 %v2825
        %2856 = vmatprep.subr.mxu0 0.0
        %2857 = vmatpush1.msra.mxu0 %v2826
        %2858 = vmatprep.subr.mxu0 0.0
        %2859 = vmatpush1.msra.mxu0 %v2827
        %2860 = vmatprep.subr.mxu0 0.0
        %2861 = vmatpush1.msra.mxu0 %v2828
        %2862 = vmatprep.subr.mxu0 0.0
        %2863 = vmatpush1.msra.mxu0 %v2829
        %2864 = vmatprep.subr.mxu0 0.0
        %2865 = vmatpush1.msra.mxu0 %v2830
        %2866 = vmatprep.subr.mxu0 0.0
        %2867 = vmatpush1.msra.mxu0 %v2831
        %2868 = vmatprep.subr.mxu0 0.0
        %2869 = vmatpush1.msra.mxu0 %v2832
        %2870 = vmatprep.subr.mxu0 0.0
        %2871 = vmatpush1.msra.mxu0 %v2833
        %2872 = vmatprep.subr.mxu0 0.0
        %2873 = vmatpush1.msra.mxu0 %v2834
        %2874 = vmatprep.subr.mxu0 0.0
        %2875 = vmatpush1.msra.mxu0 0.0
        %2876 = vmatprep.subr.mxu0 0.0
        %2877 = vmatpush1.msra.mxu0 0.0
        %2878 = vmatprep.subr.mxu0 0.0
        %2879 = vmatpush1.msra.mxu0 0.0
        %2880 = vmatprep.subr.mxu0 0.0
        %2881 = vmatpush1.msra.mxu0 0.0
        %2882 = vmatprep.subr.mxu0 0.0
        %2883 = vmatpush1.msra.mxu0 0.0
        %2884 = vmatprep.subr.mxu0 0.0
        %2885 = vmatpush1.msra.mxu0 0.0
        %2886 = vmatprep.subr.mxu0 0.0
        %2887 = vmatpush1.msra.mxu0 0.0
        %2888 = vmatprep.subr.mxu0 0.0
        %2889 = vmatpush1.msra.mxu0 0.0
        %2890 = vmatprep.subr.mxu0 0.0
        %2891 = vmatpush1.msra.mxu0 0.0
        %2892 = vmatprep.subr.mxu0 0.0
        %2893 = vmatpush1.msra.mxu0 0.0
        %2894 = vmatprep.subr.mxu0 0.0
        %2895 = vmatpush1.msra.mxu0 0.0
        %2896 = vmatprep.subr.mxu0 0.0
        %2897 = vmatpush1.msra.mxu0 0.0
        %2898 = vmatprep.subr.mxu0 0.0
        %2899 = vmatpush1.msra.mxu0 0.0
        %2900 = vmatprep.subr.mxu0 0.0
        %2901 = vmatpush1.msra.mxu0 0.0
        %2902 = vmatprep.subr.mxu0 0.0
        %2903 = vmatpush1.msra.mxu0 0.0
        %2904 = vmatprep.subr.mxu0 0.0
        %2905 = vmatpush1.msra.mxu0 0.0
        %2906 = vmatprep.mubr.f32.mxu0 0.0
        %2907 = vmatmul.mubr.f32.gmra.mrb[0].mxu0 %v2818
        %v2908 = vpop.f32.mrb[0].mxu0
        %v2909 = vadd.f32 %v2840, %v2908
        %v2910 = vpop.f32.mrb[0].mxu0
        %2911 = vdwg.mxu0
        %v2912 = vadd.f32 %v2909, %v2733
        %v2913 = vld [vmem:[%s20] sm:$0x1]
        %v2914 = vld [vmem:[%s21] sm:$0x1]
        %v2915 = vsel %vm1532, %v2912, 0.0
        %2916 = vadd.xlane.f32.xlu0 %v2915
        %v2917 = vpop.xlane.xlu0 %2916
        %v2918 = vmul.f32 %v2917, %v1613
        %v2919 = vsub.f32 %v2912, %v2918
        %v2920 = vmul.f32 %v2919, %v2919
        %v2921 = vsel %vm1532, %v2920, 0.0
        %2922 = vadd.xlane.f32.xlu0 %v2921
        %v2923 = vpop.xlane.xlu0 %2922
        %v2924 = vmul.f32 %v2923, %v1613
        %v2925 = vadd.f32 %v2924, 1e-05
        %v2926 = vrsqrt.pop %v2925
        %v2927 = vmul.f32 %v2919, %v2926
        %v2929 = vlaneseq
        %v2930 = vshrl.u32 %v2929, 7
        %v2931 = vsub.s32 0, %v2930
        %v2932 = vrot.slane %v2913, %v2931
        %v2934 = vmul.f32 %v2927, %v2932
        %v2936 = vlaneseq
        %v2937 = vshrl.u32 %v2936, 7
        %v2938 = vsub.s32 0, %v2937
        %v2939 = vrot.slane %v2914, %v2938
        %v2941 = vadd.f32 %v2934, %v2939
        %2942 = vst.msk [vmem:[%s800] sm:$0xff] %vm1532, %v2941
        %s2943 = sand.u32 %s561, 1
        %s2944 = scalar_lea.sflag [#allocation3], %s2943
        %s2945 = sand.u32 %s561, 1
        %s2946 = smul.addr %s2945, 8
        %s2947 = scalar_lea.vmem [#allocation2], %s2946
        // Predicated region
        $region109: #{decoder_block.1} parent=107 // pred_check
          %p2948 = pneg %p571
        $region110: #{decoder_block.1} parent=107 // pred_check_branch
          %2950 = sbr.rel (%p2948) target = $region112
        $region111: #{decoder_block.1} parent=107 // pred_region
          %s2952 = ssub.s32 128, 128
          %2953 = vsyncadd %s2944, %s2952
          %s2954 = sadd.s32 %s41, %s40
          %s2955 = smul.addr %s2954, 128
          %s2956 = scalar_lea.hbm %s22, %s2955
          %s2958 = sshll.u32 %s2947, 4
          %s2959 = int_to_ptr.vmem [resolvable:$true] %s2958
          %2961 = dma.vmem_to_hbm [thread:$0]  %s2959, 128, %s2956, %s2944
        $region112: #{decoder_block.1} parent=107 // pred_fallthru
          _
      $region108: #{decoder_block.1} parent=5 // pred_fallthru
        _
      %p2962 = scmp.le.s32.totalorder 2, %s31
      // Predicated region
      $region113: #{decoder_block.1} parent=5 // pred_check
        %p2963 = pneg %p2962
      $region114: #{decoder_block.1} parent=5 // pred_check_branch
        %2965 = sbr.rel (%p2963) target = $region116
      $region115: #{decoder_block.1} parent=5 // pred_region
        %s2966 = ssub.s32 %s31, 2
        // Predicated region
        $region117: #{decoder_block.1} parent=115 // pred_check
          %p2967 = pneg %p577
        $region118: #{decoder_block.1} parent=115 // pred_check_branch
          %2969 = sbr.rel (%p2967) target = $region120
        $region119: #{decoder_block.1} parent=115 // pred_region
          %s2970 = sand.u32 %s562, 1
          %s2971 = scalar_lea.sflag [#allocation3], %s2970
          %s2972 = sand.u32 %s562, 1
          %s2973 = smul.addr %s2972, 8
          %s2974 = scalar_lea.vmem [#allocation2], %s2973
          %2975 = dma.done %s2971, 128
        $region120: #{decoder_block.1} parent=115 // pred_fallthru
          _
      $region116: #{decoder_block.1} parent=5 // pred_fallthru
        _
    $region6: #{decoder_block.1} parent=1 // loop_footer
      %s35 = sadd.s32 1, %s31
    $region7: #{decoder_block.1} parent=1 // loop_footer_branch
      %30 = sbr.rel target = $region3
    $region8: #{decoder_block.1} parent=1 // loop_exit
      _
    %2976 = vsyncpa [#allocation3], 1
    %s2977 = scalar_lea.sflag [#allocation3], 1
    %2978 = vsyncpa %s2977, 1

</llo_original>
